<compile_context>
chip_gen: v6e
topology: v6e:2x2x1
jax: 0.10.0
libtpu: 0.0.40
codegen_flags: <defaults>
</compile_context>

<pallas_src>
import functools

import jax
import jax.numpy as jnp
import numpy as np
from jax import lax
from jax.experimental import pallas as pl
from jax.experimental.pallas import tpu as pltpu

_PH = lax.Precision.HIGHEST


def _round_up(x, m):
    return ((x + m - 1) // m) * m


def _tpu_generation():
    """Best-effort TPU generation detection (used only for perf knobs)."""
    try:
        kind = jax.devices()[0].device_kind.lower()
    except Exception:
        return "unknown"
    if "v5 lite" in kind or "v5e" in kind or "v5litepod" in kind:
        return "v5e"
    if "v6" in kind:
        return "v6e"
    if "v7" in kind:
        return "v7x"
    return "unknown"


# ----------------------------------------------------------------------------------
# Pallas kernel: one (batch element, pixel tile) step.
# Layout: pixels on lanes.  d_ref (1, 3, TP); activations (H, TP); out (1, F, TP).
# All omega scalings are pre-folded into zk / wh / bh by the wrapper.
# ----------------------------------------------------------------------------------
def _reni_so2_kernel(
    d_ref, zk_ref, wh_ref, bh_ref, wf_ref, bf_ref,
    out_ref,
    *, hidden_layers, output_activation, act_dtype,
):
    d = d_ref[0]                                   # (3, TP)  rows = [x, y, z]
    d_x = d[0:1, :]                                # (1, TP)
    d_y = d[1:2, :]
    d_z = d[2:3, :]
    d_norm = jnp.sqrt(d_x * d_x + d_z * d_z)       # (1, TP)

    # Omega-folded per-batch first-layer constants, one resident (H, 8) ref:
    #   col 0: ω0 * (zx @ W0_ip)      col 1: ω0 * (zz @ W0_ip)
    #   col 2: ω0 * (zinv@W0_zi + zy@W0_zy + b0)
    #   col 3: ω0 * W0_dxznorm        col 4: ω0 * W0_dy        cols 5-7: padding
    zk = zk_ref[0]                                 # (H, 8)
    a_col = zk[:, 0:1]                             # (H, 1)
    c_col = zk[:, 1:2]
    zc_col = zk[:, 2:3]
    dn_col = zk[:, 3:4]
    dy_col = zk[:, 4:5]

    # First SIREN layer: pure VPU broadcasts (outer products), f32, no omega mul.
    pre0 = (a_col * d_x + c_col * d_z + dn_col * d_norm + dy_col * d_y + zc_col)
    h = jnp.sin(pre0).astype(act_dtype)            # (H, TP)

    def layer(w_bf16, b_f32, hh):
        # w/b already scaled by hidden_omega_0; accumulation stays f32.
        pre = jnp.dot(w_bf16, hh.astype(jnp.bfloat16),
                      preferred_element_type=jnp.float32) + b_f32
        return jnp.sin(pre).astype(act_dtype)

    if hidden_layers <= 8:
        # Small depth: static unroll.
        for l in range(hidden_layers):
            h = layer(wh_ref[l], bh_ref[l], h)
    else:
        # Deeper SIRENs: rolled loop with partial unroll to cap code size /
        # scheduler pressure while avoiding the fully-rolled-loop penalty.
        h = lax.fori_loop(0, hidden_layers,
                          lambda l, hh: layer(wh_ref[l], bh_ref[l], hh),
                          h, unroll=2)

    out = jnp.dot(wf_ref[...], h.astype(jnp.bfloat16),
                  preferred_element_type=jnp.float32) + bf_ref[...]   # (F, TP) f32
    if output_activation == "exp":
        out = jnp.exp(out)
    elif output_activation == "tanh":
        out = jnp.tanh(out)
    out_ref[0] = out.astype(out_ref.dtype)


# ----------------------------------------------------------------------------------
# Parameter init (deterministic, mirrors the module's __init__ shapes/distributions)
# ----------------------------------------------------------------------------------
def init_reni_params(key, *, dataset_size, ndims, hidden_features, hidden_layers,
                     out_features, hidden_omega_0):
    in_features = 2 * ndims + ndims * ndims + 2    # SO2 equivariance
    k = jax.random.split(key, 8)

    def uni(kk, shape, bound):
        return jax.random.uniform(kk, shape, jnp.float32, -bound, bound)

    params = {}
    # latent codes (fixed_decoder=False -> mu ~ N(0,1); eval path uses mu directly)
    params["mu"] = jax.random.normal(k[0], (dataset_size, ndims, 3), jnp.float32)
    params["log_var"] = -5.0 + jax.random.normal(k[1], (dataset_size, ndims, 3),
                                                 jnp.float32)
    # first SineLayer: weight U(-1/in, 1/in); bias keeps nn.Linear default U(+-1/sqrt(in))
    params["w0"] = uni(k[2], (in_features, hidden_features), 1.0 / in_features)
    params["b0"] = uni(k[3], (1, hidden_features), 1.0 / np.sqrt(in_features))
    wb = np.sqrt(6.0 / hidden_features) / hidden_omega_0
    params["wh"] = uni(k[4], (hidden_layers, hidden_features, hidden_features), wb)
    params["bh"] = uni(k[5], (hidden_layers, 1, hidden_features),
                       1.0 / np.sqrt(hidden_features))
    params["wf"] = uni(k[6], (hidden_features, out_features), wb)   # last_layer_linear
    params["bf"] = uni(k[7], (1, out_features), 1.0 / np.sqrt(hidden_features))
    return params


# ----------------------------------------------------------------------------------
# Forward wrapper (equivariance='SO2', conditioning='Concat')
# ----------------------------------------------------------------------------------
# TODO(synk): equivariance 'None' / 'SO3' branches and 'FiLM' conditioning are not
#             implemented in-kernel (this forward path uses SO2 + 'Concat').
# TODO(synk): training-time reparameterised latent sampling (randn_like) is not done
#             in-kernel; eval-mode semantics (Z = mu[idx]) are used.
# TODO(synk): zero-padded pixels flow through sqrt/sin/exp; forward values are finite
#             and dropped, but a future VJP would need masking of the padded region.
def reni_forward_pallas(params, Z, directions, *, first_omega_0, hidden_omega_0,
                        hidden_layers, out_features, output_activation="exp",
                        pixel_tile=4096, bf16_activations=None,
                        vmem_limit_bytes=None):
    B, ndims, _ = Z.shape
    _, npix, _ = directions.shape
    H = params["w0"].shape[1]
    n2 = ndims * ndims
    F = out_features

    # --- generation-aware perf knobs ------------------------------------------------
    gen = _tpu_generation()
    if bf16_activations is None:
        # bf16 VPU/EUP exists on v6e/v7x; v5e (and unknown) keep f32 activations.
        bf16_activations = gen in ("v6e", "v7x")
    if vmem_limit_bytes is None:
        vmem_limit_bytes = {"v5e": 64, "v6e": 64, "v7x": 48}.get(gen, 32) * 1024 * 1024
    act_dtype = jnp.bfloat16 if bf16_activations else jnp.float32
    act_bytes = 2 if bf16_activations else 4

    # --- hoist: per-batch Z-side pieces of the SO2 invariant first layer (O(B*H)) ---
    zx = Z[:, :, 0]                                            # (B, ndims)
    zy = Z[:, :, 1]
    zz = Z[:, :, 2]
    z_xz = jnp.stack([zx, zz], axis=-1)                        # (B, ndims, 2)
    G = jnp.einsum("bic,bjc->bij", z_xz, z_xz, precision=_PH)  # (B, ndims, ndims)
    zinv = G.reshape(B, n2)                                    # row-major flatten

    # Row-partition of the first-layer weight along the concat boundaries.
    # feature order: [innerprod (ndims) | z_xz_invar (ndims^2) | d_xz_norm (1) |
    #                 z_y (ndims) | d_y (1)]
    w0 = params["w0"]
    o = 0
    w0_ip = w0[o:o + ndims]; o += ndims
    w0_zi = w0[o:o + n2];    o += n2
    w0_dn = w0[o:o + 1];     o += 1
    w0_zy = w0[o:o + ndims]; o += ndims
    w0_dy = w0[o:o + 1];     o += 1

    a = jnp.matmul(zx, w0_ip, precision=_PH)                   # (B, H)
    c = jnp.matmul(zz, w0_ip, precision=_PH)                   # (B, H)
    z_const = (jnp.matmul(zinv, w0_zi, precision=_PH)
               + jnp.matmul(zy, w0_zy, precision=_PH)
               + params["b0"])                                 # (B, H)

    # Merge all first-layer operands into one omega-folded (B, H, 8) array.
    f0 = jnp.float32(first_omega_0)
    zk = jnp.stack([a, c, z_const], axis=-1)                   # (B, H, 3)
    dcols = jnp.stack([w0_dn[0], w0_dy[0]], axis=-1)           # (H, 2)
    dcols = jnp.broadcast_to(dcols[None], (B, H, 2))
    zk = f0 * jnp.concatenate([zk, dcols], axis=-1)            # (B, H, 5)
    zk = jnp.pad(zk, ((0, 0), (0, 0), (0, 3)))                 # (B, H, 8)

    # Omega-folded, transposed (out, in) weights; bf16 MXU operands, f32 biases.
    hw = jnp.float32(hidden_omega_0)
    wh_t = (hw * jnp.swapaxes(params["wh"], 1, 2)).astype(jnp.bfloat16)  # (L, H, H)
    bh_t = hw * jnp.swapaxes(params["bh"], 1, 2)                         # (L, H, 1)
    wf_t = params["wf"].T.astype(jnp.bfloat16)                           # (F, H)
    bf_t = params["bf"].T                                                # (F, 1)

    # --- pixel tiling: pixels on the lane axis, tile size a multiple of 128 ---------
    resident = (hidden_layers * H * H * 2 + hidden_layers * H * 4
                + F * H * 2 + F * 4 + 2 * H * 8 * 4)

    def step_bytes(tp):
        io = 2 * (3 * tp * 4) + 2 * (F * tp * 4)       # double-buffered dirs + out
        acts = H * tp * (2 * 4 + 2 * act_bytes)        # ~2 f32 + 2 act-dtype live temps
        return io + acts

    TP = min(int(pixel_tile), _round_up(npix, 128))
    TP = max(128, _round_up(TP, 128))
    # shrink until the per-step working set comfortably fits the scoped VMEM limit
    while TP > 128 and resident + step_bytes(TP) > vmem_limit_bytes // 2:
        TP = _round_up(max(TP // 2, 128), 128)

    npix_pad = _round_up(npix, TP)
    num_tiles = npix_pad // TP
    # keep >= 2 grid steps so megacore / both v7x TensorCores get work
    while B * num_tiles < 2 and TP > 128:
        TP = _round_up(max(TP // 2, 128), 128)
        npix_pad = _round_up(npix, TP)
        num_tiles = npix_pad // TP

    dirs_t = jnp.swapaxes(directions, 1, 2)                    # (B, 3, npix)
    if npix_pad != npix:
        dirs_t = jnp.pad(dirs_t, ((0, 0), (0, 0), (0, npix_pad - npix)))

    kernel = functools.partial(
        _reni_so2_kernel,
        hidden_layers=hidden_layers,
        output_activation=output_activation,
        act_dtype=act_dtype,
    )

    out_t = pl.pallas_call(
        kernel,
        out_shape=jax.ShapeDtypeStruct((B, F, npix_pad), jnp.float32),
        grid_spec=pltpu.PrefetchScalarGridSpec(
            num_scalar_prefetch=0,
            grid=(B, num_tiles),
            in_specs=[
                pl.BlockSpec((1, 3, TP), lambda b, t: (b, 0, t)),            # dirs
                pl.BlockSpec((1, H, 8), lambda b, t: (b, 0, 0)),             # zk
                pl.BlockSpec((hidden_layers, H, H), lambda b, t: (0, 0, 0)), # wh_t
                pl.BlockSpec((hidden_layers, H, 1), lambda b, t: (0, 0, 0)), # bh_t
                pl.BlockSpec((F, H), lambda b, t: (0, 0)),                   # wf_t
                pl.BlockSpec((F, 1), lambda b, t: (0, 0)),                   # bf_t
            ],
            out_specs=pl.BlockSpec((1, F, TP), lambda b, t: (b, 0, t)),
        ),
        compiler_params=pltpu.CompilerParams(
            dimension_semantics=("parallel", "parallel"),
            vmem_limit_bytes=int(vmem_limit_bytes),
        ),
    )(dirs_t, zk, wh_t, bh_t, wf_t, bf_t)

    # back to module layout (B, npix, out_features); drop pixel padding
    return jnp.swapaxes(out_t, 1, 2)[:, :npix, :]


# ----------------------------------------------------------------------------------
# Pure-JAX reference (mirrors the PyTorch forward exactly: invariant_representation
# with SO2/'Concat' followed by the SIREN net), explicit f32-precision matmuls
# ----------------------------------------------------------------------------------
def reni_forward_ref(params, Z, directions, *, first_omega_0, hidden_omega_0,
                     hidden_layers, output_activation="exp"):
    B, ndims, _ = Z.shape
    npix = directions.shape[1]
    z_xz = jnp.stack([Z[:, :, 0], Z[:, :, 2]], axis=-1)
    d_xz = jnp.stack([directions[:, :, 0], directions[:, :, 2]], axis=-1)
    G = jnp.einsum("bic,bjc->bij", z_xz, z_xz, precision=_PH)
    z_xz_invar = jnp.broadcast_to(G.reshape(B, 1, -1), (B, npix, ndims * ndims))
    innerprod = jnp.einsum("bpc,bnc->bpn", d_xz, z_xz, precision=_PH)
    d_xz_norm = jnp.sqrt(directions[:, :, 0] ** 2 + directions[:, :, 2] ** 2)[..., None]
    z_y = jnp.broadcast_to(Z[:, :, 1][:, None, :], (B, npix, ndims))
    d_y = directions[:, :, 1][..., None]
    x = jnp.concatenate([innerprod, z_xz_invar, d_xz_norm, z_y, d_y], axis=-1)
    h = jnp.sin(first_omega_0 * (jnp.matmul(x, params["w0"], precision=_PH)
                                 + params["b0"]))
    for l in range(hidden_layers):
        h = jnp.sin(hidden_omega_0 * (jnp.matmul(h, params["wh"][l], precision=_PH)
                                      + params["bh"][l]))
    out = jnp.matmul(h, params["wf"], precision=_PH) + params["bf"]
    if output_activation == "exp":
        out = jnp.exp(out)
    elif output_activation == "tanh":
        out = jnp.tanh(out)
    return out


if __name__ == "__main__":
    # Small, module-consistent config.  npix is chosen non-multiple-of-128 and
    # pixel_tile small enough that the grid has multiple pixel tiles per batch
    # element, exercising padding, tiling and the pipelined multi-step path.
    dataset_size = 2
    ndims = 4                      # in_features = 2*4 + 16 + 2 = 26 (SO2)
    hidden_features = 32
    hidden_layers = 2
    out_features = 3
    first_omega_0 = 30.0
    hidden_omega_0 = 30.0
    B = 2
    npix = 1000
    pixel_tile = 512               # -> npix_pad = 1024, grid = (2, 2)

    key = jax.random.PRNGKey(0)
    kp, kd = jax.random.split(key)
    params = init_reni_params(
        kp, dataset_size=dataset_size, ndims=ndims, hidden_features=hidden_features,
        hidden_layers=hidden_layers, out_features=out_features,
        hidden_omega_0=hidden_omega_0)

    directions = jax.random.normal(kd, (B, npix, 3), jnp.float32)
    directions = directions / jnp.linalg.norm(directions, axis=-1, keepdims=True)

    # idx-based forward path, eval-mode semantics: Z = mu[idx]
    idx = jnp.array([0, 1], dtype=jnp.int32)
    Z = params["mu"][idx]

    out = reni_forward_pallas(
        params, Z, directions,
        first_omega_0=first_omega_0, hidden_omega_0=hidden_omega_0,
        hidden_layers=hidden_layers, out_features=out_features,
        output_activation="exp", pixel_tile=pixel_tile)
    out = jax.block_until_ready(out)

    ref = reni_forward_ref(
        params, Z, directions,
        first_omega_0=first_omega_0, hidden_omega_0=hidden_omega_0,
        hidden_layers=hidden_layers, output_activation="exp")
    ref = jax.block_until_ready(ref)

    assert out.shape == (B, npix, out_features)
    assert bool(jnp.all(jnp.isfinite(out)))
    np.testing.assert_allclose(np.asarray(out), np.asarray(ref), rtol=2e-2, atol=2e-2)
    print("KERNEL_OK")
</pallas_src>

<mosaic_0001>
module attributes {stable_mosaic.version = 11 : i64} {
  func.func @_reni_so2_kernel(%arg0: i32, %arg1: i32, %arg2: memref<1x3x512xf32, #tpu.memory_space<vmem>>, %arg3: memref<1x32x8xf32, #tpu.memory_space<vmem>>, %arg4: memref<2x32x32xbf16, #tpu.memory_space<vmem>>, %arg5: memref<2x32x1xf32, #tpu.memory_space<vmem>>, %arg6: memref<3x32xbf16, #tpu.memory_space<vmem>>, %arg7: memref<3x1xf32, #tpu.memory_space<vmem>>, %arg8: memref<1x3x512xf32, #tpu.memory_space<vmem>>) attributes {dimension_semantics = [#tpu.dimension_semantics<parallel>, #tpu.dimension_semantics<parallel>], iteration_bounds = array<i64: 2, 2>, scalar_prefetch = 0 : i64, scratch_operands = 0 : i64, tpu.core_type = #tpu.core_type<tc>, window_params = [{transform_indices = @transform_0, window_bounds = array<i64: 1, 3, 512>}, {transform_indices = @transform_1, window_bounds = array<i64: 1, 32, 8>}, {pipeline_mode = #tpu.pipeline_mode<synchronous>, transform_indices = @transform_2, window_bounds = array<i64: 2, 32, 32>}, {pipeline_mode = #tpu.pipeline_mode<synchronous>, transform_indices = @transform_3, window_bounds = array<i64: 2, 32, 1>}, {pipeline_mode = #tpu.pipeline_mode<synchronous>, transform_indices = @transform_4, window_bounds = array<i64: 3, 32>}, {pipeline_mode = #tpu.pipeline_mode<synchronous>, transform_indices = @transform_5, window_bounds = array<i64: 3, 1>}, {transform_indices = @transform_6, window_bounds = array<i64: 1, 3, 512>}]} {
    %c0 = arith.constant 0 : index
    %c0_0 = arith.constant 0 : index
    %c0_1 = arith.constant 0 : index
    %0 = vector.load %arg2[%c0, %c0_0, %c0_1] : memref<1x3x512xf32, #tpu.memory_space<vmem>>, vector<1x3x512xf32>
    %1 = vector.shape_cast %0 : vector<1x3x512xf32> to vector<3x512xf32>
    %2 = vector.extract_strided_slice %1 {offsets = [0, 0], sizes = [1, 512], strides = [1, 1]} : vector<3x512xf32> to vector<1x512xf32>
    %3 = vector.extract_strided_slice %1 {offsets = [1, 0], sizes = [1, 512], strides = [1, 1]} : vector<3x512xf32> to vector<1x512xf32>
    %4 = vector.extract_strided_slice %1 {offsets = [2, 0], sizes = [1, 512], strides = [1, 1]} : vector<3x512xf32> to vector<1x512xf32>
    %5 = arith.mulf %2, %2 : vector<1x512xf32>
    %6 = arith.mulf %4, %4 : vector<1x512xf32>
    %7 = arith.addf %5, %6 : vector<1x512xf32>
    %8 = math.sqrt %7 : vector<1x512xf32>
    %c0_2 = arith.constant 0 : index
    %c0_3 = arith.constant 0 : index
    %c0_4 = arith.constant 0 : index
    %9 = vector.load %arg3[%c0_2, %c0_3, %c0_4] : memref<1x32x8xf32, #tpu.memory_space<vmem>>, vector<1x32x8xf32>
    %10 = vector.shape_cast %9 : vector<1x32x8xf32> to vector<32x8xf32>
    %11 = vector.extract_strided_slice %10 {offsets = [0, 0], sizes = [32, 1], strides = [1, 1]} : vector<32x8xf32> to vector<32x1xf32>
    %12 = vector.extract_strided_slice %10 {offsets = [0, 1], sizes = [32, 1], strides = [1, 1]} : vector<32x8xf32> to vector<32x1xf32>
    %13 = vector.extract_strided_slice %10 {offsets = [0, 2], sizes = [32, 1], strides = [1, 1]} : vector<32x8xf32> to vector<32x1xf32>
    %14 = vector.extract_strided_slice %10 {offsets = [0, 3], sizes = [32, 1], strides = [1, 1]} : vector<32x8xf32> to vector<32x1xf32>
    %15 = vector.extract_strided_slice %10 {offsets = [0, 4], sizes = [32, 1], strides = [1, 1]} : vector<32x8xf32> to vector<32x1xf32>
    %16 = vector.broadcast %11 : vector<32x1xf32> to vector<32x512xf32>
    %17 = vector.broadcast %2 : vector<1x512xf32> to vector<32x512xf32>
    %18 = arith.mulf %16, %17 : vector<32x512xf32>
    %19 = vector.broadcast %12 : vector<32x1xf32> to vector<32x512xf32>
    %20 = vector.broadcast %4 : vector<1x512xf32> to vector<32x512xf32>
    %21 = arith.mulf %19, %20 : vector<32x512xf32>
    %22 = arith.addf %18, %21 : vector<32x512xf32>
    %23 = vector.broadcast %14 : vector<32x1xf32> to vector<32x512xf32>
    %24 = vector.broadcast %8 : vector<1x512xf32> to vector<32x512xf32>
    %25 = arith.mulf %23, %24 : vector<32x512xf32>
    %26 = arith.addf %22, %25 : vector<32x512xf32>
    %27 = vector.broadcast %15 : vector<32x1xf32> to vector<32x512xf32>
    %28 = vector.broadcast %3 : vector<1x512xf32> to vector<32x512xf32>
    %29 = arith.mulf %27, %28 : vector<32x512xf32>
    %30 = arith.addf %26, %29 : vector<32x512xf32>
    %31 = vector.broadcast %13 : vector<32x1xf32> to vector<32x512xf32>
    %32 = arith.addf %30, %31 : vector<32x512xf32>
    %33 = math.sin %32 : vector<32x512xf32>
    %c0_5 = arith.constant 0 : index
    %c0_6 = arith.constant 0 : index
    %c0_7 = arith.constant 0 : index
    %34 = vector.load %arg4[%c0_5, %c0_6, %c0_7] : memref<2x32x32xbf16, #tpu.memory_space<vmem>>, vector<1x32x32xbf16>
    %35 = vector.shape_cast %34 : vector<1x32x32xbf16> to vector<32x32xbf16>
    %c0_8 = arith.constant 0 : index
    %c0_9 = arith.constant 0 : index
    %c0_10 = arith.constant 0 : index
    %36 = vector.load %arg5[%c0_8, %c0_9, %c0_10] : memref<2x32x1xf32, #tpu.memory_space<vmem>>, vector<1x32x1xf32>
    %37 = vector.shape_cast %36 : vector<1x32x1xf32> to vector<32x1xf32>
    %38 = arith.truncf %33 : vector<32x512xf32> to vector<32x512xbf16>
    %cst = arith.constant dense<0.000000e+00> : vector<32x512xf32>
    %39 = tpu.matmul %35, %38, %cst {dimension_numbers = #tpu.dot_dimension_numbers<[1], [0], [0], [1], [0, 0, 1, 1], [], []>} : vector<32x32xbf16>, vector<32x512xbf16>, vector<32x512xf32> -> vector<32x512xf32>
    %40 = vector.broadcast %37 : vector<32x1xf32> to vector<32x512xf32>
    %41 = arith.addf %39, %40 : vector<32x512xf32>
    %42 = math.sin %41 : vector<32x512xf32>
    %c1 = arith.constant 1 : index
    %c0_11 = arith.constant 0 : index
    %c0_12 = arith.constant 0 : index
    %43 = vector.load %arg4[%c1, %c0_11, %c0_12] : memref<2x32x32xbf16, #tpu.memory_space<vmem>>, vector<1x32x32xbf16>
    %44 = vector.shape_cast %43 : vector<1x32x32xbf16> to vector<32x32xbf16>
    %c1_13 = arith.constant 1 : index
    %c0_14 = arith.constant 0 : index
    %c0_15 = arith.constant 0 : index
    %45 = vector.load %arg5[%c1_13, %c0_14, %c0_15] : memref<2x32x1xf32, #tpu.memory_space<vmem>>, vector<1x32x1xf32>
    %46 = vector.shape_cast %45 : vector<1x32x1xf32> to vector<32x1xf32>
    %47 = arith.truncf %42 : vector<32x512xf32> to vector<32x512xbf16>
    %cst_16 = arith.constant dense<0.000000e+00> : vector<32x512xf32>
    %48 = tpu.matmul %44, %47, %cst_16 {dimension_numbers = #tpu.dot_dimension_numbers<[1], [0], [0], [1], [0, 0, 1, 1], [], []>} : vector<32x32xbf16>, vector<32x512xbf16>, vector<32x512xf32> -> vector<32x512xf32>
    %49 = vector.broadcast %46 : vector<32x1xf32> to vector<32x512xf32>
    %50 = arith.addf %48, %49 : vector<32x512xf32>
    %51 = math.sin %50 : vector<32x512xf32>
    %c0_17 = arith.constant 0 : index
    %c0_18 = arith.constant 0 : index
    %52 = vector.load %arg6[%c0_17, %c0_18] : memref<3x32xbf16, #tpu.memory_space<vmem>>, vector<3x32xbf16>
    %53 = arith.truncf %51 : vector<32x512xf32> to vector<32x512xbf16>
    %cst_19 = arith.constant dense<0.000000e+00> : vector<3x512xf32>
    %54 = tpu.matmul %52, %53, %cst_19 {dimension_numbers = #tpu.dot_dimension_numbers<[1], [0], [0], [1], [0, 0, 1, 1], [], []>} : vector<3x32xbf16>, vector<32x512xbf16>, vector<3x512xf32> -> vector<3x512xf32>
    %c0_20 = arith.constant 0 : index
    %c0_21 = arith.constant 0 : index
    %55 = vector.load %arg7[%c0_20, %c0_21] : memref<3x1xf32, #tpu.memory_space<vmem>>, vector<3x1xf32>
    %56 = vector.broadcast %55 : vector<3x1xf32> to vector<3x512xf32>
    %57 = arith.addf %54, %56 : vector<3x512xf32>
    %58 = math.exp %57 : vector<3x512xf32>
    %c0_22 = arith.constant 0 : index
    %c0_23 = arith.constant 0 : index
    %c0_24 = arith.constant 0 : index
    %59 = vector.load %arg8[%c0_22, %c0_23, %c0_24] : memref<1x3x512xf32, #tpu.memory_space<vmem>>, vector<1x3x512xf32>
    %60 = vector.shape_cast %59 : vector<1x3x512xf32> to vector<3x512xf32>
    %61 = vector.shape_cast %58 : vector<3x512xf32> to vector<1x3x512xf32>
    tpu.vector_store %arg8[%c0_22, %c0_23, %c0_24], %61 {strides = array<i32>} : memref<1x3x512xf32, #tpu.memory_space<vmem>>, vector<1x3x512xf32>,
    return
  }
  func.func @transform_0(%arg0: i32, %arg1: i32) -> (i32, i32, i32) {
    %c0_i32 = arith.constant 0 : i32
    %c0_i32_0 = arith.constant 0 : i32
    return %arg0, %c0_i32, %arg1 : i32, i32, i32
  }
  func.func @transform_1(%arg0: i32, %arg1: i32) -> (i32, i32, i32) {
    %c0_i32 = arith.constant 0 : i32
    %c0_i32_0 = arith.constant 0 : i32
    %c0_i32_1 = arith.constant 0 : i32
    return %arg0, %c0_i32, %c0_i32_0 : i32, i32, i32
  }
  func.func @transform_2(%arg0: i32, %arg1: i32) -> (i32, i32, i32) {
    %c0_i32 = arith.constant 0 : i32
    %c0_i32_0 = arith.constant 0 : i32
    %c0_i32_1 = arith.constant 0 : i32
    %c0_i32_2 = arith.constant 0 : i32
    return %c0_i32, %c0_i32_0, %c0_i32_1 : i32, i32, i32
  }
  func.func @transform_3(%arg0: i32, %arg1: i32) -> (i32, i32, i32) {
    %c0_i32 = arith.constant 0 : i32
    %c0_i32_0 = arith.constant 0 : i32
    %c0_i32_1 = arith.constant 0 : i32
    %c0_i32_2 = arith.constant 0 : i32
    return %c0_i32, %c0_i32_0, %c0_i32_1 : i32, i32, i32
  }
  func.func @transform_4(%arg0: i32, %arg1: i32) -> (i32, i32) {
    %c0_i32 = arith.constant 0 : i32
    %c0_i32_0 = arith.constant 0 : i32
    %c0_i32_1 = arith.constant 0 : i32
    return %c0_i32, %c0_i32_0 : i32, i32
  }
  func.func @transform_5(%arg0: i32, %arg1: i32) -> (i32, i32) {
    %c0_i32 = arith.constant 0 : i32
    %c0_i32_0 = arith.constant 0 : i32
    %c0_i32_1 = arith.constant 0 : i32
    return %c0_i32, %c0_i32_0 : i32, i32
  }
  func.func @transform_6(%arg0: i32, %arg1: i32) -> (i32, i32, i32) {
    %c0_i32 = arith.constant 0 : i32
    %c0_i32_0 = arith.constant 0 : i32
    return %arg0, %c0_i32, %arg1 : i32, i32, i32
  }
}

</mosaic_0001>

<llo_original>
// kernel: tpu_custom_call.1
$region0: #{tpu_custom_call.1}
  #allocation0 [shape = 'u32[]', space=smem, size = 0x4, offset = 0x4, fixed_abs, tag = 'smem constant byte address 0x4 - core index']
  #allocation1 [shape = 'u32[144,128]{1,0:T(1,128)}', space=vmem, size = 0x12000, scoped, tag = 'internal scratch']
  %s0 = inlined_call_operand.vmem [shape: f32[2,3,1024], index: 0, kind: input, shape index: {}]
  %s1 = inlined_call_operand.vmem [shape: f32[2,32,8], index: 1, kind: input, shape index: {}]
  %s2 = inlined_call_operand.vmem [shape: bf16[2,32,32], index: 2, kind: input, shape index: {}]
  %s3 = inlined_call_operand.vmem [shape: f32[2,32,1], index: 3, kind: input, shape index: {}]
  %s4 = inlined_call_operand.vmem [shape: bf16[3,32], index: 4, kind: input, shape index: {}]
  %s5 = inlined_call_operand.vmem [shape: f32[3,1], index: 5, kind: input, shape index: {}]
  %s6 = inlined_call_operand.vmem [shape: f32[2,3,1024], index: 6, kind: output, shape index: {}]
  %s7 = sld [smem:[#allocation0]]
  $region57: #{tpu_custom_call.1} parent=0
    _
  %s9 = ssub.s32 1, %s7
  %s10 = scalar_select 0, %s9, %s7
  loop: start=0, step=1, limit=6
  $region2: #{tpu_custom_call.1} parent=0 // loop_pre_header
    _
  $region3: #{tpu_custom_call.1} parent=0 // loop_header
    %s12 = sphi 0, %s16
    %p13 = scmp.ge.s32.totalorder %s12, 6
    %s19 = sphi 0, %s31
    %s20 = sphi 0, %s27
    %s21 = sphi 0, %s19
    %s22 = sphi 0, %s20
    %s23 = sphi 0, %s21
    %s24 = sphi 0, %s22
    %s36 = sphi 0, %s38
    %s39 = sphi 0, %s36
    %s40 = sphi 0, %s39
    %s56 = sphi 0, %s40
    %s62 = sphi 0, %s64
    %s65 = sphi 0, %s62
    %s66 = sphi 0, %s65
    %s82 = sphi 0, %s66
    %s86 = sphi 0, %s86
    %s88 = sphi 0, %s86
    %s89 = sphi 0, %s88
    %s103 = sphi 0, %s89
    %s107 = sphi 0, %s107
    %s109 = sphi 0, %s107
    %s110 = sphi 0, %s109
    %s124 = sphi 0, %s110
    %s128 = sphi 0, %s128
    %s130 = sphi 0, %s128
    %s131 = sphi 0, %s130
    %s145 = sphi 0, %s131
    %s149 = sphi 0, %s149
    %s151 = sphi 0, %s149
    %s152 = sphi 0, %s151
    %s166 = sphi 0, %s152
    %s174 = sphi 0, %s176
    %s177 = sphi 0, %s174
    %s178 = sphi 0, %s177
    %s194 = sphi 0, %s178
  $region4: #{tpu_custom_call.1} parent=0 // loop_header_branch
    %15 = sbr.rel (%p13) target = $region8
  $region5: #{tpu_custom_call.1} parent=0 // loop_body
    %s17 = ssub.s32 %s12, 1
    %s18 = ssub.s32 %s12, 2
    %s25 = sadd.s32 1, %s20
    %p26 = scmp.ge.s32.totalorder %s25, 2
    %s27 = scalar_select %p26, 0, %s25
    %s28 = sadd.s32 1, %s19
    %s29 = scalar_select %p26, %s28, %s19
    %p30 = scmp.ge.s32.totalorder %s29, 2
    %s31 = scalar_select %p30, 0, %s29
    %s32 = ssub.s32 %s19, %s31
    %s33 = ssub.s32 %s20, %s27
    %s34 = sor.u32 %s32, %s33
    %p35 = scmp.eq.s32.totalorder %s34, 0
    %s37 = sadd.s32 %s36, 1
    %s38 = scalar_select %p35, %s36, %s37
    %p41 = pneg %p35
    %p42 = scmp.eq.s32.totalorder %s12, 3
    %p43 = por %p41, %p42
    %p44 = scmp.ne.s32.totalorder %s36, %s39
    %p45 = scmp.eq.s32.totalorder %s12, 0
    %p46 = por %p44, %p45
    %p47 = scmp.ne.s32.totalorder %s36, %s39
    %p48 = scmp.eq.s32.totalorder %s17, 3
    %p49 = por %p47, %p48
    %p50 = scmp.ne.s32.totalorder %s39, %s40
    %p51 = scmp.eq.s32.totalorder %s17, 0
    %p52 = por %p50, %p51
    %p53 = scmp.ne.s32.totalorder %s39, %s40
    %p54 = scmp.eq.s32.totalorder %s18, 3
    %p55 = por %p53, %p54
    %p57 = scmp.ne.s32.totalorder %s40, %s56
    %p58 = scmp.eq.s32.totalorder %s18, 0
    %p59 = por %p57, %p58
    %s60 = ssub.s32 %s19, %s31
    %p61 = scmp.eq.s32.totalorder %s60, 0
    %s63 = sadd.s32 %s62, 1
    %s64 = scalar_select %p61, %s62, %s63
    %p67 = pneg %p61
    %p68 = scmp.eq.s32.totalorder %s12, 3
    %p69 = por %p67, %p68
    %p70 = scmp.ne.s32.totalorder %s62, %s65
    %p71 = scmp.eq.s32.totalorder %s12, 0
    %p72 = por %p70, %p71
    %p73 = scmp.ne.s32.totalorder %s62, %s65
    %p74 = scmp.eq.s32.totalorder %s17, 3
    %p75 = por %p73, %p74
    %p76 = scmp.ne.s32.totalorder %s65, %s66
    %p77 = scmp.eq.s32.totalorder %s17, 0
    %p78 = por %p76, %p77
    %p79 = scmp.ne.s32.totalorder %s65, %s66
    %p80 = scmp.eq.s32.totalorder %s18, 3
    %p81 = por %p79, %p80
    %p83 = scmp.ne.s32.totalorder %s66, %s82
    %p84 = scmp.eq.s32.totalorder %s18, 0
    %p85 = por %p83, %p84
    %s87 = sadd.s32 %s86, 1
    %p90 = scmp.eq.s32.totalorder %s12, 3
    %p91 = scmp.ne.s32.totalorder %s86, %s88
    %p92 = scmp.eq.s32.totalorder %s12, 0
    %p93 = por %p91, %p92
    %p94 = scmp.ne.s32.totalorder %s86, %s88
    %p95 = scmp.eq.s32.totalorder %s17, 3
    %p96 = por %p94, %p95
    %p97 = scmp.ne.s32.totalorder %s88, %s89
    %p98 = scmp.eq.s32.totalorder %s17, 0
    %p99 = por %p97, %p98
    %p100 = scmp.ne.s32.totalorder %s88, %s89
    %p101 = scmp.eq.s32.totalorder %s18, 3
    %p102 = por %p100, %p101
    %p104 = scmp.ne.s32.totalorder %s89, %s103
    %p105 = scmp.eq.s32.totalorder %s18, 0
    %p106 = por %p104, %p105
    %s108 = sadd.s32 %s107, 1
    %p111 = scmp.eq.s32.totalorder %s12, 3
    %p112 = scmp.ne.s32.totalorder %s107, %s109
    %p113 = scmp.eq.s32.totalorder %s12, 0
    %p114 = por %p112, %p113
    %p115 = scmp.ne.s32.totalorder %s107, %s109
    %p116 = scmp.eq.s32.totalorder %s17, 3
    %p117 = por %p115, %p116
    %p118 = scmp.ne.s32.totalorder %s109, %s110
    %p119 = scmp.eq.s32.totalorder %s17, 0
    %p120 = por %p118, %p119
    %p121 = scmp.ne.s32.totalorder %s109, %s110
    %p122 = scmp.eq.s32.totalorder %s18, 3
    %p123 = por %p121, %p122
    %p125 = scmp.ne.s32.totalorder %s110, %s124
    %p126 = scmp.eq.s32.totalorder %s18, 0
    %p127 = por %p125, %p126
    %s129 = sadd.s32 %s128, 1
    %p132 = scmp.eq.s32.totalorder %s12, 3
    %p133 = scmp.ne.s32.totalorder %s128, %s130
    %p134 = scmp.eq.s32.totalorder %s12, 0
    %p135 = por %p133, %p134
    %p136 = scmp.ne.s32.totalorder %s128, %s130
    %p137 = scmp.eq.s32.totalorder %s17, 3
    %p138 = por %p136, %p137
    %p139 = scmp.ne.s32.totalorder %s130, %s131
    %p140 = scmp.eq.s32.totalorder %s17, 0
    %p141 = por %p139, %p140
    %p142 = scmp.ne.s32.totalorder %s130, %s131
    %p143 = scmp.eq.s32.totalorder %s18, 3
    %p144 = por %p142, %p143
    %p146 = scmp.ne.s32.totalorder %s131, %s145
    %p147 = scmp.eq.s32.totalorder %s18, 0
    %p148 = por %p146, %p147
    %s150 = sadd.s32 %s149, 1
    %p153 = scmp.eq.s32.totalorder %s12, 3
    %p154 = scmp.ne.s32.totalorder %s149, %s151
    %p155 = scmp.eq.s32.totalorder %s12, 0
    %p156 = por %p154, %p155
    %p157 = scmp.ne.s32.totalorder %s149, %s151
    %p158 = scmp.eq.s32.totalorder %s17, 3
    %p159 = por %p157, %p158
    %p160 = scmp.ne.s32.totalorder %s151, %s152
    %p161 = scmp.eq.s32.totalorder %s17, 0
    %p162 = por %p160, %p161
    %p163 = scmp.ne.s32.totalorder %s151, %s152
    %p164 = scmp.eq.s32.totalorder %s18, 3
    %p165 = por %p163, %p164
    %p167 = scmp.ne.s32.totalorder %s152, %s166
    %p168 = scmp.eq.s32.totalorder %s18, 0
    %p169 = por %p167, %p168
    %s170 = ssub.s32 %s19, %s31
    %s171 = ssub.s32 %s20, %s27
    %s172 = sor.u32 %s170, %s171
    %p173 = scmp.eq.s32.totalorder %s172, 0
    %s175 = sadd.s32 %s174, 1
    %s176 = scalar_select %p173, %s174, %s175
    %p179 = pneg %p173
    %p180 = scmp.eq.s32.totalorder %s12, 3
    %p181 = por %p179, %p180
    %p182 = scmp.ne.s32.totalorder %s174, %s177
    %p183 = scmp.eq.s32.totalorder %s12, 0
    %p184 = por %p182, %p183
    %p185 = scmp.ne.s32.totalorder %s174, %s177
    %p186 = scmp.eq.s32.totalorder %s17, 3
    %p187 = por %p185, %p186
    %p188 = scmp.ne.s32.totalorder %s177, %s178
    %p189 = scmp.eq.s32.totalorder %s17, 0
    %p190 = por %p188, %p189
    %p191 = scmp.ne.s32.totalorder %s177, %s178
    %p192 = scmp.eq.s32.totalorder %s18, 3
    %p193 = por %p191, %p192
    %p195 = scmp.ne.s32.totalorder %s178, %s194
    %p196 = scmp.eq.s32.totalorder %s18, 0
    %p197 = por %p195, %p196
    %p198 = scmp.le.s32.totalorder 1, %s12
    %p199 = scmp.lt.s32.totalorder %s12, 5
    %p200 = pnand %p198, %p199
    %p201 = pneg %p200
    // Predicated region
    $region9: #{tpu_custom_call.1} parent=5 // pred_check
      _
    $region10: #{tpu_custom_call.1} parent=5 // pred_check_branch
      %203 = sbr.rel (%p200) target = $region12
    $region11: #{tpu_custom_call.1} parent=5 // pred_region
      %s204 = ssub.s32 %s12, 1
      // Predicated region
      $region13: #{tpu_custom_call.1} parent=11 // pred_check
        %p205 = pneg %p99
      $region14: #{tpu_custom_call.1} parent=11 // pred_check_branch
        %207 = sbr.rel (%p205) target = $region16
      $region15: #{tpu_custom_call.1} parent=11 // pred_region
        _
      $region16: #{tpu_custom_call.1} parent=11 // pred_fallthru
        _
      // Predicated region
      $region17: #{tpu_custom_call.1} parent=11 // pred_check
        %p208 = pneg %p120
      $region18: #{tpu_custom_call.1} parent=11 // pred_check_branch
        %210 = sbr.rel (%p208) target = $region20
      $region19: #{tpu_custom_call.1} parent=11 // pred_region
        _
      $region20: #{tpu_custom_call.1} parent=11 // pred_fallthru
        _
      // Predicated region
      $region21: #{tpu_custom_call.1} parent=11 // pred_check
        %p211 = pneg %p141
      $region22: #{tpu_custom_call.1} parent=11 // pred_check_branch
        %213 = sbr.rel (%p211) target = $region24
      $region23: #{tpu_custom_call.1} parent=11 // pred_region
        _
      $region24: #{tpu_custom_call.1} parent=11 // pred_fallthru
        _
      // Predicated region
      $region25: #{tpu_custom_call.1} parent=11 // pred_check
        %p214 = pneg %p162
      $region26: #{tpu_custom_call.1} parent=11 // pred_check_branch
        %216 = sbr.rel (%p214) target = $region28
      $region27: #{tpu_custom_call.1} parent=11 // pred_region
        _
      $region28: #{tpu_custom_call.1} parent=11 // pred_fallthru
        _
    $region12: #{tpu_custom_call.1} parent=5 // pred_fallthru
      _
    %p217 = scmp.lt.s32.totalorder %s12, 4
    // Predicated region
    $region29: #{tpu_custom_call.1} parent=5 // pred_check
      %p218 = pneg %p217
    $region30: #{tpu_custom_call.1} parent=5 // pred_check_branch
      %220 = sbr.rel (%p218) target = $region32
    $region31: #{tpu_custom_call.1} parent=5 // pred_region
      // Predicated region
      $region33: #{tpu_custom_call.1} parent=31 // pred_check
        %p221 = pneg %p46
      $region34: #{tpu_custom_call.1} parent=31 // pred_check_branch
        %223 = sbr.rel (%p221) target = $region36
      $region35: #{tpu_custom_call.1} parent=31 // pred_region
        %s224 = smul.u32 4, %s20
        %p225 = scmp.lt.s32.totalorder %s19, 1
        %s226 = scalar_select %p225, %s19, 1
        %p227 = scmp.lt.s32.totalorder %s224, 7
        %s228 = scalar_select %p227, %s224, 7
        %s229 = smul.addr %s226, 8
        %s230 = sadd.s32 %s228, %s229
        %s231 = smul.addr %s230, 4
        %s232 = scalar_lea.vmem %s0, %s231
        %s233 = smul.u32 4, %s20
      $region36: #{tpu_custom_call.1} parent=31 // pred_fallthru
        _
      // Predicated region
      $region37: #{tpu_custom_call.1} parent=31 // pred_check
        %p234 = pneg %p72
      $region38: #{tpu_custom_call.1} parent=31 // pred_check_branch
        %236 = sbr.rel (%p234) target = $region40
      $region39: #{tpu_custom_call.1} parent=31 // pred_region
        %p237 = scmp.lt.s32.totalorder %s19, 1
        %s238 = scalar_select %p237, %s19, 1
        %s239 = smul.addr %s238, 4
        %s240 = smul.addr %s239, 8
        %s241 = scalar_lea.vmem %s1, %s240
      $region40: #{tpu_custom_call.1} parent=31 // pred_fallthru
        _
    $region32: #{tpu_custom_call.1} parent=5 // pred_fallthru
      _
    %p242 = scmp.le.s32.totalorder 1, %s12
    %p243 = scmp.lt.s32.totalorder %s12, 5
    %p244 = pnand %p242, %p243
    %p245 = pneg %p244
    // Predicated region
    $region41: #{tpu_custom_call.1} parent=5 // pred_check
      _
    $region42: #{tpu_custom_call.1} parent=5 // pred_check_branch
      %247 = sbr.rel (%p244) target = $region44
    $region43: #{tpu_custom_call.1} parent=5 // pred_region
      %s248 = ssub.s32 %s12, 1
      %s249 = smul.u32 4, %s22
      %p250 = scmp.lt.s32.totalorder %s21, 1
      %s251 = scalar_select %p250, %s21, 1
      %p252 = scmp.lt.s32.totalorder %s249, 7
      %s253 = scalar_select %p252, %s249, 7
      %s254 = smul.addr %s251, 8
      %s255 = sadd.s32 %s253, %s254
      %s256 = smul.addr %s255, 4
      %s257 = scalar_lea.vmem %s0, %s256
      %p258 = pneg %p52
      %p259 = pneg %p49
      %p260 = scmp.lt.s32.totalorder %s21, 1
      %s261 = scalar_select %p260, %s21, 1
      %s262 = smul.addr %s261, 4
      %s263 = smul.addr %s262, 8
      %s264 = scalar_lea.vmem %s1, %s263
      %p265 = pneg %p78
      %p266 = pneg %p75
      %p267 = pneg %p99
      %p268 = pneg %p96
      %p269 = pneg %p120
      %p270 = pneg %p117
      %p271 = pneg %p141
      %p272 = pneg %p138
      %p273 = pneg %p162
      %p274 = pneg %p159
      %p275 = pneg %p190
      %p276 = pneg %p187
      %s277 = smul.u32 4, %s22
      %p278 = scmp.lt.s32.totalorder %s21, 1
      %s279 = scalar_select %p278, %s21, 1
      %p280 = scmp.lt.s32.totalorder %s277, 7
      %s281 = scalar_select %p280, %s277, 7
      %s282 = smul.addr %s279, 8
      %s283 = sadd.s32 %s281, %s282
      %s284 = smul.addr %s283, 4
      %s285 = scalar_lea.vmem %s6, %s284
      %s286 = smul.u32 4, %s22
      %p287 = scmp.lt.s32.totalorder %s21, 1
      %s288 = scalar_select %p287, %s21, 1
      %p289 = scmp.lt.s32.totalorder %s286, 7
      %s290 = scalar_select %p289, %s286, 7
      %s291 = smul.addr %s288, 8
      %s292 = sadd.s32 %s290, %s291
      %s293 = smul.addr %s292, 4
      %s294 = scalar_lea.vmem %s0, %s293
      %s295 = smul.u32 4, %s22
      %p296 = scmp.lt.s32.totalorder %s21, 1
      %s297 = scalar_select %p296, %s21, 1
      %s298 = smul.addr %s297, 4
      %s299 = smul.addr %s298, 8
      %s300 = scalar_lea.vmem %s1, %s299
      %s301 = smul.u32 4, %s22
      %p302 = scmp.lt.s32.totalorder %s21, 1
      %s303 = scalar_select %p302, %s21, 1
      %p304 = scmp.lt.s32.totalorder %s301, 7
      %s305 = scalar_select %p304, %s301, 7
      %s306 = smul.addr %s303, 8
      %s307 = sadd.s32 %s305, %s306
      %s308 = smul.addr %s307, 4
      %s309 = scalar_lea.vmem %s6, %s308
      %s310 = smul.u32 4, %s22
      %v312 = vld [vmem:[%s294] sm:$0x77]
      %v313 = vld [vmem:[%s294 + $0x8] sm:$0x77]
      %v314 = vmul.f32 %v312, %v312
      %v315 = vmul.f32 %v313, %v313
      %v318 = vrot.slane %v314, 6
      %v319 = vrot.slane %v318, 4
      %v320 = vrot.slane %v315, 6
      %v321 = vrot.slane %v320, 4
      %v324 = vadd.f32 %v314, %v319
      %v325 = vadd.f32 %v315, %v321
      %v326 = vrsqrt.pop %v324
      %v327 = vmul.f32 %v324, %v326
      %vm328 = vcmp.eq.f32.partialorder %v324, inf
      %v329 = vsel %vm328, %v324, %v327
      %vm330 = vcmp.eq.f32.partialorder %v324, 0.0
      %v331 = vand.u32 %v324, 2147483648
      %v332 = vsel %vm330, %v331, %v329
      %v333 = vrsqrt.pop %v325
      %v334 = vmul.f32 %v325, %v333
      %vm335 = vcmp.eq.f32.partialorder %v325, inf
      %v336 = vsel %vm335, %v325, %v334
      %vm337 = vcmp.eq.f32.partialorder %v325, 0.0
      %v338 = vand.u32 %v325, 2147483648
      %v339 = vsel %vm337, %v338, %v336
      %v340 = vld [vmem:[%s300] sm:$0xff]
      %v341 = vld [vmem:[%s300 + $0x8] sm:$0xff]
      %v342 = vld [vmem:[%s300 + $0x10] sm:$0xff]
      %v343 = vld [vmem:[%s300 + $0x18] sm:$0xff]
      %345 = vset.pattern.permute.xlu0 0
      %346 = vperm.xlu0 %345, %v340
      %v347 = vpop.permute.xlu0 %346
      %350 = vset.pattern.permute.xlu0 0
      %351 = vperm.xlu0 %350, %v341
      %v352 = vpop.permute.xlu0 %351
      %355 = vset.pattern.permute.xlu0 0
      %356 = vperm.xlu0 %355, %v342
      %v357 = vpop.permute.xlu0 %356
      %360 = vset.pattern.permute.xlu0 0
      %361 = vperm.xlu0 %360, %v343
      %v362 = vpop.permute.xlu0 %361
      %v366 = vlaneseq
      %v367 = vshrl.u32 %v366, 7
      %v368 = vsub.s32 0, %v367
      %v369 = vrot.slane %v312, %v368
      %v370 = vlaneseq
      %v371 = vshrl.u32 %v370, 7
      %v372 = vsub.s32 4, %v371
      %v373 = vrot.slane %v312, %v372
      %v374 = vlaneseq
      %v375 = vshrl.u32 %v374, 7
      %v376 = vsub.s32 0, %v375
      %v377 = vrot.slane %v313, %v376
      %v378 = vlaneseq
      %v379 = vshrl.u32 %v378, 7
      %v380 = vsub.s32 4, %v379
      %v381 = vrot.slane %v313, %v380
      %v386 = vlaneseq
      %v387 = vshrl.u32 %v386, 7
      %v388 = vsub.s32 0, %v387
      %v389 = vrot.slane %v369, %v388
      %v390 = vlaneseq
      %v391 = vshrl.u32 %v390, 7
      %v392 = vsub.s32 0, %v391
      %v393 = vrot.slane %v373, %v392
      %v394 = vlaneseq
      %v395 = vshrl.u32 %v394, 7
      %v396 = vsub.s32 0, %v395
      %v397 = vrot.slane %v377, %v396
      %v398 = vlaneseq
      %v399 = vshrl.u32 %v398, 7
      %v400 = vsub.s32 0, %v399
      %v401 = vrot.slane %v381, %v400
      %v402 = vmul.f32 %v347, %v389
      %v403 = vmul.f32 %v347, %v393
      %v404 = vmul.f32 %v347, %v397
      %v405 = vmul.f32 %v347, %v401
      %v406 = vmul.f32 %v352, %v389
      %v407 = vmul.f32 %v352, %v393
      %v408 = vmul.f32 %v352, %v397
      %v409 = vmul.f32 %v352, %v401
      %v410 = vmul.f32 %v357, %v389
      %v411 = vmul.f32 %v357, %v393
      %v412 = vmul.f32 %v357, %v397
      %v413 = vmul.f32 %v357, %v401
      %v414 = vmul.f32 %v362, %v389
      %v415 = vmul.f32 %v362, %v393
      %v416 = vmul.f32 %v362, %v397
      %v417 = vmul.f32 %v362, %v401
      %418 = vset.pattern.permute.xlu0 1
      %419 = vperm.xlu0 %418, %v340
      %v420 = vpop.permute.xlu0 %419
      %422 = vset.pattern.permute.xlu0 1
      %423 = vperm.xlu0 %422, %v341
      %v424 = vpop.permute.xlu0 %423
      %426 = vset.pattern.permute.xlu0 1
      %427 = vperm.xlu0 %426, %v342
      %v428 = vpop.permute.xlu0 %427
      %430 = vset.pattern.permute.xlu0 1
      %431 = vperm.xlu0 %430, %v343
      %v432 = vpop.permute.xlu0 %431
      %v434 = vlaneseq
      %v435 = vshrl.u32 %v434, 7
      %v436 = vsub.s32 2, %v435
      %v437 = vrot.slane %v312, %v436
      %v438 = vlaneseq
      %v439 = vshrl.u32 %v438, 7
      %v440 = vsub.s32 6, %v439
      %v441 = vrot.slane %v312, %v440
      %v442 = vlaneseq
      %v443 = vshrl.u32 %v442, 7
      %v444 = vsub.s32 2, %v443
      %v445 = vrot.slane %v313, %v444
      %v446 = vlaneseq
      %v447 = vshrl.u32 %v446, 7
      %v448 = vsub.s32 6, %v447
      %v449 = vrot.slane %v313, %v448
      %v454 = vlaneseq
      %v455 = vshrl.u32 %v454, 7
      %v456 = vsub.s32 2, %v455
      %v457 = vrot.slane %v437, %v456
      %v458 = vlaneseq
      %v459 = vshrl.u32 %v458, 7
      %v460 = vsub.s32 2, %v459
      %v461 = vrot.slane %v441, %v460
      %v462 = vlaneseq
      %v463 = vshrl.u32 %v462, 7
      %v464 = vsub.s32 2, %v463
      %v465 = vrot.slane %v445, %v464
      %v466 = vlaneseq
      %v467 = vshrl.u32 %v466, 7
      %v468 = vsub.s32 2, %v467
      %v469 = vrot.slane %v449, %v468
      %v470 = vmul.f32 %v420, %v457
      %v471 = vmul.f32 %v420, %v461
      %v472 = vmul.f32 %v420, %v465
      %v473 = vmul.f32 %v420, %v469
      %v474 = vmul.f32 %v424, %v457
      %v475 = vmul.f32 %v424, %v461
      %v476 = vmul.f32 %v424, %v465
      %v477 = vmul.f32 %v424, %v469
      %v478 = vmul.f32 %v428, %v457
      %v479 = vmul.f32 %v428, %v461
      %v480 = vmul.f32 %v428, %v465
      %v481 = vmul.f32 %v428, %v469
      %v482 = vmul.f32 %v432, %v457
      %v483 = vmul.f32 %v432, %v461
      %v484 = vmul.f32 %v432, %v465
      %v485 = vmul.f32 %v432, %v469
      %v486 = vadd.f32 %v402, %v470
      %v487 = vadd.f32 %v403, %v471
      %v488 = vadd.f32 %v404, %v472
      %v489 = vadd.f32 %v405, %v473
      %v490 = vadd.f32 %v406, %v474
      %v491 = vadd.f32 %v407, %v475
      %v492 = vadd.f32 %v408, %v476
      %v493 = vadd.f32 %v409, %v477
      %v494 = vadd.f32 %v410, %v478
      %v495 = vadd.f32 %v411, %v479
      %v496 = vadd.f32 %v412, %v480
      %v497 = vadd.f32 %v413, %v481
      %v498 = vadd.f32 %v414, %v482
      %v499 = vadd.f32 %v415, %v483
      %v500 = vadd.f32 %v416, %v484
      %v501 = vadd.f32 %v417, %v485
      %502 = vset.pattern.permute.xlu0 3
      %503 = vperm.xlu0 %502, %v340
      %v504 = vpop.permute.xlu0 %503
      %506 = vset.pattern.permute.xlu0 3
      %507 = vperm.xlu0 %506, %v341
      %v508 = vpop.permute.xlu0 %507
      %510 = vset.pattern.permute.xlu0 3
      %511 = vperm.xlu0 %510, %v342
      %v512 = vpop.permute.xlu0 %511
      %514 = vset.pattern.permute.xlu0 3
      %515 = vperm.xlu0 %514, %v343
      %v516 = vpop.permute.xlu0 %515
      %v520 = vlaneseq
      %v521 = vshrl.u32 %v520, 7
      %v522 = vsub.s32 0, %v521
      %v523 = vrot.slane %v332, %v522
      %v524 = vlaneseq
      %v525 = vshrl.u32 %v524, 7
      %v526 = vsub.s32 4, %v525
      %v527 = vrot.slane %v332, %v526
      %v528 = vlaneseq
      %v529 = vshrl.u32 %v528, 7
      %v530 = vsub.s32 0, %v529
      %v531 = vrot.slane %v339, %v530
      %v532 = vlaneseq
      %v533 = vshrl.u32 %v532, 7
      %v534 = vsub.s32 4, %v533
      %v535 = vrot.slane %v339, %v534
      %v540 = vlaneseq
      %v541 = vshrl.u32 %v540, 7
      %v542 = vsub.s32 0, %v541
      %v543 = vrot.slane %v523, %v542
      %v544 = vlaneseq
      %v545 = vshrl.u32 %v544, 7
      %v546 = vsub.s32 0, %v545
      %v547 = vrot.slane %v527, %v546
      %v548 = vlaneseq
      %v549 = vshrl.u32 %v548, 7
      %v550 = vsub.s32 0, %v549
      %v551 = vrot.slane %v531, %v550
      %v552 = vlaneseq
      %v553 = vshrl.u32 %v552, 7
      %v554 = vsub.s32 0, %v553
      %v555 = vrot.slane %v535, %v554
      %v556 = vmul.f32 %v504, %v543
      %v557 = vmul.f32 %v504, %v547
      %v558 = vmul.f32 %v504, %v551
      %v559 = vmul.f32 %v504, %v555
      %v560 = vmul.f32 %v508, %v543
      %v561 = vmul.f32 %v508, %v547
      %v562 = vmul.f32 %v508, %v551
      %v563 = vmul.f32 %v508, %v555
      %v564 = vmul.f32 %v512, %v543
      %v565 = vmul.f32 %v512, %v547
      %v566 = vmul.f32 %v512, %v551
      %v567 = vmul.f32 %v512, %v555
      %v568 = vmul.f32 %v516, %v543
      %v569 = vmul.f32 %v516, %v547
      %v570 = vmul.f32 %v516, %v551
      %v571 = vmul.f32 %v516, %v555
      %v572 = vadd.f32 %v486, %v556
      %v573 = vadd.f32 %v487, %v557
      %v574 = vadd.f32 %v488, %v558
      %v575 = vadd.f32 %v489, %v559
      %v576 = vadd.f32 %v490, %v560
      %v577 = vadd.f32 %v491, %v561
      %v578 = vadd.f32 %v492, %v562
      %v579 = vadd.f32 %v493, %v563
      %v580 = vadd.f32 %v494, %v564
      %v581 = vadd.f32 %v495, %v565
      %v582 = vadd.f32 %v496, %v566
      %v583 = vadd.f32 %v497, %v567
      %v584 = vadd.f32 %v498, %v568
      %v585 = vadd.f32 %v499, %v569
      %v586 = vadd.f32 %v500, %v570
      %v587 = vadd.f32 %v501, %v571
      %588 = vset.pattern.permute.xlu0 4
      %589 = vperm.xlu0 %588, %v340
      %v590 = vpop.permute.xlu0 %589
      %592 = vset.pattern.permute.xlu0 4
      %593 = vperm.xlu0 %592, %v341
      %v594 = vpop.permute.xlu0 %593
      %596 = vset.pattern.permute.xlu0 4
      %597 = vperm.xlu0 %596, %v342
      %v598 = vpop.permute.xlu0 %597
      %600 = vset.pattern.permute.xlu0 4
      %601 = vperm.xlu0 %600, %v343
      %v602 = vpop.permute.xlu0 %601
      %v604 = vlaneseq
      %v605 = vshrl.u32 %v604, 7
      %v606 = vsub.s32 1, %v605
      %v607 = vrot.slane %v312, %v606
      %v608 = vlaneseq
      %v609 = vshrl.u32 %v608, 7
      %v610 = vsub.s32 5, %v609
      %v611 = vrot.slane %v312, %v610
      %v612 = vlaneseq
      %v613 = vshrl.u32 %v612, 7
      %v614 = vsub.s32 1, %v613
      %v615 = vrot.slane %v313, %v614
      %v616 = vlaneseq
      %v617 = vshrl.u32 %v616, 7
      %v618 = vsub.s32 5, %v617
      %v619 = vrot.slane %v313, %v618
      %v624 = vlaneseq
      %v625 = vshrl.u32 %v624, 7
      %v626 = vsub.s32 1, %v625
      %v627 = vrot.slane %v607, %v626
      %v628 = vlaneseq
      %v629 = vshrl.u32 %v628, 7
      %v630 = vsub.s32 1, %v629
      %v631 = vrot.slane %v611, %v630
      %v632 = vlaneseq
      %v633 = vshrl.u32 %v632, 7
      %v634 = vsub.s32 1, %v633
      %v635 = vrot.slane %v615, %v634
      %v636 = vlaneseq
      %v637 = vshrl.u32 %v636, 7
      %v638 = vsub.s32 1, %v637
      %v639 = vrot.slane %v619, %v638
      %v640 = vmul.f32 %v590, %v627
      %v641 = vmul.f32 %v590, %v631
      %v642 = vmul.f32 %v590, %v635
      %v643 = vmul.f32 %v590, %v639
      %v644 = vmul.f32 %v594, %v627
      %v645 = vmul.f32 %v594, %v631
      %v646 = vmul.f32 %v594, %v635
      %v647 = vmul.f32 %v594, %v639
      %v648 = vmul.f32 %v598, %v627
      %v649 = vmul.f32 %v598, %v631
      %v650 = vmul.f32 %v598, %v635
      %v651 = vmul.f32 %v598, %v639
      %v652 = vmul.f32 %v602, %v627
      %v653 = vmul.f32 %v602, %v631
      %v654 = vmul.f32 %v602, %v635
      %v655 = vmul.f32 %v602, %v639
      %v656 = vadd.f32 %v572, %v640
      %v657 = vadd.f32 %v573, %v641
      %v658 = vadd.f32 %v574, %v642
      %v659 = vadd.f32 %v575, %v643
      %v660 = vadd.f32 %v576, %v644
      %v661 = vadd.f32 %v577, %v645
      %v662 = vadd.f32 %v578, %v646
      %v663 = vadd.f32 %v579, %v647
      %v664 = vadd.f32 %v580, %v648
      %v665 = vadd.f32 %v581, %v649
      %v666 = vadd.f32 %v582, %v650
      %v667 = vadd.f32 %v583, %v651
      %v668 = vadd.f32 %v584, %v652
      %v669 = vadd.f32 %v585, %v653
      %v670 = vadd.f32 %v586, %v654
      %v671 = vadd.f32 %v587, %v655
      %672 = vset.pattern.permute.xlu0 2
      %673 = vperm.xlu0 %672, %v340
      %v674 = vpop.permute.xlu0 %673
      %676 = vset.pattern.permute.xlu0 2
      %677 = vperm.xlu0 %676, %v341
      %v678 = vpop.permute.xlu0 %677
      %680 = vset.pattern.permute.xlu0 2
      %681 = vperm.xlu0 %680, %v342
      %v682 = vpop.permute.xlu0 %681
      %684 = vset.pattern.permute.xlu0 2
      %685 = vperm.xlu0 %684, %v343
      %v686 = vpop.permute.xlu0 %685
      %v688 = vadd.f32 %v656, %v674
      %v689 = vadd.f32 %v657, %v674
      %v690 = vadd.f32 %v658, %v674
      %v691 = vadd.f32 %v659, %v674
      %v692 = vadd.f32 %v660, %v678
      %v693 = vadd.f32 %v661, %v678
      %v694 = vadd.f32 %v662, %v678
      %v695 = vadd.f32 %v663, %v678
      %v696 = vadd.f32 %v664, %v682
      %v697 = vadd.f32 %v665, %v682
      %v698 = vadd.f32 %v666, %v682
      %v699 = vadd.f32 %v667, %v682
      %v700 = vadd.f32 %v668, %v686
      %v701 = vadd.f32 %v669, %v686
      %v702 = vadd.f32 %v670, %v686
      %v703 = vadd.f32 %v671, %v686
      %v704 = vand.u32 2147483647, %v688
      %vm705 = vcmp.le.f32.partialorder %v704, 0.7853982
      %vm706 = vcmp.lt.s32.totalorder %v688, 0
      %v707 = vand.u32 %v688, 2139095040
      %v708 = vshrl.u32 %v707, 23
      %v709 = vsub.s32 %v708, 127
      %v710 = vand.u32 2147483647, %v688
      %v711 = vand.u32 %v710, 8388607
      %v712 = vor.u32 %v711, 8388608
      %v713 = vsub.s32 0, %v712
      %v714 = vadd.s32 %v709, 1
      %vm715 = vcmp.gt.s32.totalorder %v714, 0
      %v716 = vsel %vm715, %v714, 0
      %v717 = vshrl.u32 %v716, 5
      %v718 = vand.u32 %v716, 31
      %v719 = vsub.s32 32, %v718
      %v720 = vshrl.u32 683565275, %v719
      %v721 = vshll.u32 683565275, %v718
      %v722 = vshrl.u32 2475754826, %v719
      %v723 = vor.u32 %v721, %v722
      %v724 = vshll.u32 2475754826, %v718
      %v725 = vshrl.u32 2131351028, %v719
      %v726 = vor.u32 %v724, %v725
      %v727 = vshll.u32 2131351028, %v718
      %v728 = vshrl.u32 2102212464, %v719
      %v729 = vor.u32 %v727, %v728
      %v730 = vshll.u32 2102212464, %v718
      %v731 = vshrl.u32 920167782, %v719
      %v732 = vor.u32 %v730, %v731
      %v733 = vshll.u32 920167782, %v718
      %v734 = vshrl.u32 1326507024, %v719
      %v735 = vor.u32 %v733, %v734
      %vm736 = vcmp.lt.s32.totalorder %v717, 1
      %vm737 = vcmp.lt.s32.totalorder %v717, 2
      %vm738 = vcmp.lt.s32.totalorder %v717, 3
      %vm739 = vcmp.lt.s32.totalorder %v717, 4
      %v740 = vsel %vm736, %v720, %v723
      %v741 = vsel %vm739, %v729, 2102212464
      %v742 = vsel %vm738, %v726, %v741
      %v743 = vsel %vm737, %v740, %v742
      %v744 = vsel %vm736, %v723, %v726
      %v745 = vsel %vm739, %v732, 920167782
      %v746 = vsel %vm738, %v729, %v745
      %v747 = vsel %vm737, %v744, %v746
      %v748 = vsel %vm736, %v726, %v729
      %v749 = vsel %vm739, %v735, 1326507024
      %v750 = vsel %vm738, %v732, %v749
      %v751 = vsel %vm737, %v748, %v750
      %v752 = vshll.u32 %v712, 8
      %v753 = vmul.u32.u64.compose %v752, %v751
      %v754 = vextract.low.u32 %v753
      %v755 = vextract.high.u32 %v753
      %v756 = vmul.u32.u64.compose %v752, %v747
      %v757 = vextract.low.u32 %v756
      %v758 = vextract.high.u32 %v756
      %v759 = vmul.u32 %v752, %v743
      %v760 = vadd.s32 %v755, %v757
      %vm761 = vc.u32 %v755, %v757
      %v762 = vadd.s32 %v758, 1
      %v763 = vsel %vm761, %v762, %v758
      %v764 = vadd.s32 %v759, %v763
      %v765 = vadd.s32 %v764, 536870912
      %v766 = vshrl.u32 %v765, 30
      %v767 = vshll.u32 %v766, 30
      %v768 = vsub.s32 %v764, %v767
      %vm769 = vcmp.lt.s32.totalorder %v768, 0
      %v770 = vsub.s32 0, %v768
      %v771 = vsel %vm769, %v770, %v768
      %v772 = vclz %v771
      %v773 = vsub.s32 %v772, 2
      %vm774 = vcmp.gt.s32.totalorder 0, %v773
      %v775 = vsel %vm774, 0, %v773
      %v776 = vsub.s32 32, %v775
      %v777 = vshll.u32 %v768, %v775
      %v778 = vshrl.u32 %v760, %v776
      %v779 = vor.u32 %v777, %v778
      %v780 = vsub.s32 4294967266, %v775
      %v781 = vadd.s32 %v780, 127
      %v782 = vshll.u32 %v781, 23
      %v783 = vor.u32 4788187, %v782
      %v784 = vand.u32 2147483647, %v783
      %v786 = vcvt.s32.f32 %v779
      %v787 = vmul.f32 %v786, %v784
      %v788 = vxor.u32 %v787, 2147483648
      %v789 = vsel %vm706, %v788, %v787
      %v790 = vsub.s32 4, %v766
      %v791 = vsel %vm706, %v790, %v766
      %v792 = vsel %vm705, %v688, %v789
      %v793 = vsel %vm705, 0, %v791
      %v794 = vcosq.f32.pop %v792
      %v795 = vsinq.f32.pop %v792
      %vm796 = vweird.f32 %v688
      %v797 = vadd.s32 %v793, 3
      %v798 = vand.u32 %v797, 3
      %vm799 = vcmp.lt.s32.totalorder %v798, 2
      %vm800 = vcmp.eq.s32.totalorder %v798, 0
      %v801 = vxor.u32 %v795, 2147483648
      %v802 = vsel %vm800, %v794, %v801
      %vm803 = vcmp.eq.s32.totalorder %v798, 2
      %v804 = vxor.u32 %v794, 2147483648
      %v805 = vsel %vm803, %v804, %v795
      %v806 = vsel %vm799, %v802, %v805
      %v807 = vsel %vm796, nan, %v806
      %v808 = vand.u32 2147483647, %v689
      %vm809 = vcmp.le.f32.partialorder %v808, 0.7853982
      %vm810 = vcmp.lt.s32.totalorder %v689, 0
      %v811 = vand.u32 %v689, 2139095040
      %v812 = vshrl.u32 %v811, 23
      %v813 = vsub.s32 %v812, 127
      %v814 = vand.u32 2147483647, %v689
      %v815 = vand.u32 %v814, 8388607
      %v816 = vor.u32 %v815, 8388608
      %v817 = vsub.s32 0, %v816
      %v818 = vadd.s32 %v813, 1
      %vm819 = vcmp.gt.s32.totalorder %v818, 0
      %v820 = vsel %vm819, %v818, 0
      %v821 = vshrl.u32 %v820, 5
      %v822 = vand.u32 %v820, 31
      %v823 = vsub.s32 32, %v822
      %v824 = vshrl.u32 683565275, %v823
      %v825 = vshll.u32 683565275, %v822
      %v826 = vshrl.u32 2475754826, %v823
      %v827 = vor.u32 %v825, %v826
      %v828 = vshll.u32 2475754826, %v822
      %v829 = vshrl.u32 2131351028, %v823
      %v830 = vor.u32 %v828, %v829
      %v831 = vshll.u32 2131351028, %v822
      %v832 = vshrl.u32 2102212464, %v823
      %v833 = vor.u32 %v831, %v832
      %v834 = vshll.u32 2102212464, %v822
      %v835 = vshrl.u32 920167782, %v823
      %v836 = vor.u32 %v834, %v835
      %v837 = vshll.u32 920167782, %v822
      %v838 = vshrl.u32 1326507024, %v823
      %v839 = vor.u32 %v837, %v838
      %vm840 = vcmp.lt.s32.totalorder %v821, 1
      %vm841 = vcmp.lt.s32.totalorder %v821, 2
      %vm842 = vcmp.lt.s32.totalorder %v821, 3
      %vm843 = vcmp.lt.s32.totalorder %v821, 4
      %v844 = vsel %vm840, %v824, %v827
      %v845 = vsel %vm843, %v833, 2102212464
      %v846 = vsel %vm842, %v830, %v845
      %v847 = vsel %vm841, %v844, %v846
      %v848 = vsel %vm840, %v827, %v830
      %v849 = vsel %vm843, %v836, 920167782
      %v850 = vsel %vm842, %v833, %v849
      %v851 = vsel %vm841, %v848, %v850
      %v852 = vsel %vm840, %v830, %v833
      %v853 = vsel %vm843, %v839, 1326507024
      %v854 = vsel %vm842, %v836, %v853
      %v855 = vsel %vm841, %v852, %v854
      %v856 = vshll.u32 %v816, 8
      %v857 = vmul.u32.u64.compose %v856, %v855
      %v858 = vextract.low.u32 %v857
      %v859 = vextract.high.u32 %v857
      %v860 = vmul.u32.u64.compose %v856, %v851
      %v861 = vextract.low.u32 %v860
      %v862 = vextract.high.u32 %v860
      %v863 = vmul.u32 %v856, %v847
      %v864 = vadd.s32 %v859, %v861
      %vm865 = vc.u32 %v859, %v861
      %v866 = vadd.s32 %v862, 1
      %v867 = vsel %vm865, %v866, %v862
      %v868 = vadd.s32 %v863, %v867
      %v869 = vadd.s32 %v868, 536870912
      %v870 = vshrl.u32 %v869, 30
      %v871 = vshll.u32 %v870, 30
      %v872 = vsub.s32 %v868, %v871
      %vm873 = vcmp.lt.s32.totalorder %v872, 0
      %v874 = vsub.s32 0, %v872
      %v875 = vsel %vm873, %v874, %v872
      %v876 = vclz %v875
      %v877 = vsub.s32 %v876, 2
      %vm878 = vcmp.gt.s32.totalorder 0, %v877
      %v879 = vsel %vm878, 0, %v877
      %v880 = vsub.s32 32, %v879
      %v881 = vshll.u32 %v872, %v879
      %v882 = vshrl.u32 %v864, %v880
      %v883 = vor.u32 %v881, %v882
      %v884 = vsub.s32 4294967266, %v879
      %v885 = vadd.s32 %v884, 127
      %v886 = vshll.u32 %v885, 23
      %v887 = vor.u32 4788187, %v886
      %v888 = vand.u32 2147483647, %v887
      %v890 = vcvt.s32.f32 %v883
      %v891 = vmul.f32 %v890, %v888
      %v892 = vxor.u32 %v891, 2147483648
      %v893 = vsel %vm810, %v892, %v891
      %v894 = vsub.s32 4, %v870
      %v895 = vsel %vm810, %v894, %v870
      %v896 = vsel %vm809, %v689, %v893
      %v897 = vsel %vm809, 0, %v895
      %v898 = vcosq.f32.pop %v896
      %v899 = vsinq.f32.pop %v896
      %vm900 = vweird.f32 %v689
      %v901 = vadd.s32 %v897, 3
      %v902 = vand.u32 %v901, 3
      %vm903 = vcmp.lt.s32.totalorder %v902, 2
      %vm904 = vcmp.eq.s32.totalorder %v902, 0
      %v905 = vxor.u32 %v899, 2147483648
      %v906 = vsel %vm904, %v898, %v905
      %vm907 = vcmp.eq.s32.totalorder %v902, 2
      %v908 = vxor.u32 %v898, 2147483648
      %v909 = vsel %vm907, %v908, %v899
      %v910 = vsel %vm903, %v906, %v909
      %v911 = vsel %vm900, nan, %v910
      %v912 = vand.u32 2147483647, %v690
      %vm913 = vcmp.le.f32.partialorder %v912, 0.7853982
      %vm914 = vcmp.lt.s32.totalorder %v690, 0
      %v915 = vand.u32 %v690, 2139095040
      %v916 = vshrl.u32 %v915, 23
      %v917 = vsub.s32 %v916, 127
      %v918 = vand.u32 2147483647, %v690
      %v919 = vand.u32 %v918, 8388607
      %v920 = vor.u32 %v919, 8388608
      %v921 = vsub.s32 0, %v920
      %v922 = vadd.s32 %v917, 1
      %vm923 = vcmp.gt.s32.totalorder %v922, 0
      %v924 = vsel %vm923, %v922, 0
      %v925 = vshrl.u32 %v924, 5
      %v926 = vand.u32 %v924, 31
      %v927 = vsub.s32 32, %v926
      %v928 = vshrl.u32 683565275, %v927
      %v929 = vshll.u32 683565275, %v926
      %v930 = vshrl.u32 2475754826, %v927
      %v931 = vor.u32 %v929, %v930
      %v932 = vshll.u32 2475754826, %v926
      %v933 = vshrl.u32 2131351028, %v927
      %v934 = vor.u32 %v932, %v933
      %v935 = vshll.u32 2131351028, %v926
      %v936 = vshrl.u32 2102212464, %v927
      %v937 = vor.u32 %v935, %v936
      %v938 = vshll.u32 2102212464, %v926
      %v939 = vshrl.u32 920167782, %v927
      %v940 = vor.u32 %v938, %v939
      %v941 = vshll.u32 920167782, %v926
      %v942 = vshrl.u32 1326507024, %v927
      %v943 = vor.u32 %v941, %v942
      %vm944 = vcmp.lt.s32.totalorder %v925, 1
      %vm945 = vcmp.lt.s32.totalorder %v925, 2
      %vm946 = vcmp.lt.s32.totalorder %v925, 3
      %vm947 = vcmp.lt.s32.totalorder %v925, 4
      %v948 = vsel %vm944, %v928, %v931
      %v949 = vsel %vm947, %v937, 2102212464
      %v950 = vsel %vm946, %v934, %v949
      %v951 = vsel %vm945, %v948, %v950
      %v952 = vsel %vm944, %v931, %v934
      %v953 = vsel %vm947, %v940, 920167782
      %v954 = vsel %vm946, %v937, %v953
      %v955 = vsel %vm945, %v952, %v954
      %v956 = vsel %vm944, %v934, %v937
      %v957 = vsel %vm947, %v943, 1326507024
      %v958 = vsel %vm946, %v940, %v957
      %v959 = vsel %vm945, %v956, %v958
      %v960 = vshll.u32 %v920, 8
      %v961 = vmul.u32.u64.compose %v960, %v959
      %v962 = vextract.low.u32 %v961
      %v963 = vextract.high.u32 %v961
      %v964 = vmul.u32.u64.compose %v960, %v955
      %v965 = vextract.low.u32 %v964
      %v966 = vextract.high.u32 %v964
      %v967 = vmul.u32 %v960, %v951
      %v968 = vadd.s32 %v963, %v965
      %vm969 = vc.u32 %v963, %v965
      %v970 = vadd.s32 %v966, 1
      %v971 = vsel %vm969, %v970, %v966
      %v972 = vadd.s32 %v967, %v971
      %v973 = vadd.s32 %v972, 536870912
      %v974 = vshrl.u32 %v973, 30
      %v975 = vshll.u32 %v974, 30
      %v976 = vsub.s32 %v972, %v975
      %vm977 = vcmp.lt.s32.totalorder %v976, 0
      %v978 = vsub.s32 0, %v976
      %v979 = vsel %vm977, %v978, %v976
      %v980 = vclz %v979
      %v981 = vsub.s32 %v980, 2
      %vm982 = vcmp.gt.s32.totalorder 0, %v981
      %v983 = vsel %vm982, 0, %v981
      %v984 = vsub.s32 32, %v983
      %v985 = vshll.u32 %v976, %v983
      %v986 = vshrl.u32 %v968, %v984
      %v987 = vor.u32 %v985, %v986
      %v988 = vsub.s32 4294967266, %v983
      %v989 = vadd.s32 %v988, 127
      %v990 = vshll.u32 %v989, 23
      %v991 = vor.u32 4788187, %v990
      %v992 = vand.u32 2147483647, %v991
      %v994 = vcvt.s32.f32 %v987
      %v995 = vmul.f32 %v994, %v992
      %v996 = vxor.u32 %v995, 2147483648
      %v997 = vsel %vm914, %v996, %v995
      %v998 = vsub.s32 4, %v974
      %v999 = vsel %vm914, %v998, %v974
      %v1000 = vsel %vm913, %v690, %v997
      %v1001 = vsel %vm913, 0, %v999
      %v1002 = vcosq.f32.pop %v1000
      %v1003 = vsinq.f32.pop %v1000
      %vm1004 = vweird.f32 %v690
      %v1005 = vadd.s32 %v1001, 3
      %v1006 = vand.u32 %v1005, 3
      %vm1007 = vcmp.lt.s32.totalorder %v1006, 2
      %vm1008 = vcmp.eq.s32.totalorder %v1006, 0
      %v1009 = vxor.u32 %v1003, 2147483648
      %v1010 = vsel %vm1008, %v1002, %v1009
      %vm1011 = vcmp.eq.s32.totalorder %v1006, 2
      %v1012 = vxor.u32 %v1002, 2147483648
      %v1013 = vsel %vm1011, %v1012, %v1003
      %v1014 = vsel %vm1007, %v1010, %v1013
      %v1015 = vsel %vm1004, nan, %v1014
      %v1016 = vand.u32 2147483647, %v691
      %vm1017 = vcmp.le.f32.partialorder %v1016, 0.7853982
      %vm1018 = vcmp.lt.s32.totalorder %v691, 0
      %v1019 = vand.u32 %v691, 2139095040
      %v1020 = vshrl.u32 %v1019, 23
      %v1021 = vsub.s32 %v1020, 127
      %v1022 = vand.u32 2147483647, %v691
      %v1023 = vand.u32 %v1022, 8388607
      %v1024 = vor.u32 %v1023, 8388608
      %v1025 = vsub.s32 0, %v1024
      %v1026 = vadd.s32 %v1021, 1
      %vm1027 = vcmp.gt.s32.totalorder %v1026, 0
      %v1028 = vsel %vm1027, %v1026, 0
      %v1029 = vshrl.u32 %v1028, 5
      %v1030 = vand.u32 %v1028, 31
      %v1031 = vsub.s32 32, %v1030
      %v1032 = vshrl.u32 683565275, %v1031
      %v1033 = vshll.u32 683565275, %v1030
      %v1034 = vshrl.u32 2475754826, %v1031
      %v1035 = vor.u32 %v1033, %v1034
      %v1036 = vshll.u32 2475754826, %v1030
      %v1037 = vshrl.u32 2131351028, %v1031
      %v1038 = vor.u32 %v1036, %v1037
      %v1039 = vshll.u32 2131351028, %v1030
      %v1040 = vshrl.u32 2102212464, %v1031
      %v1041 = vor.u32 %v1039, %v1040
      %v1042 = vshll.u32 2102212464, %v1030
      %v1043 = vshrl.u32 920167782, %v1031
      %v1044 = vor.u32 %v1042, %v1043
      %v1045 = vshll.u32 920167782, %v1030
      %v1046 = vshrl.u32 1326507024, %v1031
      %v1047 = vor.u32 %v1045, %v1046
      %vm1048 = vcmp.lt.s32.totalorder %v1029, 1
      %vm1049 = vcmp.lt.s32.totalorder %v1029, 2
      %vm1050 = vcmp.lt.s32.totalorder %v1029, 3
      %vm1051 = vcmp.lt.s32.totalorder %v1029, 4
      %v1052 = vsel %vm1048, %v1032, %v1035
      %v1053 = vsel %vm1051, %v1041, 2102212464
      %v1054 = vsel %vm1050, %v1038, %v1053
      %v1055 = vsel %vm1049, %v1052, %v1054
      %v1056 = vsel %vm1048, %v1035, %v1038
      %v1057 = vsel %vm1051, %v1044, 920167782
      %v1058 = vsel %vm1050, %v1041, %v1057
      %v1059 = vsel %vm1049, %v1056, %v1058
      %v1060 = vsel %vm1048, %v1038, %v1041
      %v1061 = vsel %vm1051, %v1047, 1326507024
      %v1062 = vsel %vm1050, %v1044, %v1061
      %v1063 = vsel %vm1049, %v1060, %v1062
      %v1064 = vshll.u32 %v1024, 8
      %v1065 = vmul.u32.u64.compose %v1064, %v1063
      %v1066 = vextract.low.u32 %v1065
      %v1067 = vextract.high.u32 %v1065
      %v1068 = vmul.u32.u64.compose %v1064, %v1059
      %v1069 = vextract.low.u32 %v1068
      %v1070 = vextract.high.u32 %v1068
      %v1071 = vmul.u32 %v1064, %v1055
      %v1072 = vadd.s32 %v1067, %v1069
      %vm1073 = vc.u32 %v1067, %v1069
      %v1074 = vadd.s32 %v1070, 1
      %v1075 = vsel %vm1073, %v1074, %v1070
      %v1076 = vadd.s32 %v1071, %v1075
      %v1077 = vadd.s32 %v1076, 536870912
      %v1078 = vshrl.u32 %v1077, 30
      %v1079 = vshll.u32 %v1078, 30
      %v1080 = vsub.s32 %v1076, %v1079
      %vm1081 = vcmp.lt.s32.totalorder %v1080, 0
      %v1082 = vsub.s32 0, %v1080
      %v1083 = vsel %vm1081, %v1082, %v1080
      %v1084 = vclz %v1083
      %v1085 = vsub.s32 %v1084, 2
      %vm1086 = vcmp.gt.s32.totalorder 0, %v1085
      %v1087 = vsel %vm1086, 0, %v1085
      %v1088 = vsub.s32 32, %v1087
      %v1089 = vshll.u32 %v1080, %v1087
      %v1090 = vshrl.u32 %v1072, %v1088
      %v1091 = vor.u32 %v1089, %v1090
      %v1092 = vsub.s32 4294967266, %v1087
      %v1093 = vadd.s32 %v1092, 127
      %v1094 = vshll.u32 %v1093, 23
      %v1095 = vor.u32 4788187, %v1094
      %v1096 = vand.u32 2147483647, %v1095
      %v1098 = vcvt.s32.f32 %v1091
      %v1099 = vmul.f32 %v1098, %v1096
      %v1100 = vxor.u32 %v1099, 2147483648
      %v1101 = vsel %vm1018, %v1100, %v1099
      %v1102 = vsub.s32 4, %v1078
      %v1103 = vsel %vm1018, %v1102, %v1078
      %v1104 = vsel %vm1017, %v691, %v1101
      %v1105 = vsel %vm1017, 0, %v1103
      %v1106 = vcosq.f32.pop %v1104
      %v1107 = vsinq.f32.pop %v1104
      %vm1108 = vweird.f32 %v691
      %v1109 = vadd.s32 %v1105, 3
      %v1110 = vand.u32 %v1109, 3
      %vm1111 = vcmp.lt.s32.totalorder %v1110, 2
      %vm1112 = vcmp.eq.s32.totalorder %v1110, 0
      %v1113 = vxor.u32 %v1107, 2147483648
      %v1114 = vsel %vm1112, %v1106, %v1113
      %vm1115 = vcmp.eq.s32.totalorder %v1110, 2
      %v1116 = vxor.u32 %v1106, 2147483648
      %v1117 = vsel %vm1115, %v1116, %v1107
      %v1118 = vsel %vm1111, %v1114, %v1117
      %v1119 = vsel %vm1108, nan, %v1118
      %v1120 = vand.u32 2147483647, %v692
      %vm1121 = vcmp.le.f32.partialorder %v1120, 0.7853982
      %vm1122 = vcmp.lt.s32.totalorder %v692, 0
      %v1123 = vand.u32 %v692, 2139095040
      %v1124 = vshrl.u32 %v1123, 23
      %v1125 = vsub.s32 %v1124, 127
      %v1126 = vand.u32 2147483647, %v692
      %v1127 = vand.u32 %v1126, 8388607
      %v1128 = vor.u32 %v1127, 8388608
      %v1129 = vsub.s32 0, %v1128
      %v1130 = vadd.s32 %v1125, 1
      %vm1131 = vcmp.gt.s32.totalorder %v1130, 0
      %v1132 = vsel %vm1131, %v1130, 0
      %v1133 = vshrl.u32 %v1132, 5
      %v1134 = vand.u32 %v1132, 31
      %v1135 = vsub.s32 32, %v1134
      %v1136 = vshrl.u32 683565275, %v1135
      %v1137 = vshll.u32 683565275, %v1134
      %v1138 = vshrl.u32 2475754826, %v1135
      %v1139 = vor.u32 %v1137, %v1138
      %v1140 = vshll.u32 2475754826, %v1134
      %v1141 = vshrl.u32 2131351028, %v1135
      %v1142 = vor.u32 %v1140, %v1141
      %v1143 = vshll.u32 2131351028, %v1134
      %v1144 = vshrl.u32 2102212464, %v1135
      %v1145 = vor.u32 %v1143, %v1144
      %v1146 = vshll.u32 2102212464, %v1134
      %v1147 = vshrl.u32 920167782, %v1135
      %v1148 = vor.u32 %v1146, %v1147
      %v1149 = vshll.u32 920167782, %v1134
      %v1150 = vshrl.u32 1326507024, %v1135
      %v1151 = vor.u32 %v1149, %v1150
      %vm1152 = vcmp.lt.s32.totalorder %v1133, 1
      %vm1153 = vcmp.lt.s32.totalorder %v1133, 2
      %vm1154 = vcmp.lt.s32.totalorder %v1133, 3
      %vm1155 = vcmp.lt.s32.totalorder %v1133, 4
      %v1156 = vsel %vm1152, %v1136, %v1139
      %v1157 = vsel %vm1155, %v1145, 2102212464
      %v1158 = vsel %vm1154, %v1142, %v1157
      %v1159 = vsel %vm1153, %v1156, %v1158
      %v1160 = vsel %vm1152, %v1139, %v1142
      %v1161 = vsel %vm1155, %v1148, 920167782
      %v1162 = vsel %vm1154, %v1145, %v1161
      %v1163 = vsel %vm1153, %v1160, %v1162
      %v1164 = vsel %vm1152, %v1142, %v1145
      %v1165 = vsel %vm1155, %v1151, 1326507024
      %v1166 = vsel %vm1154, %v1148, %v1165
      %v1167 = vsel %vm1153, %v1164, %v1166
      %v1168 = vshll.u32 %v1128, 8
      %v1169 = vmul.u32.u64.compose %v1168, %v1167
      %v1170 = vextract.low.u32 %v1169
      %v1171 = vextract.high.u32 %v1169
      %v1172 = vmul.u32.u64.compose %v1168, %v1163
      %v1173 = vextract.low.u32 %v1172
      %v1174 = vextract.high.u32 %v1172
      %v1175 = vmul.u32 %v1168, %v1159
      %v1176 = vadd.s32 %v1171, %v1173
      %vm1177 = vc.u32 %v1171, %v1173
      %v1178 = vadd.s32 %v1174, 1
      %v1179 = vsel %vm1177, %v1178, %v1174
      %v1180 = vadd.s32 %v1175, %v1179
      %v1181 = vadd.s32 %v1180, 536870912
      %v1182 = vshrl.u32 %v1181, 30
      %v1183 = vshll.u32 %v1182, 30
      %v1184 = vsub.s32 %v1180, %v1183
      %vm1185 = vcmp.lt.s32.totalorder %v1184, 0
      %v1186 = vsub.s32 0, %v1184
      %v1187 = vsel %vm1185, %v1186, %v1184
      %v1188 = vclz %v1187
      %v1189 = vsub.s32 %v1188, 2
      %vm1190 = vcmp.gt.s32.totalorder 0, %v1189
      %v1191 = vsel %vm1190, 0, %v1189
      %v1192 = vsub.s32 32, %v1191
      %v1193 = vshll.u32 %v1184, %v1191
      %v1194 = vshrl.u32 %v1176, %v1192
      %v1195 = vor.u32 %v1193, %v1194
      %v1196 = vsub.s32 4294967266, %v1191
      %v1197 = vadd.s32 %v1196, 127
      %v1198 = vshll.u32 %v1197, 23
      %v1199 = vor.u32 4788187, %v1198
      %v1200 = vand.u32 2147483647, %v1199
      %v1202 = vcvt.s32.f32 %v1195
      %v1203 = vmul.f32 %v1202, %v1200
      %v1204 = vxor.u32 %v1203, 2147483648
      %v1205 = vsel %vm1122, %v1204, %v1203
      %v1206 = vsub.s32 4, %v1182
      %v1207 = vsel %vm1122, %v1206, %v1182
      %v1208 = vsel %vm1121, %v692, %v1205
      %v1209 = vsel %vm1121, 0, %v1207
      %v1210 = vcosq.f32.pop %v1208
      %v1211 = vsinq.f32.pop %v1208
      %vm1212 = vweird.f32 %v692
      %v1213 = vadd.s32 %v1209, 3
      %v1214 = vand.u32 %v1213, 3
      %vm1215 = vcmp.lt.s32.totalorder %v1214, 2
      %vm1216 = vcmp.eq.s32.totalorder %v1214, 0
      %v1217 = vxor.u32 %v1211, 2147483648
      %v1218 = vsel %vm1216, %v1210, %v1217
      %vm1219 = vcmp.eq.s32.totalorder %v1214, 2
      %v1220 = vxor.u32 %v1210, 2147483648
      %v1221 = vsel %vm1219, %v1220, %v1211
      %v1222 = vsel %vm1215, %v1218, %v1221
      %v1223 = vsel %vm1212, nan, %v1222
      %v1224 = vand.u32 2147483647, %v693
      %vm1225 = vcmp.le.f32.partialorder %v1224, 0.7853982
      %vm1226 = vcmp.lt.s32.totalorder %v693, 0
      %v1227 = vand.u32 %v693, 2139095040
      %v1228 = vshrl.u32 %v1227, 23
      %v1229 = vsub.s32 %v1228, 127
      %v1230 = vand.u32 2147483647, %v693
      %v1231 = vand.u32 %v1230, 8388607
      %v1232 = vor.u32 %v1231, 8388608
      %v1233 = vsub.s32 0, %v1232
      %v1234 = vadd.s32 %v1229, 1
      %vm1235 = vcmp.gt.s32.totalorder %v1234, 0
      %v1236 = vsel %vm1235, %v1234, 0
      %v1237 = vshrl.u32 %v1236, 5
      %v1238 = vand.u32 %v1236, 31
      %v1239 = vsub.s32 32, %v1238
      %v1240 = vshrl.u32 683565275, %v1239
      %v1241 = vshll.u32 683565275, %v1238
      %v1242 = vshrl.u32 2475754826, %v1239
      %v1243 = vor.u32 %v1241, %v1242
      %v1244 = vshll.u32 2475754826, %v1238
      %v1245 = vshrl.u32 2131351028, %v1239
      %v1246 = vor.u32 %v1244, %v1245
      %v1247 = vshll.u32 2131351028, %v1238
      %v1248 = vshrl.u32 2102212464, %v1239
      %v1249 = vor.u32 %v1247, %v1248
      %v1250 = vshll.u32 2102212464, %v1238
      %v1251 = vshrl.u32 920167782, %v1239
      %v1252 = vor.u32 %v1250, %v1251
      %v1253 = vshll.u32 920167782, %v1238
      %v1254 = vshrl.u32 1326507024, %v1239
      %v1255 = vor.u32 %v1253, %v1254
      %vm1256 = vcmp.lt.s32.totalorder %v1237, 1
      %vm1257 = vcmp.lt.s32.totalorder %v1237, 2
      %vm1258 = vcmp.lt.s32.totalorder %v1237, 3
      %vm1259 = vcmp.lt.s32.totalorder %v1237, 4
      %v1260 = vsel %vm1256, %v1240, %v1243
      %v1261 = vsel %vm1259, %v1249, 2102212464
      %v1262 = vsel %vm1258, %v1246, %v1261
      %v1263 = vsel %vm1257, %v1260, %v1262
      %v1264 = vsel %vm1256, %v1243, %v1246
      %v1265 = vsel %vm1259, %v1252, 920167782
      %v1266 = vsel %vm1258, %v1249, %v1265
      %v1267 = vsel %vm1257, %v1264, %v1266
      %v1268 = vsel %vm1256, %v1246, %v1249
      %v1269 = vsel %vm1259, %v1255, 1326507024
      %v1270 = vsel %vm1258, %v1252, %v1269
      %v1271 = vsel %vm1257, %v1268, %v1270
      %v1272 = vshll.u32 %v1232, 8
      %v1273 = vmul.u32.u64.compose %v1272, %v1271
      %v1274 = vextract.low.u32 %v1273
      %v1275 = vextract.high.u32 %v1273
      %v1276 = vmul.u32.u64.compose %v1272, %v1267
      %v1277 = vextract.low.u32 %v1276
      %v1278 = vextract.high.u32 %v1276
      %v1279 = vmul.u32 %v1272, %v1263
      %v1280 = vadd.s32 %v1275, %v1277
      %vm1281 = vc.u32 %v1275, %v1277
      %v1282 = vadd.s32 %v1278, 1
      %v1283 = vsel %vm1281, %v1282, %v1278
      %v1284 = vadd.s32 %v1279, %v1283
      %v1285 = vadd.s32 %v1284, 536870912
      %v1286 = vshrl.u32 %v1285, 30
      %v1287 = vshll.u32 %v1286, 30
      %v1288 = vsub.s32 %v1284, %v1287
      %vm1289 = vcmp.lt.s32.totalorder %v1288, 0
      %v1290 = vsub.s32 0, %v1288
      %v1291 = vsel %vm1289, %v1290, %v1288
      %v1292 = vclz %v1291
      %v1293 = vsub.s32 %v1292, 2
      %vm1294 = vcmp.gt.s32.totalorder 0, %v1293
      %v1295 = vsel %vm1294, 0, %v1293
      %v1296 = vsub.s32 32, %v1295
      %v1297 = vshll.u32 %v1288, %v1295
      %v1298 = vshrl.u32 %v1280, %v1296
      %v1299 = vor.u32 %v1297, %v1298
      %v1300 = vsub.s32 4294967266, %v1295
      %v1301 = vadd.s32 %v1300, 127
      %v1302 = vshll.u32 %v1301, 23
      %v1303 = vor.u32 4788187, %v1302
      %v1304 = vand.u32 2147483647, %v1303
      %v1306 = vcvt.s32.f32 %v1299
      %v1307 = vmul.f32 %v1306, %v1304
      %v1308 = vxor.u32 %v1307, 2147483648
      %v1309 = vsel %vm1226, %v1308, %v1307
      %v1310 = vsub.s32 4, %v1286
      %v1311 = vsel %vm1226, %v1310, %v1286
      %v1312 = vsel %vm1225, %v693, %v1309
      %v1313 = vsel %vm1225, 0, %v1311
      %v1314 = vcosq.f32.pop %v1312
      %v1315 = vsinq.f32.pop %v1312
      %vm1316 = vweird.f32 %v693
      %v1317 = vadd.s32 %v1313, 3
      %v1318 = vand.u32 %v1317, 3
      %vm1319 = vcmp.lt.s32.totalorder %v1318, 2
      %vm1320 = vcmp.eq.s32.totalorder %v1318, 0
      %v1321 = vxor.u32 %v1315, 2147483648
      %v1322 = vsel %vm1320, %v1314, %v1321
      %vm1323 = vcmp.eq.s32.totalorder %v1318, 2
      %v1324 = vxor.u32 %v1314, 2147483648
      %v1325 = vsel %vm1323, %v1324, %v1315
      %v1326 = vsel %vm1319, %v1322, %v1325
      %v1327 = vsel %vm1316, nan, %v1326
      %v1328 = vand.u32 2147483647, %v694
      %vm1329 = vcmp.le.f32.partialorder %v1328, 0.7853982
      %vm1330 = vcmp.lt.s32.totalorder %v694, 0
      %v1331 = vand.u32 %v694, 2139095040
      %v1332 = vshrl.u32 %v1331, 23
      %v1333 = vsub.s32 %v1332, 127
      %v1334 = vand.u32 2147483647, %v694
      %v1335 = vand.u32 %v1334, 8388607
      %v1336 = vor.u32 %v1335, 8388608
      %v1337 = vsub.s32 0, %v1336
      %v1338 = vadd.s32 %v1333, 1
      %vm1339 = vcmp.gt.s32.totalorder %v1338, 0
      %v1340 = vsel %vm1339, %v1338, 0
      %v1341 = vshrl.u32 %v1340, 5
      %v1342 = vand.u32 %v1340, 31
      %v1343 = vsub.s32 32, %v1342
      %v1344 = vshrl.u32 683565275, %v1343
      %v1345 = vshll.u32 683565275, %v1342
      %v1346 = vshrl.u32 2475754826, %v1343
      %v1347 = vor.u32 %v1345, %v1346
      %v1348 = vshll.u32 2475754826, %v1342
      %v1349 = vshrl.u32 2131351028, %v1343
      %v1350 = vor.u32 %v1348, %v1349
      %v1351 = vshll.u32 2131351028, %v1342
      %v1352 = vshrl.u32 2102212464, %v1343
      %v1353 = vor.u32 %v1351, %v1352
      %v1354 = vshll.u32 2102212464, %v1342
      %v1355 = vshrl.u32 920167782, %v1343
      %v1356 = vor.u32 %v1354, %v1355
      %v1357 = vshll.u32 920167782, %v1342
      %v1358 = vshrl.u32 1326507024, %v1343
      %v1359 = vor.u32 %v1357, %v1358
      %vm1360 = vcmp.lt.s32.totalorder %v1341, 1
      %vm1361 = vcmp.lt.s32.totalorder %v1341, 2
      %vm1362 = vcmp.lt.s32.totalorder %v1341, 3
      %vm1363 = vcmp.lt.s32.totalorder %v1341, 4
      %v1364 = vsel %vm1360, %v1344, %v1347
      %v1365 = vsel %vm1363, %v1353, 2102212464
      %v1366 = vsel %vm1362, %v1350, %v1365
      %v1367 = vsel %vm1361, %v1364, %v1366
      %v1368 = vsel %vm1360, %v1347, %v1350
      %v1369 = vsel %vm1363, %v1356, 920167782
      %v1370 = vsel %vm1362, %v1353, %v1369
      %v1371 = vsel %vm1361, %v1368, %v1370
      %v1372 = vsel %vm1360, %v1350, %v1353
      %v1373 = vsel %vm1363, %v1359, 1326507024
      %v1374 = vsel %vm1362, %v1356, %v1373
      %v1375 = vsel %vm1361, %v1372, %v1374
      %v1376 = vshll.u32 %v1336, 8
      %v1377 = vmul.u32.u64.compose %v1376, %v1375
      %v1378 = vextract.low.u32 %v1377
      %v1379 = vextract.high.u32 %v1377
      %v1380 = vmul.u32.u64.compose %v1376, %v1371
      %v1381 = vextract.low.u32 %v1380
      %v1382 = vextract.high.u32 %v1380
      %v1383 = vmul.u32 %v1376, %v1367
      %v1384 = vadd.s32 %v1379, %v1381
      %vm1385 = vc.u32 %v1379, %v1381
      %v1386 = vadd.s32 %v1382, 1
      %v1387 = vsel %vm1385, %v1386, %v1382
      %v1388 = vadd.s32 %v1383, %v1387
      %v1389 = vadd.s32 %v1388, 536870912
      %v1390 = vshrl.u32 %v1389, 30
      %v1391 = vshll.u32 %v1390, 30
      %v1392 = vsub.s32 %v1388, %v1391
      %vm1393 = vcmp.lt.s32.totalorder %v1392, 0
      %v1394 = vsub.s32 0, %v1392
      %v1395 = vsel %vm1393, %v1394, %v1392
      %v1396 = vclz %v1395
      %v1397 = vsub.s32 %v1396, 2
      %vm1398 = vcmp.gt.s32.totalorder 0, %v1397
      %v1399 = vsel %vm1398, 0, %v1397
      %v1400 = vsub.s32 32, %v1399
      %v1401 = vshll.u32 %v1392, %v1399
      %v1402 = vshrl.u32 %v1384, %v1400
      %v1403 = vor.u32 %v1401, %v1402
      %v1404 = vsub.s32 4294967266, %v1399
      %v1405 = vadd.s32 %v1404, 127
      %v1406 = vshll.u32 %v1405, 23
      %v1407 = vor.u32 4788187, %v1406
      %v1408 = vand.u32 2147483647, %v1407
      %v1410 = vcvt.s32.f32 %v1403
      %v1411 = vmul.f32 %v1410, %v1408
      %v1412 = vxor.u32 %v1411, 2147483648
      %v1413 = vsel %vm1330, %v1412, %v1411
      %v1414 = vsub.s32 4, %v1390
      %v1415 = vsel %vm1330, %v1414, %v1390
      %v1416 = vsel %vm1329, %v694, %v1413
      %v1417 = vsel %vm1329, 0, %v1415
      %v1418 = vcosq.f32.pop %v1416
      %v1419 = vsinq.f32.pop %v1416
      %vm1420 = vweird.f32 %v694
      %v1421 = vadd.s32 %v1417, 3
      %v1422 = vand.u32 %v1421, 3
      %vm1423 = vcmp.lt.s32.totalorder %v1422, 2
      %vm1424 = vcmp.eq.s32.totalorder %v1422, 0
      %v1425 = vxor.u32 %v1419, 2147483648
      %v1426 = vsel %vm1424, %v1418, %v1425
      %vm1427 = vcmp.eq.s32.totalorder %v1422, 2
      %v1428 = vxor.u32 %v1418, 2147483648
      %v1429 = vsel %vm1427, %v1428, %v1419
      %v1430 = vsel %vm1423, %v1426, %v1429
      %v1431 = vsel %vm1420, nan, %v1430
      %v1432 = vand.u32 2147483647, %v695
      %vm1433 = vcmp.le.f32.partialorder %v1432, 0.7853982
      %vm1434 = vcmp.lt.s32.totalorder %v695, 0
      %v1435 = vand.u32 %v695, 2139095040
      %v1436 = vshrl.u32 %v1435, 23
      %v1437 = vsub.s32 %v1436, 127
      %v1438 = vand.u32 2147483647, %v695
      %v1439 = vand.u32 %v1438, 8388607
      %v1440 = vor.u32 %v1439, 8388608
      %v1441 = vsub.s32 0, %v1440
      %v1442 = vadd.s32 %v1437, 1
      %vm1443 = vcmp.gt.s32.totalorder %v1442, 0
      %v1444 = vsel %vm1443, %v1442, 0
      %v1445 = vshrl.u32 %v1444, 5
      %v1446 = vand.u32 %v1444, 31
      %v1447 = vsub.s32 32, %v1446
      %v1448 = vshrl.u32 683565275, %v1447
      %v1449 = vshll.u32 683565275, %v1446
      %v1450 = vshrl.u32 2475754826, %v1447
      %v1451 = vor.u32 %v1449, %v1450
      %v1452 = vshll.u32 2475754826, %v1446
      %v1453 = vshrl.u32 2131351028, %v1447
      %v1454 = vor.u32 %v1452, %v1453
      %v1455 = vshll.u32 2131351028, %v1446
      %v1456 = vshrl.u32 2102212464, %v1447
      %v1457 = vor.u32 %v1455, %v1456
      %v1458 = vshll.u32 2102212464, %v1446
      %v1459 = vshrl.u32 920167782, %v1447
      %v1460 = vor.u32 %v1458, %v1459
      %v1461 = vshll.u32 920167782, %v1446
      %v1462 = vshrl.u32 1326507024, %v1447
      %v1463 = vor.u32 %v1461, %v1462
      %vm1464 = vcmp.lt.s32.totalorder %v1445, 1
      %vm1465 = vcmp.lt.s32.totalorder %v1445, 2
      %vm1466 = vcmp.lt.s32.totalorder %v1445, 3
      %vm1467 = vcmp.lt.s32.totalorder %v1445, 4
      %v1468 = vsel %vm1464, %v1448, %v1451
      %v1469 = vsel %vm1467, %v1457, 2102212464
      %v1470 = vsel %vm1466, %v1454, %v1469
      %v1471 = vsel %vm1465, %v1468, %v1470
      %v1472 = vsel %vm1464, %v1451, %v1454
      %v1473 = vsel %vm1467, %v1460, 920167782
      %v1474 = vsel %vm1466, %v1457, %v1473
      %v1475 = vsel %vm1465, %v1472, %v1474
      %v1476 = vsel %vm1464, %v1454, %v1457
      %v1477 = vsel %vm1467, %v1463, 1326507024
      %v1478 = vsel %vm1466, %v1460, %v1477
      %v1479 = vsel %vm1465, %v1476, %v1478
      %v1480 = vshll.u32 %v1440, 8
      %v1481 = vmul.u32.u64.compose %v1480, %v1479
      %v1482 = vextract.low.u32 %v1481
      %v1483 = vextract.high.u32 %v1481
      %v1484 = vmul.u32.u64.compose %v1480, %v1475
      %v1485 = vextract.low.u32 %v1484
      %v1486 = vextract.high.u32 %v1484
      %v1487 = vmul.u32 %v1480, %v1471
      %v1488 = vadd.s32 %v1483, %v1485
      %vm1489 = vc.u32 %v1483, %v1485
      %v1490 = vadd.s32 %v1486, 1
      %v1491 = vsel %vm1489, %v1490, %v1486
      %v1492 = vadd.s32 %v1487, %v1491
      %v1493 = vadd.s32 %v1492, 536870912
      %v1494 = vshrl.u32 %v1493, 30
      %v1495 = vshll.u32 %v1494, 30
      %v1496 = vsub.s32 %v1492, %v1495
      %vm1497 = vcmp.lt.s32.totalorder %v1496, 0
      %v1498 = vsub.s32 0, %v1496
      %v1499 = vsel %vm1497, %v1498, %v1496
      %v1500 = vclz %v1499
      %v1501 = vsub.s32 %v1500, 2
      %vm1502 = vcmp.gt.s32.totalorder 0, %v1501
      %v1503 = vsel %vm1502, 0, %v1501
      %v1504 = vsub.s32 32, %v1503
      %v1505 = vshll.u32 %v1496, %v1503
      %v1506 = vshrl.u32 %v1488, %v1504
      %v1507 = vor.u32 %v1505, %v1506
      %v1508 = vsub.s32 4294967266, %v1503
      %v1509 = vadd.s32 %v1508, 127
      %v1510 = vshll.u32 %v1509, 23
      %v1511 = vor.u32 4788187, %v1510
      %v1512 = vand.u32 2147483647, %v1511
      %v1514 = vcvt.s32.f32 %v1507
      %v1515 = vmul.f32 %v1514, %v1512
      %v1516 = vxor.u32 %v1515, 2147483648
      %v1517 = vsel %vm1434, %v1516, %v1515
      %v1518 = vsub.s32 4, %v1494
      %v1519 = vsel %vm1434, %v1518, %v1494
      %v1520 = vsel %vm1433, %v695, %v1517
      %v1521 = vsel %vm1433, 0, %v1519
      %v1522 = vcosq.f32.pop %v1520
      %v1523 = vsinq.f32.pop %v1520
      %vm1524 = vweird.f32 %v695
      %v1525 = vadd.s32 %v1521, 3
      %v1526 = vand.u32 %v1525, 3
      %vm1527 = vcmp.lt.s32.totalorder %v1526, 2
      %vm1528 = vcmp.eq.s32.totalorder %v1526, 0
      %v1529 = vxor.u32 %v1523, 2147483648
      %v1530 = vsel %vm1528, %v1522, %v1529
      %vm1531 = vcmp.eq.s32.totalorder %v1526, 2
      %v1532 = vxor.u32 %v1522, 2147483648
      %v1533 = vsel %vm1531, %v1532, %v1523
      %v1534 = vsel %vm1527, %v1530, %v1533
      %v1535 = vsel %vm1524, nan, %v1534
      %v1536 = vand.u32 2147483647, %v696
      %vm1537 = vcmp.le.f32.partialorder %v1536, 0.7853982
      %vm1538 = vcmp.lt.s32.totalorder %v696, 0
      %v1539 = vand.u32 %v696, 2139095040
      %v1540 = vshrl.u32 %v1539, 23
      %v1541 = vsub.s32 %v1540, 127
      %v1542 = vand.u32 2147483647, %v696
      %v1543 = vand.u32 %v1542, 8388607
      %v1544 = vor.u32 %v1543, 8388608
      %v1545 = vsub.s32 0, %v1544
      %v1546 = vadd.s32 %v1541, 1
      %vm1547 = vcmp.gt.s32.totalorder %v1546, 0
      %v1548 = vsel %vm1547, %v1546, 0
      %v1549 = vshrl.u32 %v1548, 5
      %v1550 = vand.u32 %v1548, 31
      %v1551 = vsub.s32 32, %v1550
      %v1552 = vshrl.u32 683565275, %v1551
      %v1553 = vshll.u32 683565275, %v1550
      %v1554 = vshrl.u32 2475754826, %v1551
      %v1555 = vor.u32 %v1553, %v1554
      %v1556 = vshll.u32 2475754826, %v1550
      %v1557 = vshrl.u32 2131351028, %v1551
      %v1558 = vor.u32 %v1556, %v1557
      %v1559 = vshll.u32 2131351028, %v1550
      %v1560 = vshrl.u32 2102212464, %v1551
      %v1561 = vor.u32 %v1559, %v1560
      %v1562 = vshll.u32 2102212464, %v1550
      %v1563 = vshrl.u32 920167782, %v1551
      %v1564 = vor.u32 %v1562, %v1563
      %v1565 = vshll.u32 920167782, %v1550
      %v1566 = vshrl.u32 1326507024, %v1551
      %v1567 = vor.u32 %v1565, %v1566
      %vm1568 = vcmp.lt.s32.totalorder %v1549, 1
      %vm1569 = vcmp.lt.s32.totalorder %v1549, 2
      %vm1570 = vcmp.lt.s32.totalorder %v1549, 3
      %vm1571 = vcmp.lt.s32.totalorder %v1549, 4
      %v1572 = vsel %vm1568, %v1552, %v1555
      %v1573 = vsel %vm1571, %v1561, 2102212464
      %v1574 = vsel %vm1570, %v1558, %v1573
      %v1575 = vsel %vm1569, %v1572, %v1574
      %v1576 = vsel %vm1568, %v1555, %v1558
      %v1577 = vsel %vm1571, %v1564, 920167782
      %v1578 = vsel %vm1570, %v1561, %v1577
      %v1579 = vsel %vm1569, %v1576, %v1578
      %v1580 = vsel %vm1568, %v1558, %v1561
      %v1581 = vsel %vm1571, %v1567, 1326507024
      %v1582 = vsel %vm1570, %v1564, %v1581
      %v1583 = vsel %vm1569, %v1580, %v1582
      %v1584 = vshll.u32 %v1544, 8
      %v1585 = vmul.u32.u64.compose %v1584, %v1583
      %v1586 = vextract.low.u32 %v1585
      %v1587 = vextract.high.u32 %v1585
      %v1588 = vmul.u32.u64.compose %v1584, %v1579
      %v1589 = vextract.low.u32 %v1588
      %v1590 = vextract.high.u32 %v1588
      %v1591 = vmul.u32 %v1584, %v1575
      %v1592 = vadd.s32 %v1587, %v1589
      %vm1593 = vc.u32 %v1587, %v1589
      %v1594 = vadd.s32 %v1590, 1
      %v1595 = vsel %vm1593, %v1594, %v1590
      %v1596 = vadd.s32 %v1591, %v1595
      %v1597 = vadd.s32 %v1596, 536870912
      %v1598 = vshrl.u32 %v1597, 30
      %v1599 = vshll.u32 %v1598, 30
      %v1600 = vsub.s32 %v1596, %v1599
      %vm1601 = vcmp.lt.s32.totalorder %v1600, 0
      %v1602 = vsub.s32 0, %v1600
      %v1603 = vsel %vm1601, %v1602, %v1600
      %v1604 = vclz %v1603
      %v1605 = vsub.s32 %v1604, 2
      %vm1606 = vcmp.gt.s32.totalorder 0, %v1605
      %v1607 = vsel %vm1606, 0, %v1605
      %v1608 = vsub.s32 32, %v1607
      %v1609 = vshll.u32 %v1600, %v1607
      %v1610 = vshrl.u32 %v1592, %v1608
      %v1611 = vor.u32 %v1609, %v1610
      %v1612 = vsub.s32 4294967266, %v1607
      %v1613 = vadd.s32 %v1612, 127
      %v1614 = vshll.u32 %v1613, 23
      %v1615 = vor.u32 4788187, %v1614
      %v1616 = vand.u32 2147483647, %v1615
      %v1618 = vcvt.s32.f32 %v1611
      %v1619 = vmul.f32 %v1618, %v1616
      %v1620 = vxor.u32 %v1619, 2147483648
      %v1621 = vsel %vm1538, %v1620, %v1619
      %v1622 = vsub.s32 4, %v1598
      %v1623 = vsel %vm1538, %v1622, %v1598
      %v1624 = vsel %vm1537, %v696, %v1621
      %v1625 = vsel %vm1537, 0, %v1623
      %v1626 = vcosq.f32.pop %v1624
      %v1627 = vsinq.f32.pop %v1624
      %vm1628 = vweird.f32 %v696
      %v1629 = vadd.s32 %v1625, 3
      %v1630 = vand.u32 %v1629, 3
      %vm1631 = vcmp.lt.s32.totalorder %v1630, 2
      %vm1632 = vcmp.eq.s32.totalorder %v1630, 0
      %v1633 = vxor.u32 %v1627, 2147483648
      %v1634 = vsel %vm1632, %v1626, %v1633
      %vm1635 = vcmp.eq.s32.totalorder %v1630, 2
      %v1636 = vxor.u32 %v1626, 2147483648
      %v1637 = vsel %vm1635, %v1636, %v1627
      %v1638 = vsel %vm1631, %v1634, %v1637
      %v1639 = vsel %vm1628, nan, %v1638
      %v1640 = vand.u32 2147483647, %v697
      %vm1641 = vcmp.le.f32.partialorder %v1640, 0.7853982
      %vm1642 = vcmp.lt.s32.totalorder %v697, 0
      %v1643 = vand.u32 %v697, 2139095040
      %v1644 = vshrl.u32 %v1643, 23
      %v1645 = vsub.s32 %v1644, 127
      %v1646 = vand.u32 2147483647, %v697
      %v1647 = vand.u32 %v1646, 8388607
      %v1648 = vor.u32 %v1647, 8388608
      %v1649 = vsub.s32 0, %v1648
      %v1650 = vadd.s32 %v1645, 1
      %vm1651 = vcmp.gt.s32.totalorder %v1650, 0
      %v1652 = vsel %vm1651, %v1650, 0
      %v1653 = vshrl.u32 %v1652, 5
      %v1654 = vand.u32 %v1652, 31
      %v1655 = vsub.s32 32, %v1654
      %v1656 = vshrl.u32 683565275, %v1655
      %v1657 = vshll.u32 683565275, %v1654
      %v1658 = vshrl.u32 2475754826, %v1655
      %v1659 = vor.u32 %v1657, %v1658
      %v1660 = vshll.u32 2475754826, %v1654
      %v1661 = vshrl.u32 2131351028, %v1655
      %v1662 = vor.u32 %v1660, %v1661
      %v1663 = vshll.u32 2131351028, %v1654
      %v1664 = vshrl.u32 2102212464, %v1655
      %v1665 = vor.u32 %v1663, %v1664
      %v1666 = vshll.u32 2102212464, %v1654
      %v1667 = vshrl.u32 920167782, %v1655
      %v1668 = vor.u32 %v1666, %v1667
      %v1669 = vshll.u32 920167782, %v1654
      %v1670 = vshrl.u32 1326507024, %v1655
      %v1671 = vor.u32 %v1669, %v1670
      %vm1672 = vcmp.lt.s32.totalorder %v1653, 1
      %vm1673 = vcmp.lt.s32.totalorder %v1653, 2
      %vm1674 = vcmp.lt.s32.totalorder %v1653, 3
      %vm1675 = vcmp.lt.s32.totalorder %v1653, 4
      %v1676 = vsel %vm1672, %v1656, %v1659
      %v1677 = vsel %vm1675, %v1665, 2102212464
      %v1678 = vsel %vm1674, %v1662, %v1677
      %v1679 = vsel %vm1673, %v1676, %v1678
      %v1680 = vsel %vm1672, %v1659, %v1662
      %v1681 = vsel %vm1675, %v1668, 920167782
      %v1682 = vsel %vm1674, %v1665, %v1681
      %v1683 = vsel %vm1673, %v1680, %v1682
      %v1684 = vsel %vm1672, %v1662, %v1665
      %v1685 = vsel %vm1675, %v1671, 1326507024
      %v1686 = vsel %vm1674, %v1668, %v1685
      %v1687 = vsel %vm1673, %v1684, %v1686
      %v1688 = vshll.u32 %v1648, 8
      %v1689 = vmul.u32.u64.compose %v1688, %v1687
      %v1690 = vextract.low.u32 %v1689
      %v1691 = vextract.high.u32 %v1689
      %v1692 = vmul.u32.u64.compose %v1688, %v1683
      %v1693 = vextract.low.u32 %v1692
      %v1694 = vextract.high.u32 %v1692
      %v1695 = vmul.u32 %v1688, %v1679
      %v1696 = vadd.s32 %v1691, %v1693
      %vm1697 = vc.u32 %v1691, %v1693
      %v1698 = vadd.s32 %v1694, 1
      %v1699 = vsel %vm1697, %v1698, %v1694
      %v1700 = vadd.s32 %v1695, %v1699
      %v1701 = vadd.s32 %v1700, 536870912
      %v1702 = vshrl.u32 %v1701, 30
      %v1703 = vshll.u32 %v1702, 30
      %v1704 = vsub.s32 %v1700, %v1703
      %vm1705 = vcmp.lt.s32.totalorder %v1704, 0
      %v1706 = vsub.s32 0, %v1704
      %v1707 = vsel %vm1705, %v1706, %v1704
      %v1708 = vclz %v1707
      %v1709 = vsub.s32 %v1708, 2
      %vm1710 = vcmp.gt.s32.totalorder 0, %v1709
      %v1711 = vsel %vm1710, 0, %v1709
      %v1712 = vsub.s32 32, %v1711
      %v1713 = vshll.u32 %v1704, %v1711
      %v1714 = vshrl.u32 %v1696, %v1712
      %v1715 = vor.u32 %v1713, %v1714
      %v1716 = vsub.s32 4294967266, %v1711
      %v1717 = vadd.s32 %v1716, 127
      %v1718 = vshll.u32 %v1717, 23
      %v1719 = vor.u32 4788187, %v1718
      %v1720 = vand.u32 2147483647, %v1719
      %v1722 = vcvt.s32.f32 %v1715
      %v1723 = vmul.f32 %v1722, %v1720
      %v1724 = vxor.u32 %v1723, 2147483648
      %v1725 = vsel %vm1642, %v1724, %v1723
      %v1726 = vsub.s32 4, %v1702
      %v1727 = vsel %vm1642, %v1726, %v1702
      %v1728 = vsel %vm1641, %v697, %v1725
      %v1729 = vsel %vm1641, 0, %v1727
      %v1730 = vcosq.f32.pop %v1728
      %v1731 = vsinq.f32.pop %v1728
      %vm1732 = vweird.f32 %v697
      %v1733 = vadd.s32 %v1729, 3
      %v1734 = vand.u32 %v1733, 3
      %vm1735 = vcmp.lt.s32.totalorder %v1734, 2
      %vm1736 = vcmp.eq.s32.totalorder %v1734, 0
      %v1737 = vxor.u32 %v1731, 2147483648
      %v1738 = vsel %vm1736, %v1730, %v1737
      %vm1739 = vcmp.eq.s32.totalorder %v1734, 2
      %v1740 = vxor.u32 %v1730, 2147483648
      %v1741 = vsel %vm1739, %v1740, %v1731
      %v1742 = vsel %vm1735, %v1738, %v1741
      %v1743 = vsel %vm1732, nan, %v1742
      %v1744 = vand.u32 2147483647, %v698
      %vm1745 = vcmp.le.f32.partialorder %v1744, 0.7853982
      %vm1746 = vcmp.lt.s32.totalorder %v698, 0
      %v1747 = vand.u32 %v698, 2139095040
      %v1748 = vshrl.u32 %v1747, 23
      %v1749 = vsub.s32 %v1748, 127
      %v1750 = vand.u32 2147483647, %v698
      %v1751 = vand.u32 %v1750, 8388607
      %v1752 = vor.u32 %v1751, 8388608
      %v1753 = vsub.s32 0, %v1752
      %v1754 = vadd.s32 %v1749, 1
      %vm1755 = vcmp.gt.s32.totalorder %v1754, 0
      %v1756 = vsel %vm1755, %v1754, 0
      %v1757 = vshrl.u32 %v1756, 5
      %v1758 = vand.u32 %v1756, 31
      %v1759 = vsub.s32 32, %v1758
      %v1760 = vshrl.u32 683565275, %v1759
      %v1761 = vshll.u32 683565275, %v1758
      %v1762 = vshrl.u32 2475754826, %v1759
      %v1763 = vor.u32 %v1761, %v1762
      %v1764 = vshll.u32 2475754826, %v1758
      %v1765 = vshrl.u32 2131351028, %v1759
      %v1766 = vor.u32 %v1764, %v1765
      %v1767 = vshll.u32 2131351028, %v1758
      %v1768 = vshrl.u32 2102212464, %v1759
      %v1769 = vor.u32 %v1767, %v1768
      %v1770 = vshll.u32 2102212464, %v1758
      %v1771 = vshrl.u32 920167782, %v1759
      %v1772 = vor.u32 %v1770, %v1771
      %v1773 = vshll.u32 920167782, %v1758
      %v1774 = vshrl.u32 1326507024, %v1759
      %v1775 = vor.u32 %v1773, %v1774
      %vm1776 = vcmp.lt.s32.totalorder %v1757, 1
      %vm1777 = vcmp.lt.s32.totalorder %v1757, 2
      %vm1778 = vcmp.lt.s32.totalorder %v1757, 3
      %vm1779 = vcmp.lt.s32.totalorder %v1757, 4
      %v1780 = vsel %vm1776, %v1760, %v1763
      %v1781 = vsel %vm1779, %v1769, 2102212464
      %v1782 = vsel %vm1778, %v1766, %v1781
      %v1783 = vsel %vm1777, %v1780, %v1782
      %v1784 = vsel %vm1776, %v1763, %v1766
      %v1785 = vsel %vm1779, %v1772, 920167782
      %v1786 = vsel %vm1778, %v1769, %v1785
      %v1787 = vsel %vm1777, %v1784, %v1786
      %v1788 = vsel %vm1776, %v1766, %v1769
      %v1789 = vsel %vm1779, %v1775, 1326507024
      %v1790 = vsel %vm1778, %v1772, %v1789
      %v1791 = vsel %vm1777, %v1788, %v1790
      %v1792 = vshll.u32 %v1752, 8
      %v1793 = vmul.u32.u64.compose %v1792, %v1791
      %v1794 = vextract.low.u32 %v1793
      %v1795 = vextract.high.u32 %v1793
      %v1796 = vmul.u32.u64.compose %v1792, %v1787
      %v1797 = vextract.low.u32 %v1796
      %v1798 = vextract.high.u32 %v1796
      %v1799 = vmul.u32 %v1792, %v1783
      %v1800 = vadd.s32 %v1795, %v1797
      %vm1801 = vc.u32 %v1795, %v1797
      %v1802 = vadd.s32 %v1798, 1
      %v1803 = vsel %vm1801, %v1802, %v1798
      %v1804 = vadd.s32 %v1799, %v1803
      %v1805 = vadd.s32 %v1804, 536870912
      %v1806 = vshrl.u32 %v1805, 30
      %v1807 = vshll.u32 %v1806, 30
      %v1808 = vsub.s32 %v1804, %v1807
      %vm1809 = vcmp.lt.s32.totalorder %v1808, 0
      %v1810 = vsub.s32 0, %v1808
      %v1811 = vsel %vm1809, %v1810, %v1808
      %v1812 = vclz %v1811
      %v1813 = vsub.s32 %v1812, 2
      %vm1814 = vcmp.gt.s32.totalorder 0, %v1813
      %v1815 = vsel %vm1814, 0, %v1813
      %v1816 = vsub.s32 32, %v1815
      %v1817 = vshll.u32 %v1808, %v1815
      %v1818 = vshrl.u32 %v1800, %v1816
      %v1819 = vor.u32 %v1817, %v1818
      %v1820 = vsub.s32 4294967266, %v1815
      %v1821 = vadd.s32 %v1820, 127
      %v1822 = vshll.u32 %v1821, 23
      %v1823 = vor.u32 4788187, %v1822
      %v1824 = vand.u32 2147483647, %v1823
      %v1826 = vcvt.s32.f32 %v1819
      %v1827 = vmul.f32 %v1826, %v1824
      %v1828 = vxor.u32 %v1827, 2147483648
      %v1829 = vsel %vm1746, %v1828, %v1827
      %v1830 = vsub.s32 4, %v1806
      %v1831 = vsel %vm1746, %v1830, %v1806
      %v1832 = vsel %vm1745, %v698, %v1829
      %v1833 = vsel %vm1745, 0, %v1831
      %v1834 = vcosq.f32.pop %v1832
      %v1835 = vsinq.f32.pop %v1832
      %vm1836 = vweird.f32 %v698
      %v1837 = vadd.s32 %v1833, 3
      %v1838 = vand.u32 %v1837, 3
      %vm1839 = vcmp.lt.s32.totalorder %v1838, 2
      %vm1840 = vcmp.eq.s32.totalorder %v1838, 0
      %v1841 = vxor.u32 %v1835, 2147483648
      %v1842 = vsel %vm1840, %v1834, %v1841
      %vm1843 = vcmp.eq.s32.totalorder %v1838, 2
      %v1844 = vxor.u32 %v1834, 2147483648
      %v1845 = vsel %vm1843, %v1844, %v1835
      %v1846 = vsel %vm1839, %v1842, %v1845
      %v1847 = vsel %vm1836, nan, %v1846
      %v1848 = vand.u32 2147483647, %v699
      %vm1849 = vcmp.le.f32.partialorder %v1848, 0.7853982
      %vm1850 = vcmp.lt.s32.totalorder %v699, 0
      %v1851 = vand.u32 %v699, 2139095040
      %v1852 = vshrl.u32 %v1851, 23
      %v1853 = vsub.s32 %v1852, 127
      %v1854 = vand.u32 2147483647, %v699
      %v1855 = vand.u32 %v1854, 8388607
      %v1856 = vor.u32 %v1855, 8388608
      %v1857 = vsub.s32 0, %v1856
      %v1858 = vadd.s32 %v1853, 1
      %vm1859 = vcmp.gt.s32.totalorder %v1858, 0
      %v1860 = vsel %vm1859, %v1858, 0
      %v1861 = vshrl.u32 %v1860, 5
      %v1862 = vand.u32 %v1860, 31
      %v1863 = vsub.s32 32, %v1862
      %v1864 = vshrl.u32 683565275, %v1863
      %v1865 = vshll.u32 683565275, %v1862
      %v1866 = vshrl.u32 2475754826, %v1863
      %v1867 = vor.u32 %v1865, %v1866
      %v1868 = vshll.u32 2475754826, %v1862
      %v1869 = vshrl.u32 2131351028, %v1863
      %v1870 = vor.u32 %v1868, %v1869
      %v1871 = vshll.u32 2131351028, %v1862
      %v1872 = vshrl.u32 2102212464, %v1863
      %v1873 = vor.u32 %v1871, %v1872
      %v1874 = vshll.u32 2102212464, %v1862
      %v1875 = vshrl.u32 920167782, %v1863
      %v1876 = vor.u32 %v1874, %v1875
      %v1877 = vshll.u32 920167782, %v1862
      %v1878 = vshrl.u32 1326507024, %v1863
      %v1879 = vor.u32 %v1877, %v1878
      %vm1880 = vcmp.lt.s32.totalorder %v1861, 1
      %vm1881 = vcmp.lt.s32.totalorder %v1861, 2
      %vm1882 = vcmp.lt.s32.totalorder %v1861, 3
      %vm1883 = vcmp.lt.s32.totalorder %v1861, 4
      %v1884 = vsel %vm1880, %v1864, %v1867
      %v1885 = vsel %vm1883, %v1873, 2102212464
      %v1886 = vsel %vm1882, %v1870, %v1885
      %v1887 = vsel %vm1881, %v1884, %v1886
      %v1888 = vsel %vm1880, %v1867, %v1870
      %v1889 = vsel %vm1883, %v1876, 920167782
      %v1890 = vsel %vm1882, %v1873, %v1889
      %v1891 = vsel %vm1881, %v1888, %v1890
      %v1892 = vsel %vm1880, %v1870, %v1873
      %v1893 = vsel %vm1883, %v1879, 1326507024
      %v1894 = vsel %vm1882, %v1876, %v1893
      %v1895 = vsel %vm1881, %v1892, %v1894
      %v1896 = vshll.u32 %v1856, 8
      %v1897 = vmul.u32.u64.compose %v1896, %v1895
      %v1898 = vextract.low.u32 %v1897
      %v1899 = vextract.high.u32 %v1897
      %v1900 = vmul.u32.u64.compose %v1896, %v1891
      %v1901 = vextract.low.u32 %v1900
      %v1902 = vextract.high.u32 %v1900
      %v1903 = vmul.u32 %v1896, %v1887
      %v1904 = vadd.s32 %v1899, %v1901
      %vm1905 = vc.u32 %v1899, %v1901
      %v1906 = vadd.s32 %v1902, 1
      %v1907 = vsel %vm1905, %v1906, %v1902
      %v1908 = vadd.s32 %v1903, %v1907
      %v1909 = vadd.s32 %v1908, 536870912
      %v1910 = vshrl.u32 %v1909, 30
      %v1911 = vshll.u32 %v1910, 30
      %v1912 = vsub.s32 %v1908, %v1911
      %vm1913 = vcmp.lt.s32.totalorder %v1912, 0
      %v1914 = vsub.s32 0, %v1912
      %v1915 = vsel %vm1913, %v1914, %v1912
      %v1916 = vclz %v1915
      %v1917 = vsub.s32 %v1916, 2
      %vm1918 = vcmp.gt.s32.totalorder 0, %v1917
      %v1919 = vsel %vm1918, 0, %v1917
      %v1920 = vsub.s32 32, %v1919
      %v1921 = vshll.u32 %v1912, %v1919
      %v1922 = vshrl.u32 %v1904, %v1920
      %v1923 = vor.u32 %v1921, %v1922
      %v1924 = vsub.s32 4294967266, %v1919
      %v1925 = vadd.s32 %v1924, 127
      %v1926 = vshll.u32 %v1925, 23
      %v1927 = vor.u32 4788187, %v1926
      %v1928 = vand.u32 2147483647, %v1927
      %v1930 = vcvt.s32.f32 %v1923
      %v1931 = vmul.f32 %v1930, %v1928
      %v1932 = vxor.u32 %v1931, 2147483648
      %v1933 = vsel %vm1850, %v1932, %v1931
      %v1934 = vsub.s32 4, %v1910
      %v1935 = vsel %vm1850, %v1934, %v1910
      %v1936 = vsel %vm1849, %v699, %v1933
      %v1937 = vsel %vm1849, 0, %v1935
      %v1938 = vcosq.f32.pop %v1936
      %v1939 = vsinq.f32.pop %v1936
      %vm1940 = vweird.f32 %v699
      %v1941 = vadd.s32 %v1937, 3
      %v1942 = vand.u32 %v1941, 3
      %vm1943 = vcmp.lt.s32.totalorder %v1942, 2
      %vm1944 = vcmp.eq.s32.totalorder %v1942, 0
      %v1945 = vxor.u32 %v1939, 2147483648
      %v1946 = vsel %vm1944, %v1938, %v1945
      %vm1947 = vcmp.eq.s32.totalorder %v1942, 2
      %v1948 = vxor.u32 %v1938, 2147483648
      %v1949 = vsel %vm1947, %v1948, %v1939
      %v1950 = vsel %vm1943, %v1946, %v1949
      %v1951 = vsel %vm1940, nan, %v1950
      %v1952 = vand.u32 2147483647, %v700
      %vm1953 = vcmp.le.f32.partialorder %v1952, 0.7853982
      %vm1954 = vcmp.lt.s32.totalorder %v700, 0
      %v1955 = vand.u32 %v700, 2139095040
      %v1956 = vshrl.u32 %v1955, 23
      %v1957 = vsub.s32 %v1956, 127
      %v1958 = vand.u32 2147483647, %v700
      %v1959 = vand.u32 %v1958, 8388607
      %v1960 = vor.u32 %v1959, 8388608
      %v1961 = vsub.s32 0, %v1960
      %v1962 = vadd.s32 %v1957, 1
      %vm1963 = vcmp.gt.s32.totalorder %v1962, 0
      %v1964 = vsel %vm1963, %v1962, 0
      %v1965 = vshrl.u32 %v1964, 5
      %v1966 = vand.u32 %v1964, 31
      %v1967 = vsub.s32 32, %v1966
      %v1968 = vshrl.u32 683565275, %v1967
      %v1969 = vshll.u32 683565275, %v1966
      %v1970 = vshrl.u32 2475754826, %v1967
      %v1971 = vor.u32 %v1969, %v1970
      %v1972 = vshll.u32 2475754826, %v1966
      %v1973 = vshrl.u32 2131351028, %v1967
      %v1974 = vor.u32 %v1972, %v1973
      %v1975 = vshll.u32 2131351028, %v1966
      %v1976 = vshrl.u32 2102212464, %v1967
      %v1977 = vor.u32 %v1975, %v1976
      %v1978 = vshll.u32 2102212464, %v1966
      %v1979 = vshrl.u32 920167782, %v1967
      %v1980 = vor.u32 %v1978, %v1979
      %v1981 = vshll.u32 920167782, %v1966
      %v1982 = vshrl.u32 1326507024, %v1967
      %v1983 = vor.u32 %v1981, %v1982
      %vm1984 = vcmp.lt.s32.totalorder %v1965, 1
      %vm1985 = vcmp.lt.s32.totalorder %v1965, 2
      %vm1986 = vcmp.lt.s32.totalorder %v1965, 3
      %vm1987 = vcmp.lt.s32.totalorder %v1965, 4
      %v1988 = vsel %vm1984, %v1968, %v1971
      %v1989 = vsel %vm1987, %v1977, 2102212464
      %v1990 = vsel %vm1986, %v1974, %v1989
      %v1991 = vsel %vm1985, %v1988, %v1990
      %v1992 = vsel %vm1984, %v1971, %v1974
      %v1993 = vsel %vm1987, %v1980, 920167782
      %v1994 = vsel %vm1986, %v1977, %v1993
      %v1995 = vsel %vm1985, %v1992, %v1994
      %v1996 = vsel %vm1984, %v1974, %v1977
      %v1997 = vsel %vm1987, %v1983, 1326507024
      %v1998 = vsel %vm1986, %v1980, %v1997
      %v1999 = vsel %vm1985, %v1996, %v1998
      %v2000 = vshll.u32 %v1960, 8
      %v2001 = vmul.u32.u64.compose %v2000, %v1999
      %v2002 = vextract.low.u32 %v2001
      %v2003 = vextract.high.u32 %v2001
      %v2004 = vmul.u32.u64.compose %v2000, %v1995
      %v2005 = vextract.low.u32 %v2004
      %v2006 = vextract.high.u32 %v2004
      %v2007 = vmul.u32 %v2000, %v1991
      %v2008 = vadd.s32 %v2003, %v2005
      %vm2009 = vc.u32 %v2003, %v2005
      %v2010 = vadd.s32 %v2006, 1
      %v2011 = vsel %vm2009, %v2010, %v2006
      %v2012 = vadd.s32 %v2007, %v2011
      %v2013 = vadd.s32 %v2012, 536870912
      %v2014 = vshrl.u32 %v2013, 30
      %v2015 = vshll.u32 %v2014, 30
      %v2016 = vsub.s32 %v2012, %v2015
      %vm2017 = vcmp.lt.s32.totalorder %v2016, 0
      %v2018 = vsub.s32 0, %v2016
      %v2019 = vsel %vm2017, %v2018, %v2016
      %v2020 = vclz %v2019
      %v2021 = vsub.s32 %v2020, 2
      %vm2022 = vcmp.gt.s32.totalorder 0, %v2021
      %v2023 = vsel %vm2022, 0, %v2021
      %v2024 = vsub.s32 32, %v2023
      %v2025 = vshll.u32 %v2016, %v2023
      %v2026 = vshrl.u32 %v2008, %v2024
      %v2027 = vor.u32 %v2025, %v2026
      %v2028 = vsub.s32 4294967266, %v2023
      %v2029 = vadd.s32 %v2028, 127
      %v2030 = vshll.u32 %v2029, 23
      %v2031 = vor.u32 4788187, %v2030
      %v2032 = vand.u32 2147483647, %v2031
      %v2034 = vcvt.s32.f32 %v2027
      %v2035 = vmul.f32 %v2034, %v2032
      %v2036 = vxor.u32 %v2035, 2147483648
      %v2037 = vsel %vm1954, %v2036, %v2035
      %v2038 = vsub.s32 4, %v2014
      %v2039 = vsel %vm1954, %v2038, %v2014
      %v2040 = vsel %vm1953, %v700, %v2037
      %v2041 = vsel %vm1953, 0, %v2039
      %v2042 = vcosq.f32.pop %v2040
      %v2043 = vsinq.f32.pop %v2040
      %vm2044 = vweird.f32 %v700
      %v2045 = vadd.s32 %v2041, 3
      %v2046 = vand.u32 %v2045, 3
      %vm2047 = vcmp.lt.s32.totalorder %v2046, 2
      %vm2048 = vcmp.eq.s32.totalorder %v2046, 0
      %v2049 = vxor.u32 %v2043, 2147483648
      %v2050 = vsel %vm2048, %v2042, %v2049
      %vm2051 = vcmp.eq.s32.totalorder %v2046, 2
      %v2052 = vxor.u32 %v2042, 2147483648
      %v2053 = vsel %vm2051, %v2052, %v2043
      %v2054 = vsel %vm2047, %v2050, %v2053
      %v2055 = vsel %vm2044, nan, %v2054
      %v2056 = vand.u32 2147483647, %v701
      %vm2057 = vcmp.le.f32.partialorder %v2056, 0.7853982
      %vm2058 = vcmp.lt.s32.totalorder %v701, 0
      %v2059 = vand.u32 %v701, 2139095040
      %v2060 = vshrl.u32 %v2059, 23
      %v2061 = vsub.s32 %v2060, 127
      %v2062 = vand.u32 2147483647, %v701
      %v2063 = vand.u32 %v2062, 8388607
      %v2064 = vor.u32 %v2063, 8388608
      %v2065 = vsub.s32 0, %v2064
      %v2066 = vadd.s32 %v2061, 1
      %vm2067 = vcmp.gt.s32.totalorder %v2066, 0
      %v2068 = vsel %vm2067, %v2066, 0
      %v2069 = vshrl.u32 %v2068, 5
      %v2070 = vand.u32 %v2068, 31
      %v2071 = vsub.s32 32, %v2070
      %v2072 = vshrl.u32 683565275, %v2071
      %v2073 = vshll.u32 683565275, %v2070
      %v2074 = vshrl.u32 2475754826, %v2071
      %v2075 = vor.u32 %v2073, %v2074
      %v2076 = vshll.u32 2475754826, %v2070
      %v2077 = vshrl.u32 2131351028, %v2071
      %v2078 = vor.u32 %v2076, %v2077
      %v2079 = vshll.u32 2131351028, %v2070
      %v2080 = vshrl.u32 2102212464, %v2071
      %v2081 = vor.u32 %v2079, %v2080
      %v2082 = vshll.u32 2102212464, %v2070
      %v2083 = vshrl.u32 920167782, %v2071
      %v2084 = vor.u32 %v2082, %v2083
      %v2085 = vshll.u32 920167782, %v2070
      %v2086 = vshrl.u32 1326507024, %v2071
      %v2087 = vor.u32 %v2085, %v2086
      %vm2088 = vcmp.lt.s32.totalorder %v2069, 1
      %vm2089 = vcmp.lt.s32.totalorder %v2069, 2
      %vm2090 = vcmp.lt.s32.totalorder %v2069, 3
      %vm2091 = vcmp.lt.s32.totalorder %v2069, 4
      %v2092 = vsel %vm2088, %v2072, %v2075
      %v2093 = vsel %vm2091, %v2081, 2102212464
      %v2094 = vsel %vm2090, %v2078, %v2093
      %v2095 = vsel %vm2089, %v2092, %v2094
      %v2096 = vsel %vm2088, %v2075, %v2078
      %v2097 = vsel %vm2091, %v2084, 920167782
      %v2098 = vsel %vm2090, %v2081, %v2097
      %v2099 = vsel %vm2089, %v2096, %v2098
      %v2100 = vsel %vm2088, %v2078, %v2081
      %v2101 = vsel %vm2091, %v2087, 1326507024
      %v2102 = vsel %vm2090, %v2084, %v2101
      %v2103 = vsel %vm2089, %v2100, %v2102
      %v2104 = vshll.u32 %v2064, 8
      %v2105 = vmul.u32.u64.compose %v2104, %v2103
      %v2106 = vextract.low.u32 %v2105
      %v2107 = vextract.high.u32 %v2105
      %v2108 = vmul.u32.u64.compose %v2104, %v2099
      %v2109 = vextract.low.u32 %v2108
      %v2110 = vextract.high.u32 %v2108
      %v2111 = vmul.u32 %v2104, %v2095
      %v2112 = vadd.s32 %v2107, %v2109
      %vm2113 = vc.u32 %v2107, %v2109
      %v2114 = vadd.s32 %v2110, 1
      %v2115 = vsel %vm2113, %v2114, %v2110
      %v2116 = vadd.s32 %v2111, %v2115
      %v2117 = vadd.s32 %v2116, 536870912
      %v2118 = vshrl.u32 %v2117, 30
      %v2119 = vshll.u32 %v2118, 30
      %v2120 = vsub.s32 %v2116, %v2119
      %vm2121 = vcmp.lt.s32.totalorder %v2120, 0
      %v2122 = vsub.s32 0, %v2120
      %v2123 = vsel %vm2121, %v2122, %v2120
      %v2124 = vclz %v2123
      %v2125 = vsub.s32 %v2124, 2
      %vm2126 = vcmp.gt.s32.totalorder 0, %v2125
      %v2127 = vsel %vm2126, 0, %v2125
      %v2128 = vsub.s32 32, %v2127
      %v2129 = vshll.u32 %v2120, %v2127
      %v2130 = vshrl.u32 %v2112, %v2128
      %v2131 = vor.u32 %v2129, %v2130
      %v2132 = vsub.s32 4294967266, %v2127
      %v2133 = vadd.s32 %v2132, 127
      %v2134 = vshll.u32 %v2133, 23
      %v2135 = vor.u32 4788187, %v2134
      %v2136 = vand.u32 2147483647, %v2135
      %v2138 = vcvt.s32.f32 %v2131
      %v2139 = vmul.f32 %v2138, %v2136
      %v2140 = vxor.u32 %v2139, 2147483648
      %v2141 = vsel %vm2058, %v2140, %v2139
      %v2142 = vsub.s32 4, %v2118
      %v2143 = vsel %vm2058, %v2142, %v2118
      %v2144 = vsel %vm2057, %v701, %v2141
      %v2145 = vsel %vm2057, 0, %v2143
      %v2146 = vcosq.f32.pop %v2144
      %v2147 = vsinq.f32.pop %v2144
      %vm2148 = vweird.f32 %v701
      %v2149 = vadd.s32 %v2145, 3
      %v2150 = vand.u32 %v2149, 3
      %vm2151 = vcmp.lt.s32.totalorder %v2150, 2
      %vm2152 = vcmp.eq.s32.totalorder %v2150, 0
      %v2153 = vxor.u32 %v2147, 2147483648
      %v2154 = vsel %vm2152, %v2146, %v2153
      %vm2155 = vcmp.eq.s32.totalorder %v2150, 2
      %v2156 = vxor.u32 %v2146, 2147483648
      %v2157 = vsel %vm2155, %v2156, %v2147
      %v2158 = vsel %vm2151, %v2154, %v2157
      %v2159 = vsel %vm2148, nan, %v2158
      %v2160 = vand.u32 2147483647, %v702
      %vm2161 = vcmp.le.f32.partialorder %v2160, 0.7853982
      %vm2162 = vcmp.lt.s32.totalorder %v702, 0
      %v2163 = vand.u32 %v702, 2139095040
      %v2164 = vshrl.u32 %v2163, 23
      %v2165 = vsub.s32 %v2164, 127
      %v2166 = vand.u32 2147483647, %v702
      %v2167 = vand.u32 %v2166, 8388607
      %v2168 = vor.u32 %v2167, 8388608
      %v2169 = vsub.s32 0, %v2168
      %v2170 = vadd.s32 %v2165, 1
      %vm2171 = vcmp.gt.s32.totalorder %v2170, 0
      %v2172 = vsel %vm2171, %v2170, 0
      %v2173 = vshrl.u32 %v2172, 5
      %v2174 = vand.u32 %v2172, 31
      %v2175 = vsub.s32 32, %v2174
      %v2176 = vshrl.u32 683565275, %v2175
      %v2177 = vshll.u32 683565275, %v2174
      %v2178 = vshrl.u32 2475754826, %v2175
      %v2179 = vor.u32 %v2177, %v2178
      %v2180 = vshll.u32 2475754826, %v2174
      %v2181 = vshrl.u32 2131351028, %v2175
      %v2182 = vor.u32 %v2180, %v2181
      %v2183 = vshll.u32 2131351028, %v2174
      %v2184 = vshrl.u32 2102212464, %v2175
      %v2185 = vor.u32 %v2183, %v2184
      %v2186 = vshll.u32 2102212464, %v2174
      %v2187 = vshrl.u32 920167782, %v2175
      %v2188 = vor.u32 %v2186, %v2187
      %v2189 = vshll.u32 920167782, %v2174
      %v2190 = vshrl.u32 1326507024, %v2175
      %v2191 = vor.u32 %v2189, %v2190
      %vm2192 = vcmp.lt.s32.totalorder %v2173, 1
      %vm2193 = vcmp.lt.s32.totalorder %v2173, 2
      %vm2194 = vcmp.lt.s32.totalorder %v2173, 3
      %vm2195 = vcmp.lt.s32.totalorder %v2173, 4
      %v2196 = vsel %vm2192, %v2176, %v2179
      %v2197 = vsel %vm2195, %v2185, 2102212464
      %v2198 = vsel %vm2194, %v2182, %v2197
      %v2199 = vsel %vm2193, %v2196, %v2198
      %v2200 = vsel %vm2192, %v2179, %v2182
      %v2201 = vsel %vm2195, %v2188, 920167782
      %v2202 = vsel %vm2194, %v2185, %v2201
      %v2203 = vsel %vm2193, %v2200, %v2202
      %v2204 = vsel %vm2192, %v2182, %v2185
      %v2205 = vsel %vm2195, %v2191, 1326507024
      %v2206 = vsel %vm2194, %v2188, %v2205
      %v2207 = vsel %vm2193, %v2204, %v2206
      %v2208 = vshll.u32 %v2168, 8
      %v2209 = vmul.u32.u64.compose %v2208, %v2207
      %v2210 = vextract.low.u32 %v2209
      %v2211 = vextract.high.u32 %v2209
      %v2212 = vmul.u32.u64.compose %v2208, %v2203
      %v2213 = vextract.low.u32 %v2212
      %v2214 = vextract.high.u32 %v2212
      %v2215 = vmul.u32 %v2208, %v2199
      %v2216 = vadd.s32 %v2211, %v2213
      %vm2217 = vc.u32 %v2211, %v2213
      %v2218 = vadd.s32 %v2214, 1
      %v2219 = vsel %vm2217, %v2218, %v2214
      %v2220 = vadd.s32 %v2215, %v2219
      %v2221 = vadd.s32 %v2220, 536870912
      %v2222 = vshrl.u32 %v2221, 30
      %v2223 = vshll.u32 %v2222, 30
      %v2224 = vsub.s32 %v2220, %v2223
      %vm2225 = vcmp.lt.s32.totalorder %v2224, 0
      %v2226 = vsub.s32 0, %v2224
      %v2227 = vsel %vm2225, %v2226, %v2224
      %v2228 = vclz %v2227
      %v2229 = vsub.s32 %v2228, 2
      %vm2230 = vcmp.gt.s32.totalorder 0, %v2229
      %v2231 = vsel %vm2230, 0, %v2229
      %v2232 = vsub.s32 32, %v2231
      %v2233 = vshll.u32 %v2224, %v2231
      %v2234 = vshrl.u32 %v2216, %v2232
      %v2235 = vor.u32 %v2233, %v2234
      %v2236 = vsub.s32 4294967266, %v2231
      %v2237 = vadd.s32 %v2236, 127
      %v2238 = vshll.u32 %v2237, 23
      %v2239 = vor.u32 4788187, %v2238
      %v2240 = vand.u32 2147483647, %v2239
      %v2242 = vcvt.s32.f32 %v2235
      %v2243 = vmul.f32 %v2242, %v2240
      %v2244 = vxor.u32 %v2243, 2147483648
      %v2245 = vsel %vm2162, %v2244, %v2243
      %v2246 = vsub.s32 4, %v2222
      %v2247 = vsel %vm2162, %v2246, %v2222
      %v2248 = vsel %vm2161, %v702, %v2245
      %v2249 = vsel %vm2161, 0, %v2247
      %v2250 = vcosq.f32.pop %v2248
      %v2251 = vsinq.f32.pop %v2248
      %vm2252 = vweird.f32 %v702
      %v2253 = vadd.s32 %v2249, 3
      %v2254 = vand.u32 %v2253, 3
      %vm2255 = vcmp.lt.s32.totalorder %v2254, 2
      %vm2256 = vcmp.eq.s32.totalorder %v2254, 0
      %v2257 = vxor.u32 %v2251, 2147483648
      %v2258 = vsel %vm2256, %v2250, %v2257
      %vm2259 = vcmp.eq.s32.totalorder %v2254, 2
      %v2260 = vxor.u32 %v2250, 2147483648
      %v2261 = vsel %vm2259, %v2260, %v2251
      %v2262 = vsel %vm2255, %v2258, %v2261
      %v2263 = vsel %vm2252, nan, %v2262
      %v2264 = vand.u32 2147483647, %v703
      %vm2265 = vcmp.le.f32.partialorder %v2264, 0.7853982
      %vm2266 = vcmp.lt.s32.totalorder %v703, 0
      %v2267 = vand.u32 %v703, 2139095040
      %v2268 = vshrl.u32 %v2267, 23
      %v2269 = vsub.s32 %v2268, 127
      %v2270 = vand.u32 2147483647, %v703
      %v2271 = vand.u32 %v2270, 8388607
      %v2272 = vor.u32 %v2271, 8388608
      %v2273 = vsub.s32 0, %v2272
      %v2274 = vadd.s32 %v2269, 1
      %vm2275 = vcmp.gt.s32.totalorder %v2274, 0
      %v2276 = vsel %vm2275, %v2274, 0
      %v2277 = vshrl.u32 %v2276, 5
      %v2278 = vand.u32 %v2276, 31
      %v2279 = vsub.s32 32, %v2278
      %v2280 = vshrl.u32 683565275, %v2279
      %v2281 = vshll.u32 683565275, %v2278
      %v2282 = vshrl.u32 2475754826, %v2279
      %v2283 = vor.u32 %v2281, %v2282
      %v2284 = vshll.u32 2475754826, %v2278
      %v2285 = vshrl.u32 2131351028, %v2279
      %v2286 = vor.u32 %v2284, %v2285
      %v2287 = vshll.u32 2131351028, %v2278
      %v2288 = vshrl.u32 2102212464, %v2279
      %v2289 = vor.u32 %v2287, %v2288
      %v2290 = vshll.u32 2102212464, %v2278
      %v2291 = vshrl.u32 920167782, %v2279
      %v2292 = vor.u32 %v2290, %v2291
      %v2293 = vshll.u32 920167782, %v2278
      %v2294 = vshrl.u32 1326507024, %v2279
      %v2295 = vor.u32 %v2293, %v2294
      %vm2296 = vcmp.lt.s32.totalorder %v2277, 1
      %vm2297 = vcmp.lt.s32.totalorder %v2277, 2
      %vm2298 = vcmp.lt.s32.totalorder %v2277, 3
      %vm2299 = vcmp.lt.s32.totalorder %v2277, 4
      %v2300 = vsel %vm2296, %v2280, %v2283
      %v2301 = vsel %vm2299, %v2289, 2102212464
      %v2302 = vsel %vm2298, %v2286, %v2301
      %v2303 = vsel %vm2297, %v2300, %v2302
      %v2304 = vsel %vm2296, %v2283, %v2286
      %v2305 = vsel %vm2299, %v2292, 920167782
      %v2306 = vsel %vm2298, %v2289, %v2305
      %v2307 = vsel %vm2297, %v2304, %v2306
      %v2308 = vsel %vm2296, %v2286, %v2289
      %v2309 = vsel %vm2299, %v2295, 1326507024
      %v2310 = vsel %vm2298, %v2292, %v2309
      %v2311 = vsel %vm2297, %v2308, %v2310
      %v2312 = vshll.u32 %v2272, 8
      %v2313 = vmul.u32.u64.compose %v2312, %v2311
      %v2314 = vextract.low.u32 %v2313
      %v2315 = vextract.high.u32 %v2313
      %v2316 = vmul.u32.u64.compose %v2312, %v2307
      %v2317 = vextract.low.u32 %v2316
      %v2318 = vextract.high.u32 %v2316
      %v2319 = vmul.u32 %v2312, %v2303
      %v2320 = vadd.s32 %v2315, %v2317
      %vm2321 = vc.u32 %v2315, %v2317
      %v2322 = vadd.s32 %v2318, 1
      %v2323 = vsel %vm2321, %v2322, %v2318
      %v2324 = vadd.s32 %v2319, %v2323
      %v2325 = vadd.s32 %v2324, 536870912
      %v2326 = vshrl.u32 %v2325, 30
      %v2327 = vshll.u32 %v2326, 30
      %v2328 = vsub.s32 %v2324, %v2327
      %vm2329 = vcmp.lt.s32.totalorder %v2328, 0
      %v2330 = vsub.s32 0, %v2328
      %v2331 = vsel %vm2329, %v2330, %v2328
      %v2332 = vclz %v2331
      %v2333 = vsub.s32 %v2332, 2
      %vm2334 = vcmp.gt.s32.totalorder 0, %v2333
      %v2335 = vsel %vm2334, 0, %v2333
      %v2336 = vsub.s32 32, %v2335
      %v2337 = vshll.u32 %v2328, %v2335
      %v2338 = vshrl.u32 %v2320, %v2336
      %v2339 = vor.u32 %v2337, %v2338
      %v2340 = vsub.s32 4294967266, %v2335
      %v2341 = vadd.s32 %v2340, 127
      %v2342 = vshll.u32 %v2341, 23
      %v2343 = vor.u32 4788187, %v2342
      %v2344 = vand.u32 2147483647, %v2343
      %v2346 = vcvt.s32.f32 %v2339
      %v2347 = vmul.f32 %v2346, %v2344
      %v2348 = vxor.u32 %v2347, 2147483648
      %v2349 = vsel %vm2266, %v2348, %v2347
      %v2350 = vsub.s32 4, %v2326
      %v2351 = vsel %vm2266, %v2350, %v2326
      %v2352 = vsel %vm2265, %v703, %v2349
      %v2353 = vsel %vm2265, 0, %v2351
      %v2354 = vcosq.f32.pop %v2352
      %v2355 = vsinq.f32.pop %v2352
      %vm2356 = vweird.f32 %v703
      %v2357 = vadd.s32 %v2353, 3
      %v2358 = vand.u32 %v2357, 3
      %vm2359 = vcmp.lt.s32.totalorder %v2358, 2
      %vm2360 = vcmp.eq.s32.totalorder %v2358, 0
      %v2361 = vxor.u32 %v2355, 2147483648
      %v2362 = vsel %vm2360, %v2354, %v2361
      %vm2363 = vcmp.eq.s32.totalorder %v2358, 2
      %v2364 = vxor.u32 %v2354, 2147483648
      %v2365 = vsel %vm2363, %v2364, %v2355
      %v2366 = vsel %vm2359, %v2362, %v2365
      %v2367 = vsel %vm2356, nan, %v2366
      %v2368 = vld [vmem:[%s2] sm:$0xf]
      %v2369 = vld [vmem:[%s2 + $0x4] sm:$0xf]
      %v2370 = vld [vmem:[%s2 + $0x8] sm:$0xf]
      %v2371 = vld [vmem:[%s2 + $0xc] sm:$0xf]
      %v2372 = vld [vmem:[%s3] sm:$0xff]
      %v2373 = vld [vmem:[%s3 + $0x8] sm:$0xff]
      %v2374 = vld [vmem:[%s3 + $0x10] sm:$0xff]
      %v2375 = vld [vmem:[%s3 + $0x18] sm:$0xff]
      %v2376 = vpack.c.bf16 %v1223, %v807
      %v2377 = vpack.c.bf16 %v1327, %v911
      %v2378 = vpack.c.bf16 %v1431, %v1015
      %v2379 = vpack.c.bf16 %v1535, %v1119
      %v2380 = vpack.c.bf16 %v2055, %v1639
      %v2381 = vpack.c.bf16 %v2159, %v1743
      %v2382 = vpack.c.bf16 %v2263, %v1847
      %v2383 = vpack.c.bf16 %v2367, %v1951
      %2385 = vset.pattern.permute.xlu0 0
      %2386 = vperm.xlu0 %2385, %v2372
      %v2387 = vpop.permute.xlu0 %2386
      %2390 = vset.pattern.permute.xlu0 0
      %2391 = vperm.xlu0 %2390, %v2373
      %v2392 = vpop.permute.xlu0 %2391
      %2395 = vset.pattern.permute.xlu0 0
      %2396 = vperm.xlu0 %2395, %v2374
      %v2397 = vpop.permute.xlu0 %2396
      %2400 = vset.pattern.permute.xlu0 0
      %2401 = vperm.xlu0 %2400, %v2375
      %v2402 = vpop.permute.xlu0 %2401
      %v2408 = vunpack.c.l.b16 %v2368
      %v2409 = vunpack.c.l.b16 %v2369
      %v2410 = vunpack.c.l.b16 %v2370
      %v2411 = vunpack.c.l.b16 %v2371
      %v2412 = vpack.c.b16 %v2409, %v2408
      %v2413 = vpack.c.b16 %v2411, %v2410
      %vm2414 = vcmask 261120
      %v2416 = vsel %vm2414, %v2412, 0
      %v2419 = vsel %vm2414, %v2413, 0
      %2421 = vmatprep.subr.bf16.mxu0 0
      %2422 = vmatpush1.bf16.msra.mxu0 0
      %2423 = vmatprep.subr.bf16.mxu0 0
      %2424 = vmatpush1.bf16.msra.mxu0 0
      %2425 = vmatprep.subr.bf16.mxu0 0
      %2426 = vmatpush1.bf16.msra.mxu0 0
      %2427 = vmatprep.subr.bf16.mxu0 0
      %2428 = vmatpush1.bf16.msra.mxu0 0
      %2429 = vmatprep.subr.bf16.mxu0 0
      %2430 = vmatpush1.bf16.msra.mxu0 0
      %2431 = vmatprep.subr.bf16.mxu0 0
      %2432 = vmatpush1.bf16.msra.mxu0 0
      %2433 = vmatprep.subr.bf16.mxu0 %v2381
      %2434 = vmatpush1.bf16.msra.mxu0 %v2380
      %2435 = vmatprep.subr.bf16.mxu0 %v2377
      %2436 = vmatpush1.bf16.msra.mxu0 %v2376
      %2437 = vmatprep.subr.bf16.mxu0 0
      %2438 = vmatpush2.bf16.msra.mxu0 0
      %2439 = vmatprep.subr.bf16.mxu0 0
      %2440 = vmatpush2.bf16.msra.mxu0 0
      %2441 = vmatprep.subr.bf16.mxu0 0
      %2442 = vmatpush2.bf16.msra.mxu0 0
      %2443 = vmatprep.subr.bf16.mxu0 0
      %2444 = vmatpush2.bf16.msra.mxu0 0
      %2445 = vmatprep.subr.bf16.mxu0 0
      %2446 = vmatpush2.bf16.msra.mxu0 0
      %2447 = vmatprep.subr.bf16.mxu0 0
      %2448 = vmatpush2.bf16.msra.mxu0 0
      %2449 = vmatprep.subr.bf16.mxu0 0
      %2450 = vmatpush2.bf16.msra.mxu0 0
      %2451 = vmatprep.subr.bf16.mxu0 0
      %2452 = vmatpush2.bf16.msra.mxu0 0
      %2453 = vmatprep.mubr.bf16.mxu0 0
      %2454 = vmatmul.mubr.bf16.gmra.mxu0 %v2416
      %v2455 = vpop.f32.mrf.mxu0
      %v2456 = vadd.f32 %v2387, %v2455
      %v2457 = vpop.f32.mrf.mxu0
      %v2458 = vadd.f32 %v2387, %v2457
      %v2459 = vpop.f32.mrf.mxu0
      %v2460 = vadd.f32 %v2392, %v2459
      %v2461 = vpop.f32.mrf.mxu0
      %v2462 = vadd.f32 %v2392, %v2461
      %2463 = vmatprep.mubr.bf16.mxu0 0
      %2464 = vmatmul.mubr.bf16.gmra.mxu0 %v2419
      %v2465 = vpop.f32.mrf.mxu0
      %v2466 = vadd.f32 %v2397, %v2465
      %v2467 = vpop.f32.mrf.mxu0
      %v2468 = vadd.f32 %v2397, %v2467
      %v2469 = vpop.f32.mrf.mxu0
      %v2470 = vadd.f32 %v2402, %v2469
      %v2471 = vpop.f32.mrf.mxu0
      %v2472 = vadd.f32 %v2402, %v2471
      %2473 = vdwg.mxu0
      %2474 = vmatprep.subr.bf16.mxu0 0
      %2475 = vmatpush1.bf16.msra.mxu0 0
      %2476 = vmatprep.subr.bf16.mxu0 0
      %2477 = vmatpush1.bf16.msra.mxu0 0
      %2478 = vmatprep.subr.bf16.mxu0 0
      %2479 = vmatpush1.bf16.msra.mxu0 0
      %2480 = vmatprep.subr.bf16.mxu0 0
      %2481 = vmatpush1.bf16.msra.mxu0 0
      %2482 = vmatprep.subr.bf16.mxu0 0
      %2483 = vmatpush1.bf16.msra.mxu0 0
      %2484 = vmatprep.subr.bf16.mxu0 0
      %2485 = vmatpush1.bf16.msra.mxu0 0
      %2486 = vmatprep.subr.bf16.mxu0 %v2383
      %2487 = vmatpush1.bf16.msra.mxu0 %v2382
      %2488 = vmatprep.subr.bf16.mxu0 %v2379
      %2489 = vmatpush1.bf16.msra.mxu0 %v2378
      %2490 = vmatprep.subr.bf16.mxu0 0
      %2491 = vmatpush2.bf16.msra.mxu0 0
      %2492 = vmatprep.subr.bf16.mxu0 0
      %2493 = vmatpush2.bf16.msra.mxu0 0
      %2494 = vmatprep.subr.bf16.mxu0 0
      %2495 = vmatpush2.bf16.msra.mxu0 0
      %2496 = vmatprep.subr.bf16.mxu0 0
      %2497 = vmatpush2.bf16.msra.mxu0 0
      %2498 = vmatprep.subr.bf16.mxu0 0
      %2499 = vmatpush2.bf16.msra.mxu0 0
      %2500 = vmatprep.subr.bf16.mxu0 0
      %2501 = vmatpush2.bf16.msra.mxu0 0
      %2502 = vmatprep.subr.bf16.mxu0 0
      %2503 = vmatpush2.bf16.msra.mxu0 0
      %2504 = vmatprep.subr.bf16.mxu0 0
      %2505 = vmatpush2.bf16.msra.mxu0 0
      %2506 = vmatprep.mubr.bf16.mxu0 0
      %2507 = vmatmul.mubr.bf16.gmra.mxu0 %v2416
      %v2508 = vpop.f32.mrf.mxu0
      %v2509 = vadd.f32 %v2387, %v2508
      %v2510 = vpop.f32.mrf.mxu0
      %v2511 = vadd.f32 %v2387, %v2510
      %v2512 = vpop.f32.mrf.mxu0
      %v2513 = vadd.f32 %v2392, %v2512
      %v2514 = vpop.f32.mrf.mxu0
      %v2515 = vadd.f32 %v2392, %v2514
      %2516 = vmatprep.mubr.bf16.mxu0 0
      %2517 = vmatmul.mubr.bf16.gmra.mxu0 %v2419
      %v2518 = vpop.f32.mrf.mxu0
      %v2519 = vadd.f32 %v2397, %v2518
      %v2520 = vpop.f32.mrf.mxu0
      %v2521 = vadd.f32 %v2397, %v2520
      %v2522 = vpop.f32.mrf.mxu0
      %v2523 = vadd.f32 %v2402, %v2522
      %v2524 = vpop.f32.mrf.mxu0
      %v2525 = vadd.f32 %v2402, %v2524
      %2526 = vdwg.mxu0
      %v2527 = vand.u32 2147483647, %v2456
      %vm2528 = vcmp.le.f32.partialorder %v2527, 0.7853982
      %vm2529 = vcmp.lt.s32.totalorder %v2456, 0
      %v2530 = vand.u32 %v2456, 2139095040
      %v2531 = vshrl.u32 %v2530, 23
      %v2532 = vsub.s32 %v2531, 127
      %v2533 = vand.u32 2147483647, %v2456
      %v2534 = vand.u32 %v2533, 8388607
      %v2535 = vor.u32 %v2534, 8388608
      %v2536 = vsub.s32 0, %v2535
      %v2537 = vadd.s32 %v2532, 1
      %vm2538 = vcmp.gt.s32.totalorder %v2537, 0
      %v2539 = vsel %vm2538, %v2537, 0
      %v2540 = vshrl.u32 %v2539, 5
      %v2541 = vand.u32 %v2539, 31
      %v2542 = vsub.s32 32, %v2541
      %v2543 = vshrl.u32 683565275, %v2542
      %v2544 = vshll.u32 683565275, %v2541
      %v2545 = vshrl.u32 2475754826, %v2542
      %v2546 = vor.u32 %v2544, %v2545
      %v2547 = vshll.u32 2475754826, %v2541
      %v2548 = vshrl.u32 2131351028, %v2542
      %v2549 = vor.u32 %v2547, %v2548
      %v2550 = vshll.u32 2131351028, %v2541
      %v2551 = vshrl.u32 2102212464, %v2542
      %v2552 = vor.u32 %v2550, %v2551
      %v2553 = vshll.u32 2102212464, %v2541
      %v2554 = vshrl.u32 920167782, %v2542
      %v2555 = vor.u32 %v2553, %v2554
      %v2556 = vshll.u32 920167782, %v2541
      %v2557 = vshrl.u32 1326507024, %v2542
      %v2558 = vor.u32 %v2556, %v2557
      %vm2559 = vcmp.lt.s32.totalorder %v2540, 1
      %vm2560 = vcmp.lt.s32.totalorder %v2540, 2
      %vm2561 = vcmp.lt.s32.totalorder %v2540, 3
      %vm2562 = vcmp.lt.s32.totalorder %v2540, 4
      %v2563 = vsel %vm2559, %v2543, %v2546
      %v2564 = vsel %vm2562, %v2552, 2102212464
      %v2565 = vsel %vm2561, %v2549, %v2564
      %v2566 = vsel %vm2560, %v2563, %v2565
      %v2567 = vsel %vm2559, %v2546, %v2549
      %v2568 = vsel %vm2562, %v2555, 920167782
      %v2569 = vsel %vm2561, %v2552, %v2568
      %v2570 = vsel %vm2560, %v2567, %v2569
      %v2571 = vsel %vm2559, %v2549, %v2552
      %v2572 = vsel %vm2562, %v2558, 1326507024
      %v2573 = vsel %vm2561, %v2555, %v2572
      %v2574 = vsel %vm2560, %v2571, %v2573
      %v2575 = vshll.u32 %v2535, 8
      %v2576 = vmul.u32.u64.compose %v2575, %v2574
      %v2577 = vextract.low.u32 %v2576
      %v2578 = vextract.high.u32 %v2576
      %v2579 = vmul.u32.u64.compose %v2575, %v2570
      %v2580 = vextract.low.u32 %v2579
      %v2581 = vextract.high.u32 %v2579
      %v2582 = vmul.u32 %v2575, %v2566
      %v2583 = vadd.s32 %v2578, %v2580
      %vm2584 = vc.u32 %v2578, %v2580
      %v2585 = vadd.s32 %v2581, 1
      %v2586 = vsel %vm2584, %v2585, %v2581
      %v2587 = vadd.s32 %v2582, %v2586
      %v2588 = vadd.s32 %v2587, 536870912
      %v2589 = vshrl.u32 %v2588, 30
      %v2590 = vshll.u32 %v2589, 30
      %v2591 = vsub.s32 %v2587, %v2590
      %vm2592 = vcmp.lt.s32.totalorder %v2591, 0
      %v2593 = vsub.s32 0, %v2591
      %v2594 = vsel %vm2592, %v2593, %v2591
      %v2595 = vclz %v2594
      %v2596 = vsub.s32 %v2595, 2
      %vm2597 = vcmp.gt.s32.totalorder 0, %v2596
      %v2598 = vsel %vm2597, 0, %v2596
      %v2599 = vsub.s32 32, %v2598
      %v2600 = vshll.u32 %v2591, %v2598
      %v2601 = vshrl.u32 %v2583, %v2599
      %v2602 = vor.u32 %v2600, %v2601
      %v2603 = vsub.s32 4294967266, %v2598
      %v2604 = vadd.s32 %v2603, 127
      %v2605 = vshll.u32 %v2604, 23
      %v2606 = vor.u32 4788187, %v2605
      %v2607 = vand.u32 2147483647, %v2606
      %v2609 = vcvt.s32.f32 %v2602
      %v2610 = vmul.f32 %v2609, %v2607
      %v2611 = vxor.u32 %v2610, 2147483648
      %v2612 = vsel %vm2529, %v2611, %v2610
      %v2613 = vsub.s32 4, %v2589
      %v2614 = vsel %vm2529, %v2613, %v2589
      %v2615 = vsel %vm2528, %v2456, %v2612
      %v2616 = vsel %vm2528, 0, %v2614
      %v2617 = vcosq.f32.pop %v2615
      %v2618 = vsinq.f32.pop %v2615
      %vm2619 = vweird.f32 %v2456
      %v2620 = vadd.s32 %v2616, 3
      %v2621 = vand.u32 %v2620, 3
      %vm2622 = vcmp.lt.s32.totalorder %v2621, 2
      %vm2623 = vcmp.eq.s32.totalorder %v2621, 0
      %v2624 = vxor.u32 %v2618, 2147483648
      %v2625 = vsel %vm2623, %v2617, %v2624
      %vm2626 = vcmp.eq.s32.totalorder %v2621, 2
      %v2627 = vxor.u32 %v2617, 2147483648
      %v2628 = vsel %vm2626, %v2627, %v2618
      %v2629 = vsel %vm2622, %v2625, %v2628
      %v2630 = vsel %vm2619, nan, %v2629
      %v2631 = vand.u32 2147483647, %v2458
      %vm2632 = vcmp.le.f32.partialorder %v2631, 0.7853982
      %vm2633 = vcmp.lt.s32.totalorder %v2458, 0
      %v2634 = vand.u32 %v2458, 2139095040
      %v2635 = vshrl.u32 %v2634, 23
      %v2636 = vsub.s32 %v2635, 127
      %v2637 = vand.u32 2147483647, %v2458
      %v2638 = vand.u32 %v2637, 8388607
      %v2639 = vor.u32 %v2638, 8388608
      %v2640 = vsub.s32 0, %v2639
      %v2641 = vadd.s32 %v2636, 1
      %vm2642 = vcmp.gt.s32.totalorder %v2641, 0
      %v2643 = vsel %vm2642, %v2641, 0
      %v2644 = vshrl.u32 %v2643, 5
      %v2645 = vand.u32 %v2643, 31
      %v2646 = vsub.s32 32, %v2645
      %v2647 = vshrl.u32 683565275, %v2646
      %v2648 = vshll.u32 683565275, %v2645
      %v2649 = vshrl.u32 2475754826, %v2646
      %v2650 = vor.u32 %v2648, %v2649
      %v2651 = vshll.u32 2475754826, %v2645
      %v2652 = vshrl.u32 2131351028, %v2646
      %v2653 = vor.u32 %v2651, %v2652
      %v2654 = vshll.u32 2131351028, %v2645
      %v2655 = vshrl.u32 2102212464, %v2646
      %v2656 = vor.u32 %v2654, %v2655
      %v2657 = vshll.u32 2102212464, %v2645
      %v2658 = vshrl.u32 920167782, %v2646
      %v2659 = vor.u32 %v2657, %v2658
      %v2660 = vshll.u32 920167782, %v2645
      %v2661 = vshrl.u32 1326507024, %v2646
      %v2662 = vor.u32 %v2660, %v2661
      %vm2663 = vcmp.lt.s32.totalorder %v2644, 1
      %vm2664 = vcmp.lt.s32.totalorder %v2644, 2
      %vm2665 = vcmp.lt.s32.totalorder %v2644, 3
      %vm2666 = vcmp.lt.s32.totalorder %v2644, 4
      %v2667 = vsel %vm2663, %v2647, %v2650
      %v2668 = vsel %vm2666, %v2656, 2102212464
      %v2669 = vsel %vm2665, %v2653, %v2668
      %v2670 = vsel %vm2664, %v2667, %v2669
      %v2671 = vsel %vm2663, %v2650, %v2653
      %v2672 = vsel %vm2666, %v2659, 920167782
      %v2673 = vsel %vm2665, %v2656, %v2672
      %v2674 = vsel %vm2664, %v2671, %v2673
      %v2675 = vsel %vm2663, %v2653, %v2656
      %v2676 = vsel %vm2666, %v2662, 1326507024
      %v2677 = vsel %vm2665, %v2659, %v2676
      %v2678 = vsel %vm2664, %v2675, %v2677
      %v2679 = vshll.u32 %v2639, 8
      %v2680 = vmul.u32.u64.compose %v2679, %v2678
      %v2681 = vextract.low.u32 %v2680
      %v2682 = vextract.high.u32 %v2680
      %v2683 = vmul.u32.u64.compose %v2679, %v2674
      %v2684 = vextract.low.u32 %v2683
      %v2685 = vextract.high.u32 %v2683
      %v2686 = vmul.u32 %v2679, %v2670
      %v2687 = vadd.s32 %v2682, %v2684
      %vm2688 = vc.u32 %v2682, %v2684
      %v2689 = vadd.s32 %v2685, 1
      %v2690 = vsel %vm2688, %v2689, %v2685
      %v2691 = vadd.s32 %v2686, %v2690
      %v2692 = vadd.s32 %v2691, 536870912
      %v2693 = vshrl.u32 %v2692, 30
      %v2694 = vshll.u32 %v2693, 30
      %v2695 = vsub.s32 %v2691, %v2694
      %vm2696 = vcmp.lt.s32.totalorder %v2695, 0
      %v2697 = vsub.s32 0, %v2695
      %v2698 = vsel %vm2696, %v2697, %v2695
      %v2699 = vclz %v2698
      %v2700 = vsub.s32 %v2699, 2
      %vm2701 = vcmp.gt.s32.totalorder 0, %v2700
      %v2702 = vsel %vm2701, 0, %v2700
      %v2703 = vsub.s32 32, %v2702
      %v2704 = vshll.u32 %v2695, %v2702
      %v2705 = vshrl.u32 %v2687, %v2703
      %v2706 = vor.u32 %v2704, %v2705
      %v2707 = vsub.s32 4294967266, %v2702
      %v2708 = vadd.s32 %v2707, 127
      %v2709 = vshll.u32 %v2708, 23
      %v2710 = vor.u32 4788187, %v2709
      %v2711 = vand.u32 2147483647, %v2710
      %v2713 = vcvt.s32.f32 %v2706
      %v2714 = vmul.f32 %v2713, %v2711
      %v2715 = vxor.u32 %v2714, 2147483648
      %v2716 = vsel %vm2633, %v2715, %v2714
      %v2717 = vsub.s32 4, %v2693
      %v2718 = vsel %vm2633, %v2717, %v2693
      %v2719 = vsel %vm2632, %v2458, %v2716
      %v2720 = vsel %vm2632, 0, %v2718
      %v2721 = vcosq.f32.pop %v2719
      %v2722 = vsinq.f32.pop %v2719
      %vm2723 = vweird.f32 %v2458
      %v2724 = vadd.s32 %v2720, 3
      %v2725 = vand.u32 %v2724, 3
      %vm2726 = vcmp.lt.s32.totalorder %v2725, 2
      %vm2727 = vcmp.eq.s32.totalorder %v2725, 0
      %v2728 = vxor.u32 %v2722, 2147483648
      %v2729 = vsel %vm2727, %v2721, %v2728
      %vm2730 = vcmp.eq.s32.totalorder %v2725, 2
      %v2731 = vxor.u32 %v2721, 2147483648
      %v2732 = vsel %vm2730, %v2731, %v2722
      %v2733 = vsel %vm2726, %v2729, %v2732
      %v2734 = vsel %vm2723, nan, %v2733
      %v2735 = vand.u32 2147483647, %v2509
      %vm2736 = vcmp.le.f32.partialorder %v2735, 0.7853982
      %vm2737 = vcmp.lt.s32.totalorder %v2509, 0
      %v2738 = vand.u32 %v2509, 2139095040
      %v2739 = vshrl.u32 %v2738, 23
      %v2740 = vsub.s32 %v2739, 127
      %v2741 = vand.u32 2147483647, %v2509
      %v2742 = vand.u32 %v2741, 8388607
      %v2743 = vor.u32 %v2742, 8388608
      %v2744 = vsub.s32 0, %v2743
      %v2745 = vadd.s32 %v2740, 1
      %vm2746 = vcmp.gt.s32.totalorder %v2745, 0
      %v2747 = vsel %vm2746, %v2745, 0
      %v2748 = vshrl.u32 %v2747, 5
      %v2749 = vand.u32 %v2747, 31
      %v2750 = vsub.s32 32, %v2749
      %v2751 = vshrl.u32 683565275, %v2750
      %v2752 = vshll.u32 683565275, %v2749
      %v2753 = vshrl.u32 2475754826, %v2750
      %v2754 = vor.u32 %v2752, %v2753
      %v2755 = vshll.u32 2475754826, %v2749
      %v2756 = vshrl.u32 2131351028, %v2750
      %v2757 = vor.u32 %v2755, %v2756
      %v2758 = vshll.u32 2131351028, %v2749
      %v2759 = vshrl.u32 2102212464, %v2750
      %v2760 = vor.u32 %v2758, %v2759
      %v2761 = vshll.u32 2102212464, %v2749
      %v2762 = vshrl.u32 920167782, %v2750
      %v2763 = vor.u32 %v2761, %v2762
      %v2764 = vshll.u32 920167782, %v2749
      %v2765 = vshrl.u32 1326507024, %v2750
      %v2766 = vor.u32 %v2764, %v2765
      %vm2767 = vcmp.lt.s32.totalorder %v2748, 1
      %vm2768 = vcmp.lt.s32.totalorder %v2748, 2
      %vm2769 = vcmp.lt.s32.totalorder %v2748, 3
      %vm2770 = vcmp.lt.s32.totalorder %v2748, 4
      %v2771 = vsel %vm2767, %v2751, %v2754
      %v2772 = vsel %vm2770, %v2760, 2102212464
      %v2773 = vsel %vm2769, %v2757, %v2772
      %v2774 = vsel %vm2768, %v2771, %v2773
      %v2775 = vsel %vm2767, %v2754, %v2757
      %v2776 = vsel %vm2770, %v2763, 920167782
      %v2777 = vsel %vm2769, %v2760, %v2776
      %v2778 = vsel %vm2768, %v2775, %v2777
      %v2779 = vsel %vm2767, %v2757, %v2760
      %v2780 = vsel %vm2770, %v2766, 1326507024
      %v2781 = vsel %vm2769, %v2763, %v2780
      %v2782 = vsel %vm2768, %v2779, %v2781
      %v2783 = vshll.u32 %v2743, 8
      %v2784 = vmul.u32.u64.compose %v2783, %v2782
      %v2785 = vextract.low.u32 %v2784
      %v2786 = vextract.high.u32 %v2784
      %v2787 = vmul.u32.u64.compose %v2783, %v2778
      %v2788 = vextract.low.u32 %v2787
      %v2789 = vextract.high.u32 %v2787
      %v2790 = vmul.u32 %v2783, %v2774
      %v2791 = vadd.s32 %v2786, %v2788
      %vm2792 = vc.u32 %v2786, %v2788
      %v2793 = vadd.s32 %v2789, 1
      %v2794 = vsel %vm2792, %v2793, %v2789
      %v2795 = vadd.s32 %v2790, %v2794
      %v2796 = vadd.s32 %v2795, 536870912
      %v2797 = vshrl.u32 %v2796, 30
      %v2798 = vshll.u32 %v2797, 30
      %v2799 = vsub.s32 %v2795, %v2798
      %vm2800 = vcmp.lt.s32.totalorder %v2799, 0
      %v2801 = vsub.s32 0, %v2799
      %v2802 = vsel %vm2800, %v2801, %v2799
      %v2803 = vclz %v2802
      %v2804 = vsub.s32 %v2803, 2
      %vm2805 = vcmp.gt.s32.totalorder 0, %v2804
      %v2806 = vsel %vm2805, 0, %v2804
      %v2807 = vsub.s32 32, %v2806
      %v2808 = vshll.u32 %v2799, %v2806
      %v2809 = vshrl.u32 %v2791, %v2807
      %v2810 = vor.u32 %v2808, %v2809
      %v2811 = vsub.s32 4294967266, %v2806
      %v2812 = vadd.s32 %v2811, 127
      %v2813 = vshll.u32 %v2812, 23
      %v2814 = vor.u32 4788187, %v2813
      %v2815 = vand.u32 2147483647, %v2814
      %v2817 = vcvt.s32.f32 %v2810
      %v2818 = vmul.f32 %v2817, %v2815
      %v2819 = vxor.u32 %v2818, 2147483648
      %v2820 = vsel %vm2737, %v2819, %v2818
      %v2821 = vsub.s32 4, %v2797
      %v2822 = vsel %vm2737, %v2821, %v2797
      %v2823 = vsel %vm2736, %v2509, %v2820
      %v2824 = vsel %vm2736, 0, %v2822
      %v2825 = vcosq.f32.pop %v2823
      %v2826 = vsinq.f32.pop %v2823
      %vm2827 = vweird.f32 %v2509
      %v2828 = vadd.s32 %v2824, 3
      %v2829 = vand.u32 %v2828, 3
      %vm2830 = vcmp.lt.s32.totalorder %v2829, 2
      %vm2831 = vcmp.eq.s32.totalorder %v2829, 0
      %v2832 = vxor.u32 %v2826, 2147483648
      %v2833 = vsel %vm2831, %v2825, %v2832
      %vm2834 = vcmp.eq.s32.totalorder %v2829, 2
      %v2835 = vxor.u32 %v2825, 2147483648
      %v2836 = vsel %vm2834, %v2835, %v2826
      %v2837 = vsel %vm2830, %v2833, %v2836
      %v2838 = vsel %vm2827, nan, %v2837
      %v2839 = vand.u32 2147483647, %v2511
      %vm2840 = vcmp.le.f32.partialorder %v2839, 0.7853982
      %vm2841 = vcmp.lt.s32.totalorder %v2511, 0
      %v2842 = vand.u32 %v2511, 2139095040
      %v2843 = vshrl.u32 %v2842, 23
      %v2844 = vsub.s32 %v2843, 127
      %v2845 = vand.u32 2147483647, %v2511
      %v2846 = vand.u32 %v2845, 8388607
      %v2847 = vor.u32 %v2846, 8388608
      %v2848 = vsub.s32 0, %v2847
      %v2849 = vadd.s32 %v2844, 1
      %vm2850 = vcmp.gt.s32.totalorder %v2849, 0
      %v2851 = vsel %vm2850, %v2849, 0
      %v2852 = vshrl.u32 %v2851, 5
      %v2853 = vand.u32 %v2851, 31
      %v2854 = vsub.s32 32, %v2853
      %v2855 = vshrl.u32 683565275, %v2854
      %v2856 = vshll.u32 683565275, %v2853
      %v2857 = vshrl.u32 2475754826, %v2854
      %v2858 = vor.u32 %v2856, %v2857
      %v2859 = vshll.u32 2475754826, %v2853
      %v2860 = vshrl.u32 2131351028, %v2854
      %v2861 = vor.u32 %v2859, %v2860
      %v2862 = vshll.u32 2131351028, %v2853
      %v2863 = vshrl.u32 2102212464, %v2854
      %v2864 = vor.u32 %v2862, %v2863
      %v2865 = vshll.u32 2102212464, %v2853
      %v2866 = vshrl.u32 920167782, %v2854
      %v2867 = vor.u32 %v2865, %v2866
      %v2868 = vshll.u32 920167782, %v2853
      %v2869 = vshrl.u32 1326507024, %v2854
      %v2870 = vor.u32 %v2868, %v2869
      %vm2871 = vcmp.lt.s32.totalorder %v2852, 1
      %vm2872 = vcmp.lt.s32.totalorder %v2852, 2
      %vm2873 = vcmp.lt.s32.totalorder %v2852, 3
      %vm2874 = vcmp.lt.s32.totalorder %v2852, 4
      %v2875 = vsel %vm2871, %v2855, %v2858
      %v2876 = vsel %vm2874, %v2864, 2102212464
      %v2877 = vsel %vm2873, %v2861, %v2876
      %v2878 = vsel %vm2872, %v2875, %v2877
      %v2879 = vsel %vm2871, %v2858, %v2861
      %v2880 = vsel %vm2874, %v2867, 920167782
      %v2881 = vsel %vm2873, %v2864, %v2880
      %v2882 = vsel %vm2872, %v2879, %v2881
      %v2883 = vsel %vm2871, %v2861, %v2864
      %v2884 = vsel %vm2874, %v2870, 1326507024
      %v2885 = vsel %vm2873, %v2867, %v2884
      %v2886 = vsel %vm2872, %v2883, %v2885
      %v2887 = vshll.u32 %v2847, 8
      %v2888 = vmul.u32.u64.compose %v2887, %v2886
      %v2889 = vextract.low.u32 %v2888
      %v2890 = vextract.high.u32 %v2888
      %v2891 = vmul.u32.u64.compose %v2887, %v2882
      %v2892 = vextract.low.u32 %v2891
      %v2893 = vextract.high.u32 %v2891
      %v2894 = vmul.u32 %v2887, %v2878
      %v2895 = vadd.s32 %v2890, %v2892
      %vm2896 = vc.u32 %v2890, %v2892
      %v2897 = vadd.s32 %v2893, 1
      %v2898 = vsel %vm2896, %v2897, %v2893
      %v2899 = vadd.s32 %v2894, %v2898
      %v2900 = vadd.s32 %v2899, 536870912
      %v2901 = vshrl.u32 %v2900, 30
      %v2902 = vshll.u32 %v2901, 30
      %v2903 = vsub.s32 %v2899, %v2902
      %vm2904 = vcmp.lt.s32.totalorder %v2903, 0
      %v2905 = vsub.s32 0, %v2903
      %v2906 = vsel %vm2904, %v2905, %v2903
      %v2907 = vclz %v2906
      %v2908 = vsub.s32 %v2907, 2
      %vm2909 = vcmp.gt.s32.totalorder 0, %v2908
      %v2910 = vsel %vm2909, 0, %v2908
      %v2911 = vsub.s32 32, %v2910
      %v2912 = vshll.u32 %v2903, %v2910
      %v2913 = vshrl.u32 %v2895, %v2911
      %v2914 = vor.u32 %v2912, %v2913
      %v2915 = vsub.s32 4294967266, %v2910
      %v2916 = vadd.s32 %v2915, 127
      %v2917 = vshll.u32 %v2916, 23
      %v2918 = vor.u32 4788187, %v2917
      %v2919 = vand.u32 2147483647, %v2918
      %v2921 = vcvt.s32.f32 %v2914
      %v2922 = vmul.f32 %v2921, %v2919
      %v2923 = vxor.u32 %v2922, 2147483648
      %v2924 = vsel %vm2841, %v2923, %v2922
      %v2925 = vsub.s32 4, %v2901
      %v2926 = vsel %vm2841, %v2925, %v2901
      %v2927 = vsel %vm2840, %v2511, %v2924
      %v2928 = vsel %vm2840, 0, %v2926
      %v2929 = vcosq.f32.pop %v2927
      %v2930 = vsinq.f32.pop %v2927
      %vm2931 = vweird.f32 %v2511
      %v2932 = vadd.s32 %v2928, 3
      %v2933 = vand.u32 %v2932, 3
      %vm2934 = vcmp.lt.s32.totalorder %v2933, 2
      %vm2935 = vcmp.eq.s32.totalorder %v2933, 0
      %v2936 = vxor.u32 %v2930, 2147483648
      %v2937 = vsel %vm2935, %v2929, %v2936
      %vm2938 = vcmp.eq.s32.totalorder %v2933, 2
      %v2939 = vxor.u32 %v2929, 2147483648
      %v2940 = vsel %vm2938, %v2939, %v2930
      %v2941 = vsel %vm2934, %v2937, %v2940
      %v2942 = vsel %vm2931, nan, %v2941
      %v2943 = vand.u32 2147483647, %v2460
      %vm2944 = vcmp.le.f32.partialorder %v2943, 0.7853982
      %vm2945 = vcmp.lt.s32.totalorder %v2460, 0
      %v2946 = vand.u32 %v2460, 2139095040
      %v2947 = vshrl.u32 %v2946, 23
      %v2948 = vsub.s32 %v2947, 127
      %v2949 = vand.u32 2147483647, %v2460
      %v2950 = vand.u32 %v2949, 8388607
      %v2951 = vor.u32 %v2950, 8388608
      %v2952 = vsub.s32 0, %v2951
      %v2953 = vadd.s32 %v2948, 1
      %vm2954 = vcmp.gt.s32.totalorder %v2953, 0
      %v2955 = vsel %vm2954, %v2953, 0
      %v2956 = vshrl.u32 %v2955, 5
      %v2957 = vand.u32 %v2955, 31
      %v2958 = vsub.s32 32, %v2957
      %v2959 = vshrl.u32 683565275, %v2958
      %v2960 = vshll.u32 683565275, %v2957
      %v2961 = vshrl.u32 2475754826, %v2958
      %v2962 = vor.u32 %v2960, %v2961
      %v2963 = vshll.u32 2475754826, %v2957
      %v2964 = vshrl.u32 2131351028, %v2958
      %v2965 = vor.u32 %v2963, %v2964
      %v2966 = vshll.u32 2131351028, %v2957
      %v2967 = vshrl.u32 2102212464, %v2958
      %v2968 = vor.u32 %v2966, %v2967
      %v2969 = vshll.u32 2102212464, %v2957
      %v2970 = vshrl.u32 920167782, %v2958
      %v2971 = vor.u32 %v2969, %v2970
      %v2972 = vshll.u32 920167782, %v2957
      %v2973 = vshrl.u32 1326507024, %v2958
      %v2974 = vor.u32 %v2972, %v2973
      %vm2975 = vcmp.lt.s32.totalorder %v2956, 1
      %vm2976 = vcmp.lt.s32.totalorder %v2956, 2
      %vm2977 = vcmp.lt.s32.totalorder %v2956, 3
      %vm2978 = vcmp.lt.s32.totalorder %v2956, 4
      %v2979 = vsel %vm2975, %v2959, %v2962
      %v2980 = vsel %vm2978, %v2968, 2102212464
      %v2981 = vsel %vm2977, %v2965, %v2980
      %v2982 = vsel %vm2976, %v2979, %v2981
      %v2983 = vsel %vm2975, %v2962, %v2965
      %v2984 = vsel %vm2978, %v2971, 920167782
      %v2985 = vsel %vm2977, %v2968, %v2984
      %v2986 = vsel %vm2976, %v2983, %v2985
      %v2987 = vsel %vm2975, %v2965, %v2968
      %v2988 = vsel %vm2978, %v2974, 1326507024
      %v2989 = vsel %vm2977, %v2971, %v2988
      %v2990 = vsel %vm2976, %v2987, %v2989
      %v2991 = vshll.u32 %v2951, 8
      %v2992 = vmul.u32.u64.compose %v2991, %v2990
      %v2993 = vextract.low.u32 %v2992
      %v2994 = vextract.high.u32 %v2992
      %v2995 = vmul.u32.u64.compose %v2991, %v2986
      %v2996 = vextract.low.u32 %v2995
      %v2997 = vextract.high.u32 %v2995
      %v2998 = vmul.u32 %v2991, %v2982
      %v2999 = vadd.s32 %v2994, %v2996
      %vm3000 = vc.u32 %v2994, %v2996
      %v3001 = vadd.s32 %v2997, 1
      %v3002 = vsel %vm3000, %v3001, %v2997
      %v3003 = vadd.s32 %v2998, %v3002
      %v3004 = vadd.s32 %v3003, 536870912
      %v3005 = vshrl.u32 %v3004, 30
      %v3006 = vshll.u32 %v3005, 30
      %v3007 = vsub.s32 %v3003, %v3006
      %vm3008 = vcmp.lt.s32.totalorder %v3007, 0
      %v3009 = vsub.s32 0, %v3007
      %v3010 = vsel %vm3008, %v3009, %v3007
      %v3011 = vclz %v3010
      %v3012 = vsub.s32 %v3011, 2
      %vm3013 = vcmp.gt.s32.totalorder 0, %v3012
      %v3014 = vsel %vm3013, 0, %v3012
      %v3015 = vsub.s32 32, %v3014
      %v3016 = vshll.u32 %v3007, %v3014
      %v3017 = vshrl.u32 %v2999, %v3015
      %v3018 = vor.u32 %v3016, %v3017
      %v3019 = vsub.s32 4294967266, %v3014
      %v3020 = vadd.s32 %v3019, 127
      %v3021 = vshll.u32 %v3020, 23
      %v3022 = vor.u32 4788187, %v3021
      %v3023 = vand.u32 2147483647, %v3022
      %v3025 = vcvt.s32.f32 %v3018
      %v3026 = vmul.f32 %v3025, %v3023
      %v3027 = vxor.u32 %v3026, 2147483648
      %v3028 = vsel %vm2945, %v3027, %v3026
      %v3029 = vsub.s32 4, %v3005
      %v3030 = vsel %vm2945, %v3029, %v3005
      %v3031 = vsel %vm2944, %v2460, %v3028
      %v3032 = vsel %vm2944, 0, %v3030
      %v3033 = vcosq.f32.pop %v3031
      %v3034 = vsinq.f32.pop %v3031
      %vm3035 = vweird.f32 %v2460
      %v3036 = vadd.s32 %v3032, 3
      %v3037 = vand.u32 %v3036, 3
      %vm3038 = vcmp.lt.s32.totalorder %v3037, 2
      %vm3039 = vcmp.eq.s32.totalorder %v3037, 0
      %v3040 = vxor.u32 %v3034, 2147483648
      %v3041 = vsel %vm3039, %v3033, %v3040
      %vm3042 = vcmp.eq.s32.totalorder %v3037, 2
      %v3043 = vxor.u32 %v3033, 2147483648
      %v3044 = vsel %vm3042, %v3043, %v3034
      %v3045 = vsel %vm3038, %v3041, %v3044
      %v3046 = vsel %vm3035, nan, %v3045
      %v3047 = vand.u32 2147483647, %v2462
      %vm3048 = vcmp.le.f32.partialorder %v3047, 0.7853982
      %vm3049 = vcmp.lt.s32.totalorder %v2462, 0
      %v3050 = vand.u32 %v2462, 2139095040
      %v3051 = vshrl.u32 %v3050, 23
      %v3052 = vsub.s32 %v3051, 127
      %v3053 = vand.u32 2147483647, %v2462
      %v3054 = vand.u32 %v3053, 8388607
      %v3055 = vor.u32 %v3054, 8388608
      %v3056 = vsub.s32 0, %v3055
      %v3057 = vadd.s32 %v3052, 1
      %vm3058 = vcmp.gt.s32.totalorder %v3057, 0
      %v3059 = vsel %vm3058, %v3057, 0
      %v3060 = vshrl.u32 %v3059, 5
      %v3061 = vand.u32 %v3059, 31
      %v3062 = vsub.s32 32, %v3061
      %v3063 = vshrl.u32 683565275, %v3062
      %v3064 = vshll.u32 683565275, %v3061
      %v3065 = vshrl.u32 2475754826, %v3062
      %v3066 = vor.u32 %v3064, %v3065
      %v3067 = vshll.u32 2475754826, %v3061
      %v3068 = vshrl.u32 2131351028, %v3062
      %v3069 = vor.u32 %v3067, %v3068
      %v3070 = vshll.u32 2131351028, %v3061
      %v3071 = vshrl.u32 2102212464, %v3062
      %v3072 = vor.u32 %v3070, %v3071
      %v3073 = vshll.u32 2102212464, %v3061
      %v3074 = vshrl.u32 920167782, %v3062
      %v3075 = vor.u32 %v3073, %v3074
      %v3076 = vshll.u32 920167782, %v3061
      %v3077 = vshrl.u32 1326507024, %v3062
      %v3078 = vor.u32 %v3076, %v3077
      %vm3079 = vcmp.lt.s32.totalorder %v3060, 1
      %vm3080 = vcmp.lt.s32.totalorder %v3060, 2
      %vm3081 = vcmp.lt.s32.totalorder %v3060, 3
      %vm3082 = vcmp.lt.s32.totalorder %v3060, 4
      %v3083 = vsel %vm3079, %v3063, %v3066
      %v3084 = vsel %vm3082, %v3072, 2102212464
      %v3085 = vsel %vm3081, %v3069, %v3084
      %v3086 = vsel %vm3080, %v3083, %v3085
      %v3087 = vsel %vm3079, %v3066, %v3069
      %v3088 = vsel %vm3082, %v3075, 920167782
      %v3089 = vsel %vm3081, %v3072, %v3088
      %v3090 = vsel %vm3080, %v3087, %v3089
      %v3091 = vsel %vm3079, %v3069, %v3072
      %v3092 = vsel %vm3082, %v3078, 1326507024
      %v3093 = vsel %vm3081, %v3075, %v3092
      %v3094 = vsel %vm3080, %v3091, %v3093
      %v3095 = vshll.u32 %v3055, 8
      %v3096 = vmul.u32.u64.compose %v3095, %v3094
      %v3097 = vextract.low.u32 %v3096
      %v3098 = vextract.high.u32 %v3096
      %v3099 = vmul.u32.u64.compose %v3095, %v3090
      %v3100 = vextract.low.u32 %v3099
      %v3101 = vextract.high.u32 %v3099
      %v3102 = vmul.u32 %v3095, %v3086
      %v3103 = vadd.s32 %v3098, %v3100
      %vm3104 = vc.u32 %v3098, %v3100
      %v3105 = vadd.s32 %v3101, 1
      %v3106 = vsel %vm3104, %v3105, %v3101
      %v3107 = vadd.s32 %v3102, %v3106
      %v3108 = vadd.s32 %v3107, 536870912
      %v3109 = vshrl.u32 %v3108, 30
      %v3110 = vshll.u32 %v3109, 30
      %v3111 = vsub.s32 %v3107, %v3110
      %vm3112 = vcmp.lt.s32.totalorder %v3111, 0
      %v3113 = vsub.s32 0, %v3111
      %v3114 = vsel %vm3112, %v3113, %v3111
      %v3115 = vclz %v3114
      %v3116 = vsub.s32 %v3115, 2
      %vm3117 = vcmp.gt.s32.totalorder 0, %v3116
      %v3118 = vsel %vm3117, 0, %v3116
      %v3119 = vsub.s32 32, %v3118
      %v3120 = vshll.u32 %v3111, %v3118
      %v3121 = vshrl.u32 %v3103, %v3119
      %v3122 = vor.u32 %v3120, %v3121
      %v3123 = vsub.s32 4294967266, %v3118
      %v3124 = vadd.s32 %v3123, 127
      %v3125 = vshll.u32 %v3124, 23
      %v3126 = vor.u32 4788187, %v3125
      %v3127 = vand.u32 2147483647, %v3126
      %v3129 = vcvt.s32.f32 %v3122
      %v3130 = vmul.f32 %v3129, %v3127
      %v3131 = vxor.u32 %v3130, 2147483648
      %v3132 = vsel %vm3049, %v3131, %v3130
      %v3133 = vsub.s32 4, %v3109
      %v3134 = vsel %vm3049, %v3133, %v3109
      %v3135 = vsel %vm3048, %v2462, %v3132
      %v3136 = vsel %vm3048, 0, %v3134
      %v3137 = vcosq.f32.pop %v3135
      %v3138 = vsinq.f32.pop %v3135
      %vm3139 = vweird.f32 %v2462
      %v3140 = vadd.s32 %v3136, 3
      %v3141 = vand.u32 %v3140, 3
      %vm3142 = vcmp.lt.s32.totalorder %v3141, 2
      %vm3143 = vcmp.eq.s32.totalorder %v3141, 0
      %v3144 = vxor.u32 %v3138, 2147483648
      %v3145 = vsel %vm3143, %v3137, %v3144
      %vm3146 = vcmp.eq.s32.totalorder %v3141, 2
      %v3147 = vxor.u32 %v3137, 2147483648
      %v3148 = vsel %vm3146, %v3147, %v3138
      %v3149 = vsel %vm3142, %v3145, %v3148
      %v3150 = vsel %vm3139, nan, %v3149
      %v3151 = vand.u32 2147483647, %v2513
      %vm3152 = vcmp.le.f32.partialorder %v3151, 0.7853982
      %vm3153 = vcmp.lt.s32.totalorder %v2513, 0
      %v3154 = vand.u32 %v2513, 2139095040
      %v3155 = vshrl.u32 %v3154, 23
      %v3156 = vsub.s32 %v3155, 127
      %v3157 = vand.u32 2147483647, %v2513
      %v3158 = vand.u32 %v3157, 8388607
      %v3159 = vor.u32 %v3158, 8388608
      %v3160 = vsub.s32 0, %v3159
      %v3161 = vadd.s32 %v3156, 1
      %vm3162 = vcmp.gt.s32.totalorder %v3161, 0
      %v3163 = vsel %vm3162, %v3161, 0
      %v3164 = vshrl.u32 %v3163, 5
      %v3165 = vand.u32 %v3163, 31
      %v3166 = vsub.s32 32, %v3165
      %v3167 = vshrl.u32 683565275, %v3166
      %v3168 = vshll.u32 683565275, %v3165
      %v3169 = vshrl.u32 2475754826, %v3166
      %v3170 = vor.u32 %v3168, %v3169
      %v3171 = vshll.u32 2475754826, %v3165
      %v3172 = vshrl.u32 2131351028, %v3166
      %v3173 = vor.u32 %v3171, %v3172
      %v3174 = vshll.u32 2131351028, %v3165
      %v3175 = vshrl.u32 2102212464, %v3166
      %v3176 = vor.u32 %v3174, %v3175
      %v3177 = vshll.u32 2102212464, %v3165
      %v3178 = vshrl.u32 920167782, %v3166
      %v3179 = vor.u32 %v3177, %v3178
      %v3180 = vshll.u32 920167782, %v3165
      %v3181 = vshrl.u32 1326507024, %v3166
      %v3182 = vor.u32 %v3180, %v3181
      %vm3183 = vcmp.lt.s32.totalorder %v3164, 1
      %vm3184 = vcmp.lt.s32.totalorder %v3164, 2
      %vm3185 = vcmp.lt.s32.totalorder %v3164, 3
      %vm3186 = vcmp.lt.s32.totalorder %v3164, 4
      %v3187 = vsel %vm3183, %v3167, %v3170
      %v3188 = vsel %vm3186, %v3176, 2102212464
      %v3189 = vsel %vm3185, %v3173, %v3188
      %v3190 = vsel %vm3184, %v3187, %v3189
      %v3191 = vsel %vm3183, %v3170, %v3173
      %v3192 = vsel %vm3186, %v3179, 920167782
      %v3193 = vsel %vm3185, %v3176, %v3192
      %v3194 = vsel %vm3184, %v3191, %v3193
      %v3195 = vsel %vm3183, %v3173, %v3176
      %v3196 = vsel %vm3186, %v3182, 1326507024
      %v3197 = vsel %vm3185, %v3179, %v3196
      %v3198 = vsel %vm3184, %v3195, %v3197
      %v3199 = vshll.u32 %v3159, 8
      %v3200 = vmul.u32.u64.compose %v3199, %v3198
      %v3201 = vextract.low.u32 %v3200
      %v3202 = vextract.high.u32 %v3200
      %v3203 = vmul.u32.u64.compose %v3199, %v3194
      %v3204 = vextract.low.u32 %v3203
      %v3205 = vextract.high.u32 %v3203
      %v3206 = vmul.u32 %v3199, %v3190
      %v3207 = vadd.s32 %v3202, %v3204
      %vm3208 = vc.u32 %v3202, %v3204
      %v3209 = vadd.s32 %v3205, 1
      %v3210 = vsel %vm3208, %v3209, %v3205
      %v3211 = vadd.s32 %v3206, %v3210
      %v3212 = vadd.s32 %v3211, 536870912
      %v3213 = vshrl.u32 %v3212, 30
      %v3214 = vshll.u32 %v3213, 30
      %v3215 = vsub.s32 %v3211, %v3214
      %vm3216 = vcmp.lt.s32.totalorder %v3215, 0
      %v3217 = vsub.s32 0, %v3215
      %v3218 = vsel %vm3216, %v3217, %v3215
      %v3219 = vclz %v3218
      %v3220 = vsub.s32 %v3219, 2
      %vm3221 = vcmp.gt.s32.totalorder 0, %v3220
      %v3222 = vsel %vm3221, 0, %v3220
      %v3223 = vsub.s32 32, %v3222
      %v3224 = vshll.u32 %v3215, %v3222
      %v3225 = vshrl.u32 %v3207, %v3223
      %v3226 = vor.u32 %v3224, %v3225
      %v3227 = vsub.s32 4294967266, %v3222
      %v3228 = vadd.s32 %v3227, 127
      %v3229 = vshll.u32 %v3228, 23
      %v3230 = vor.u32 4788187, %v3229
      %v3231 = vand.u32 2147483647, %v3230
      %v3233 = vcvt.s32.f32 %v3226
      %v3234 = vmul.f32 %v3233, %v3231
      %v3235 = vxor.u32 %v3234, 2147483648
      %v3236 = vsel %vm3153, %v3235, %v3234
      %v3237 = vsub.s32 4, %v3213
      %v3238 = vsel %vm3153, %v3237, %v3213
      %v3239 = vsel %vm3152, %v2513, %v3236
      %v3240 = vsel %vm3152, 0, %v3238
      %v3241 = vcosq.f32.pop %v3239
      %v3242 = vsinq.f32.pop %v3239
      %vm3243 = vweird.f32 %v2513
      %v3244 = vadd.s32 %v3240, 3
      %v3245 = vand.u32 %v3244, 3
      %vm3246 = vcmp.lt.s32.totalorder %v3245, 2
      %vm3247 = vcmp.eq.s32.totalorder %v3245, 0
      %v3248 = vxor.u32 %v3242, 2147483648
      %v3249 = vsel %vm3247, %v3241, %v3248
      %vm3250 = vcmp.eq.s32.totalorder %v3245, 2
      %v3251 = vxor.u32 %v3241, 2147483648
      %v3252 = vsel %vm3250, %v3251, %v3242
      %v3253 = vsel %vm3246, %v3249, %v3252
      %v3254 = vsel %vm3243, nan, %v3253
      %v3255 = vand.u32 2147483647, %v2515
      %vm3256 = vcmp.le.f32.partialorder %v3255, 0.7853982
      %vm3257 = vcmp.lt.s32.totalorder %v2515, 0
      %v3258 = vand.u32 %v2515, 2139095040
      %v3259 = vshrl.u32 %v3258, 23
      %v3260 = vsub.s32 %v3259, 127
      %v3261 = vand.u32 2147483647, %v2515
      %v3262 = vand.u32 %v3261, 8388607
      %v3263 = vor.u32 %v3262, 8388608
      %v3264 = vsub.s32 0, %v3263
      %v3265 = vadd.s32 %v3260, 1
      %vm3266 = vcmp.gt.s32.totalorder %v3265, 0
      %v3267 = vsel %vm3266, %v3265, 0
      %v3268 = vshrl.u32 %v3267, 5
      %v3269 = vand.u32 %v3267, 31
      %v3270 = vsub.s32 32, %v3269
      %v3271 = vshrl.u32 683565275, %v3270
      %v3272 = vshll.u32 683565275, %v3269
      %v3273 = vshrl.u32 2475754826, %v3270
      %v3274 = vor.u32 %v3272, %v3273
      %v3275 = vshll.u32 2475754826, %v3269
      %v3276 = vshrl.u32 2131351028, %v3270
      %v3277 = vor.u32 %v3275, %v3276
      %v3278 = vshll.u32 2131351028, %v3269
      %v3279 = vshrl.u32 2102212464, %v3270
      %v3280 = vor.u32 %v3278, %v3279
      %v3281 = vshll.u32 2102212464, %v3269
      %v3282 = vshrl.u32 920167782, %v3270
      %v3283 = vor.u32 %v3281, %v3282
      %v3284 = vshll.u32 920167782, %v3269
      %v3285 = vshrl.u32 1326507024, %v3270
      %v3286 = vor.u32 %v3284, %v3285
      %vm3287 = vcmp.lt.s32.totalorder %v3268, 1
      %vm3288 = vcmp.lt.s32.totalorder %v3268, 2
      %vm3289 = vcmp.lt.s32.totalorder %v3268, 3
      %vm3290 = vcmp.lt.s32.totalorder %v3268, 4
      %v3291 = vsel %vm3287, %v3271, %v3274
      %v3292 = vsel %vm3290, %v3280, 2102212464
      %v3293 = vsel %vm3289, %v3277, %v3292
      %v3294 = vsel %vm3288, %v3291, %v3293
      %v3295 = vsel %vm3287, %v3274, %v3277
      %v3296 = vsel %vm3290, %v3283, 920167782
      %v3297 = vsel %vm3289, %v3280, %v3296
      %v3298 = vsel %vm3288, %v3295, %v3297
      %v3299 = vsel %vm3287, %v3277, %v3280
      %v3300 = vsel %vm3290, %v3286, 1326507024
      %v3301 = vsel %vm3289, %v3283, %v3300
      %v3302 = vsel %vm3288, %v3299, %v3301
      %v3303 = vshll.u32 %v3263, 8
      %v3304 = vmul.u32.u64.compose %v3303, %v3302
      %v3305 = vextract.low.u32 %v3304
      %v3306 = vextract.high.u32 %v3304
      %v3307 = vmul.u32.u64.compose %v3303, %v3298
      %v3308 = vextract.low.u32 %v3307
      %v3309 = vextract.high.u32 %v3307
      %v3310 = vmul.u32 %v3303, %v3294
      %v3311 = vadd.s32 %v3306, %v3308
      %vm3312 = vc.u32 %v3306, %v3308
      %v3313 = vadd.s32 %v3309, 1
      %v3314 = vsel %vm3312, %v3313, %v3309
      %v3315 = vadd.s32 %v3310, %v3314
      %v3316 = vadd.s32 %v3315, 536870912
      %v3317 = vshrl.u32 %v3316, 30
      %v3318 = vshll.u32 %v3317, 30
      %v3319 = vsub.s32 %v3315, %v3318
      %vm3320 = vcmp.lt.s32.totalorder %v3319, 0
      %v3321 = vsub.s32 0, %v3319
      %v3322 = vsel %vm3320, %v3321, %v3319
      %v3323 = vclz %v3322
      %v3324 = vsub.s32 %v3323, 2
      %vm3325 = vcmp.gt.s32.totalorder 0, %v3324
      %v3326 = vsel %vm3325, 0, %v3324
      %v3327 = vsub.s32 32, %v3326
      %v3328 = vshll.u32 %v3319, %v3326
      %v3329 = vshrl.u32 %v3311, %v3327
      %v3330 = vor.u32 %v3328, %v3329
      %v3331 = vsub.s32 4294967266, %v3326
      %v3332 = vadd.s32 %v3331, 127
      %v3333 = vshll.u32 %v3332, 23
      %v3334 = vor.u32 4788187, %v3333
      %v3335 = vand.u32 2147483647, %v3334
      %v3337 = vcvt.s32.f32 %v3330
      %v3338 = vmul.f32 %v3337, %v3335
      %v3339 = vxor.u32 %v3338, 2147483648
      %v3340 = vsel %vm3257, %v3339, %v3338
      %v3341 = vsub.s32 4, %v3317
      %v3342 = vsel %vm3257, %v3341, %v3317
      %v3343 = vsel %vm3256, %v2515, %v3340
      %v3344 = vsel %vm3256, 0, %v3342
      %v3345 = vcosq.f32.pop %v3343
      %v3346 = vsinq.f32.pop %v3343
      %vm3347 = vweird.f32 %v2515
      %v3348 = vadd.s32 %v3344, 3
      %v3349 = vand.u32 %v3348, 3
      %vm3350 = vcmp.lt.s32.totalorder %v3349, 2
      %vm3351 = vcmp.eq.s32.totalorder %v3349, 0
      %v3352 = vxor.u32 %v3346, 2147483648
      %v3353 = vsel %vm3351, %v3345, %v3352
      %vm3354 = vcmp.eq.s32.totalorder %v3349, 2
      %v3355 = vxor.u32 %v3345, 2147483648
      %v3356 = vsel %vm3354, %v3355, %v3346
      %v3357 = vsel %vm3350, %v3353, %v3356
      %v3358 = vsel %vm3347, nan, %v3357
      %v3359 = vand.u32 2147483647, %v2466
      %vm3360 = vcmp.le.f32.partialorder %v3359, 0.7853982
      %vm3361 = vcmp.lt.s32.totalorder %v2466, 0
      %v3362 = vand.u32 %v2466, 2139095040
      %v3363 = vshrl.u32 %v3362, 23
      %v3364 = vsub.s32 %v3363, 127
      %v3365 = vand.u32 2147483647, %v2466
      %v3366 = vand.u32 %v3365, 8388607
      %v3367 = vor.u32 %v3366, 8388608
      %v3368 = vsub.s32 0, %v3367
      %v3369 = vadd.s32 %v3364, 1
      %vm3370 = vcmp.gt.s32.totalorder %v3369, 0
      %v3371 = vsel %vm3370, %v3369, 0
      %v3372 = vshrl.u32 %v3371, 5
      %v3373 = vand.u32 %v3371, 31
      %v3374 = vsub.s32 32, %v3373
      %v3375 = vshrl.u32 683565275, %v3374
      %v3376 = vshll.u32 683565275, %v3373
      %v3377 = vshrl.u32 2475754826, %v3374
      %v3378 = vor.u32 %v3376, %v3377
      %v3379 = vshll.u32 2475754826, %v3373
      %v3380 = vshrl.u32 2131351028, %v3374
      %v3381 = vor.u32 %v3379, %v3380
      %v3382 = vshll.u32 2131351028, %v3373
      %v3383 = vshrl.u32 2102212464, %v3374
      %v3384 = vor.u32 %v3382, %v3383
      %v3385 = vshll.u32 2102212464, %v3373
      %v3386 = vshrl.u32 920167782, %v3374
      %v3387 = vor.u32 %v3385, %v3386
      %v3388 = vshll.u32 920167782, %v3373
      %v3389 = vshrl.u32 1326507024, %v3374
      %v3390 = vor.u32 %v3388, %v3389
      %vm3391 = vcmp.lt.s32.totalorder %v3372, 1
      %vm3392 = vcmp.lt.s32.totalorder %v3372, 2
      %vm3393 = vcmp.lt.s32.totalorder %v3372, 3
      %vm3394 = vcmp.lt.s32.totalorder %v3372, 4
      %v3395 = vsel %vm3391, %v3375, %v3378
      %v3396 = vsel %vm3394, %v3384, 2102212464
      %v3397 = vsel %vm3393, %v3381, %v3396
      %v3398 = vsel %vm3392, %v3395, %v3397
      %v3399 = vsel %vm3391, %v3378, %v3381
      %v3400 = vsel %vm3394, %v3387, 920167782
      %v3401 = vsel %vm3393, %v3384, %v3400
      %v3402 = vsel %vm3392, %v3399, %v3401
      %v3403 = vsel %vm3391, %v3381, %v3384
      %v3404 = vsel %vm3394, %v3390, 1326507024
      %v3405 = vsel %vm3393, %v3387, %v3404
      %v3406 = vsel %vm3392, %v3403, %v3405
      %v3407 = vshll.u32 %v3367, 8
      %v3408 = vmul.u32.u64.compose %v3407, %v3406
      %v3409 = vextract.low.u32 %v3408
      %v3410 = vextract.high.u32 %v3408
      %v3411 = vmul.u32.u64.compose %v3407, %v3402
      %v3412 = vextract.low.u32 %v3411
      %v3413 = vextract.high.u32 %v3411
      %v3414 = vmul.u32 %v3407, %v3398
      %v3415 = vadd.s32 %v3410, %v3412
      %vm3416 = vc.u32 %v3410, %v3412
      %v3417 = vadd.s32 %v3413, 1
      %v3418 = vsel %vm3416, %v3417, %v3413
      %v3419 = vadd.s32 %v3414, %v3418
      %v3420 = vadd.s32 %v3419, 536870912
      %v3421 = vshrl.u32 %v3420, 30
      %v3422 = vshll.u32 %v3421, 30
      %v3423 = vsub.s32 %v3419, %v3422
      %vm3424 = vcmp.lt.s32.totalorder %v3423, 0
      %v3425 = vsub.s32 0, %v3423
      %v3426 = vsel %vm3424, %v3425, %v3423
      %v3427 = vclz %v3426
      %v3428 = vsub.s32 %v3427, 2
      %vm3429 = vcmp.gt.s32.totalorder 0, %v3428
      %v3430 = vsel %vm3429, 0, %v3428
      %v3431 = vsub.s32 32, %v3430
      %v3432 = vshll.u32 %v3423, %v3430
      %v3433 = vshrl.u32 %v3415, %v3431
      %v3434 = vor.u32 %v3432, %v3433
      %v3435 = vsub.s32 4294967266, %v3430
      %v3436 = vadd.s32 %v3435, 127
      %v3437 = vshll.u32 %v3436, 23
      %v3438 = vor.u32 4788187, %v3437
      %v3439 = vand.u32 2147483647, %v3438
      %v3441 = vcvt.s32.f32 %v3434
      %v3442 = vmul.f32 %v3441, %v3439
      %v3443 = vxor.u32 %v3442, 2147483648
      %v3444 = vsel %vm3361, %v3443, %v3442
      %v3445 = vsub.s32 4, %v3421
      %v3446 = vsel %vm3361, %v3445, %v3421
      %v3447 = vsel %vm3360, %v2466, %v3444
      %v3448 = vsel %vm3360, 0, %v3446
      %v3449 = vcosq.f32.pop %v3447
      %v3450 = vsinq.f32.pop %v3447
      %vm3451 = vweird.f32 %v2466
      %v3452 = vadd.s32 %v3448, 3
      %v3453 = vand.u32 %v3452, 3
      %vm3454 = vcmp.lt.s32.totalorder %v3453, 2
      %vm3455 = vcmp.eq.s32.totalorder %v3453, 0
      %v3456 = vxor.u32 %v3450, 2147483648
      %v3457 = vsel %vm3455, %v3449, %v3456
      %vm3458 = vcmp.eq.s32.totalorder %v3453, 2
      %v3459 = vxor.u32 %v3449, 2147483648
      %v3460 = vsel %vm3458, %v3459, %v3450
      %v3461 = vsel %vm3454, %v3457, %v3460
      %v3462 = vsel %vm3451, nan, %v3461
      %v3463 = vand.u32 2147483647, %v2468
      %vm3464 = vcmp.le.f32.partialorder %v3463, 0.7853982
      %vm3465 = vcmp.lt.s32.totalorder %v2468, 0
      %v3466 = vand.u32 %v2468, 2139095040
      %v3467 = vshrl.u32 %v3466, 23
      %v3468 = vsub.s32 %v3467, 127
      %v3469 = vand.u32 2147483647, %v2468
      %v3470 = vand.u32 %v3469, 8388607
      %v3471 = vor.u32 %v3470, 8388608
      %v3472 = vsub.s32 0, %v3471
      %v3473 = vadd.s32 %v3468, 1
      %vm3474 = vcmp.gt.s32.totalorder %v3473, 0
      %v3475 = vsel %vm3474, %v3473, 0
      %v3476 = vshrl.u32 %v3475, 5
      %v3477 = vand.u32 %v3475, 31
      %v3478 = vsub.s32 32, %v3477
      %v3479 = vshrl.u32 683565275, %v3478
      %v3480 = vshll.u32 683565275, %v3477
      %v3481 = vshrl.u32 2475754826, %v3478
      %v3482 = vor.u32 %v3480, %v3481
      %v3483 = vshll.u32 2475754826, %v3477
      %v3484 = vshrl.u32 2131351028, %v3478
      %v3485 = vor.u32 %v3483, %v3484
      %v3486 = vshll.u32 2131351028, %v3477
      %v3487 = vshrl.u32 2102212464, %v3478
      %v3488 = vor.u32 %v3486, %v3487
      %v3489 = vshll.u32 2102212464, %v3477
      %v3490 = vshrl.u32 920167782, %v3478
      %v3491 = vor.u32 %v3489, %v3490
      %v3492 = vshll.u32 920167782, %v3477
      %v3493 = vshrl.u32 1326507024, %v3478
      %v3494 = vor.u32 %v3492, %v3493
      %vm3495 = vcmp.lt.s32.totalorder %v3476, 1
      %vm3496 = vcmp.lt.s32.totalorder %v3476, 2
      %vm3497 = vcmp.lt.s32.totalorder %v3476, 3
      %vm3498 = vcmp.lt.s32.totalorder %v3476, 4
      %v3499 = vsel %vm3495, %v3479, %v3482
      %v3500 = vsel %vm3498, %v3488, 2102212464
      %v3501 = vsel %vm3497, %v3485, %v3500
      %v3502 = vsel %vm3496, %v3499, %v3501
      %v3503 = vsel %vm3495, %v3482, %v3485
      %v3504 = vsel %vm3498, %v3491, 920167782
      %v3505 = vsel %vm3497, %v3488, %v3504
      %v3506 = vsel %vm3496, %v3503, %v3505
      %v3507 = vsel %vm3495, %v3485, %v3488
      %v3508 = vsel %vm3498, %v3494, 1326507024
      %v3509 = vsel %vm3497, %v3491, %v3508
      %v3510 = vsel %vm3496, %v3507, %v3509
      %v3511 = vshll.u32 %v3471, 8
      %v3512 = vmul.u32.u64.compose %v3511, %v3510
      %v3513 = vextract.low.u32 %v3512
      %v3514 = vextract.high.u32 %v3512
      %v3515 = vmul.u32.u64.compose %v3511, %v3506
      %v3516 = vextract.low.u32 %v3515
      %v3517 = vextract.high.u32 %v3515
      %v3518 = vmul.u32 %v3511, %v3502
      %v3519 = vadd.s32 %v3514, %v3516
      %vm3520 = vc.u32 %v3514, %v3516
      %v3521 = vadd.s32 %v3517, 1
      %v3522 = vsel %vm3520, %v3521, %v3517
      %v3523 = vadd.s32 %v3518, %v3522
      %v3524 = vadd.s32 %v3523, 536870912
      %v3525 = vshrl.u32 %v3524, 30
      %v3526 = vshll.u32 %v3525, 30
      %v3527 = vsub.s32 %v3523, %v3526
      %vm3528 = vcmp.lt.s32.totalorder %v3527, 0
      %v3529 = vsub.s32 0, %v3527
      %v3530 = vsel %vm3528, %v3529, %v3527
      %v3531 = vclz %v3530
      %v3532 = vsub.s32 %v3531, 2
      %vm3533 = vcmp.gt.s32.totalorder 0, %v3532
      %v3534 = vsel %vm3533, 0, %v3532
      %v3535 = vsub.s32 32, %v3534
      %v3536 = vshll.u32 %v3527, %v3534
      %v3537 = vshrl.u32 %v3519, %v3535
      %v3538 = vor.u32 %v3536, %v3537
      %v3539 = vsub.s32 4294967266, %v3534
      %v3540 = vadd.s32 %v3539, 127
      %v3541 = vshll.u32 %v3540, 23
      %v3542 = vor.u32 4788187, %v3541
      %v3543 = vand.u32 2147483647, %v3542
      %v3545 = vcvt.s32.f32 %v3538
      %v3546 = vmul.f32 %v3545, %v3543
      %v3547 = vxor.u32 %v3546, 2147483648
      %v3548 = vsel %vm3465, %v3547, %v3546
      %v3549 = vsub.s32 4, %v3525
      %v3550 = vsel %vm3465, %v3549, %v3525
      %v3551 = vsel %vm3464, %v2468, %v3548
      %v3552 = vsel %vm3464, 0, %v3550
      %v3553 = vcosq.f32.pop %v3551
      %v3554 = vsinq.f32.pop %v3551
      %vm3555 = vweird.f32 %v2468
      %v3556 = vadd.s32 %v3552, 3
      %v3557 = vand.u32 %v3556, 3
      %vm3558 = vcmp.lt.s32.totalorder %v3557, 2
      %vm3559 = vcmp.eq.s32.totalorder %v3557, 0
      %v3560 = vxor.u32 %v3554, 2147483648
      %v3561 = vsel %vm3559, %v3553, %v3560
      %vm3562 = vcmp.eq.s32.totalorder %v3557, 2
      %v3563 = vxor.u32 %v3553, 2147483648
      %v3564 = vsel %vm3562, %v3563, %v3554
      %v3565 = vsel %vm3558, %v3561, %v3564
      %v3566 = vsel %vm3555, nan, %v3565
      %v3567 = vand.u32 2147483647, %v2519
      %vm3568 = vcmp.le.f32.partialorder %v3567, 0.7853982
      %vm3569 = vcmp.lt.s32.totalorder %v2519, 0
      %v3570 = vand.u32 %v2519, 2139095040
      %v3571 = vshrl.u32 %v3570, 23
      %v3572 = vsub.s32 %v3571, 127
      %v3573 = vand.u32 2147483647, %v2519
      %v3574 = vand.u32 %v3573, 8388607
      %v3575 = vor.u32 %v3574, 8388608
      %v3576 = vsub.s32 0, %v3575
      %v3577 = vadd.s32 %v3572, 1
      %vm3578 = vcmp.gt.s32.totalorder %v3577, 0
      %v3579 = vsel %vm3578, %v3577, 0
      %v3580 = vshrl.u32 %v3579, 5
      %v3581 = vand.u32 %v3579, 31
      %v3582 = vsub.s32 32, %v3581
      %v3583 = vshrl.u32 683565275, %v3582
      %v3584 = vshll.u32 683565275, %v3581
      %v3585 = vshrl.u32 2475754826, %v3582
      %v3586 = vor.u32 %v3584, %v3585
      %v3587 = vshll.u32 2475754826, %v3581
      %v3588 = vshrl.u32 2131351028, %v3582
      %v3589 = vor.u32 %v3587, %v3588
      %v3590 = vshll.u32 2131351028, %v3581
      %v3591 = vshrl.u32 2102212464, %v3582
      %v3592 = vor.u32 %v3590, %v3591
      %v3593 = vshll.u32 2102212464, %v3581
      %v3594 = vshrl.u32 920167782, %v3582
      %v3595 = vor.u32 %v3593, %v3594
      %v3596 = vshll.u32 920167782, %v3581
      %v3597 = vshrl.u32 1326507024, %v3582
      %v3598 = vor.u32 %v3596, %v3597
      %vm3599 = vcmp.lt.s32.totalorder %v3580, 1
      %vm3600 = vcmp.lt.s32.totalorder %v3580, 2
      %vm3601 = vcmp.lt.s32.totalorder %v3580, 3
      %vm3602 = vcmp.lt.s32.totalorder %v3580, 4
      %v3603 = vsel %vm3599, %v3583, %v3586
      %v3604 = vsel %vm3602, %v3592, 2102212464
      %v3605 = vsel %vm3601, %v3589, %v3604
      %v3606 = vsel %vm3600, %v3603, %v3605
      %v3607 = vsel %vm3599, %v3586, %v3589
      %v3608 = vsel %vm3602, %v3595, 920167782
      %v3609 = vsel %vm3601, %v3592, %v3608
      %v3610 = vsel %vm3600, %v3607, %v3609
      %v3611 = vsel %vm3599, %v3589, %v3592
      %v3612 = vsel %vm3602, %v3598, 1326507024
      %v3613 = vsel %vm3601, %v3595, %v3612
      %v3614 = vsel %vm3600, %v3611, %v3613
      %v3615 = vshll.u32 %v3575, 8
      %v3616 = vmul.u32.u64.compose %v3615, %v3614
      %v3617 = vextract.low.u32 %v3616
      %v3618 = vextract.high.u32 %v3616
      %v3619 = vmul.u32.u64.compose %v3615, %v3610
      %v3620 = vextract.low.u32 %v3619
      %v3621 = vextract.high.u32 %v3619
      %v3622 = vmul.u32 %v3615, %v3606
      %v3623 = vadd.s32 %v3618, %v3620
      %vm3624 = vc.u32 %v3618, %v3620
      %v3625 = vadd.s32 %v3621, 1
      %v3626 = vsel %vm3624, %v3625, %v3621
      %v3627 = vadd.s32 %v3622, %v3626
      %v3628 = vadd.s32 %v3627, 536870912
      %v3629 = vshrl.u32 %v3628, 30
      %v3630 = vshll.u32 %v3629, 30
      %v3631 = vsub.s32 %v3627, %v3630
      %vm3632 = vcmp.lt.s32.totalorder %v3631, 0
      %v3633 = vsub.s32 0, %v3631
      %v3634 = vsel %vm3632, %v3633, %v3631
      %v3635 = vclz %v3634
      %v3636 = vsub.s32 %v3635, 2
      %vm3637 = vcmp.gt.s32.totalorder 0, %v3636
      %v3638 = vsel %vm3637, 0, %v3636
      %v3639 = vsub.s32 32, %v3638
      %v3640 = vshll.u32 %v3631, %v3638
      %v3641 = vshrl.u32 %v3623, %v3639
      %v3642 = vor.u32 %v3640, %v3641
      %v3643 = vsub.s32 4294967266, %v3638
      %v3644 = vadd.s32 %v3643, 127
      %v3645 = vshll.u32 %v3644, 23
      %v3646 = vor.u32 4788187, %v3645
      %v3647 = vand.u32 2147483647, %v3646
      %v3649 = vcvt.s32.f32 %v3642
      %v3650 = vmul.f32 %v3649, %v3647
      %v3651 = vxor.u32 %v3650, 2147483648
      %v3652 = vsel %vm3569, %v3651, %v3650
      %v3653 = vsub.s32 4, %v3629
      %v3654 = vsel %vm3569, %v3653, %v3629
      %v3655 = vsel %vm3568, %v2519, %v3652
      %v3656 = vsel %vm3568, 0, %v3654
      %v3657 = vcosq.f32.pop %v3655
      %v3658 = vsinq.f32.pop %v3655
      %vm3659 = vweird.f32 %v2519
      %v3660 = vadd.s32 %v3656, 3
      %v3661 = vand.u32 %v3660, 3
      %vm3662 = vcmp.lt.s32.totalorder %v3661, 2
      %vm3663 = vcmp.eq.s32.totalorder %v3661, 0
      %v3664 = vxor.u32 %v3658, 2147483648
      %v3665 = vsel %vm3663, %v3657, %v3664
      %vm3666 = vcmp.eq.s32.totalorder %v3661, 2
      %v3667 = vxor.u32 %v3657, 2147483648
      %v3668 = vsel %vm3666, %v3667, %v3658
      %v3669 = vsel %vm3662, %v3665, %v3668
      %v3670 = vsel %vm3659, nan, %v3669
      %v3671 = vand.u32 2147483647, %v2521
      %vm3672 = vcmp.le.f32.partialorder %v3671, 0.7853982
      %vm3673 = vcmp.lt.s32.totalorder %v2521, 0
      %v3674 = vand.u32 %v2521, 2139095040
      %v3675 = vshrl.u32 %v3674, 23
      %v3676 = vsub.s32 %v3675, 127
      %v3677 = vand.u32 2147483647, %v2521
      %v3678 = vand.u32 %v3677, 8388607
      %v3679 = vor.u32 %v3678, 8388608
      %v3680 = vsub.s32 0, %v3679
      %v3681 = vadd.s32 %v3676, 1
      %vm3682 = vcmp.gt.s32.totalorder %v3681, 0
      %v3683 = vsel %vm3682, %v3681, 0
      %v3684 = vshrl.u32 %v3683, 5
      %v3685 = vand.u32 %v3683, 31
      %v3686 = vsub.s32 32, %v3685
      %v3687 = vshrl.u32 683565275, %v3686
      %v3688 = vshll.u32 683565275, %v3685
      %v3689 = vshrl.u32 2475754826, %v3686
      %v3690 = vor.u32 %v3688, %v3689
      %v3691 = vshll.u32 2475754826, %v3685
      %v3692 = vshrl.u32 2131351028, %v3686
      %v3693 = vor.u32 %v3691, %v3692
      %v3694 = vshll.u32 2131351028, %v3685
      %v3695 = vshrl.u32 2102212464, %v3686
      %v3696 = vor.u32 %v3694, %v3695
      %v3697 = vshll.u32 2102212464, %v3685
      %v3698 = vshrl.u32 920167782, %v3686
      %v3699 = vor.u32 %v3697, %v3698
      %v3700 = vshll.u32 920167782, %v3685
      %v3701 = vshrl.u32 1326507024, %v3686
      %v3702 = vor.u32 %v3700, %v3701
      %vm3703 = vcmp.lt.s32.totalorder %v3684, 1
      %vm3704 = vcmp.lt.s32.totalorder %v3684, 2
      %vm3705 = vcmp.lt.s32.totalorder %v3684, 3
      %vm3706 = vcmp.lt.s32.totalorder %v3684, 4
      %v3707 = vsel %vm3703, %v3687, %v3690
      %v3708 = vsel %vm3706, %v3696, 2102212464
      %v3709 = vsel %vm3705, %v3693, %v3708
      %v3710 = vsel %vm3704, %v3707, %v3709
      %v3711 = vsel %vm3703, %v3690, %v3693
      %v3712 = vsel %vm3706, %v3699, 920167782
      %v3713 = vsel %vm3705, %v3696, %v3712
      %v3714 = vsel %vm3704, %v3711, %v3713
      %v3715 = vsel %vm3703, %v3693, %v3696
      %v3716 = vsel %vm3706, %v3702, 1326507024
      %v3717 = vsel %vm3705, %v3699, %v3716
      %v3718 = vsel %vm3704, %v3715, %v3717
      %v3719 = vshll.u32 %v3679, 8
      %v3720 = vmul.u32.u64.compose %v3719, %v3718
      %v3721 = vextract.low.u32 %v3720
      %v3722 = vextract.high.u32 %v3720
      %v3723 = vmul.u32.u64.compose %v3719, %v3714
      %v3724 = vextract.low.u32 %v3723
      %v3725 = vextract.high.u32 %v3723
      %v3726 = vmul.u32 %v3719, %v3710
      %v3727 = vadd.s32 %v3722, %v3724
      %vm3728 = vc.u32 %v3722, %v3724
      %v3729 = vadd.s32 %v3725, 1
      %v3730 = vsel %vm3728, %v3729, %v3725
      %v3731 = vadd.s32 %v3726, %v3730
      %v3732 = vadd.s32 %v3731, 536870912
      %v3733 = vshrl.u32 %v3732, 30
      %v3734 = vshll.u32 %v3733, 30
      %v3735 = vsub.s32 %v3731, %v3734
      %vm3736 = vcmp.lt.s32.totalorder %v3735, 0
      %v3737 = vsub.s32 0, %v3735
      %v3738 = vsel %vm3736, %v3737, %v3735
      %v3739 = vclz %v3738
      %v3740 = vsub.s32 %v3739, 2
      %vm3741 = vcmp.gt.s32.totalorder 0, %v3740
      %v3742 = vsel %vm3741, 0, %v3740
      %v3743 = vsub.s32 32, %v3742
      %v3744 = vshll.u32 %v3735, %v3742
      %v3745 = vshrl.u32 %v3727, %v3743
      %v3746 = vor.u32 %v3744, %v3745
      %v3747 = vsub.s32 4294967266, %v3742
      %v3748 = vadd.s32 %v3747, 127
      %v3749 = vshll.u32 %v3748, 23
      %v3750 = vor.u32 4788187, %v3749
      %v3751 = vand.u32 2147483647, %v3750
      %v3753 = vcvt.s32.f32 %v3746
      %v3754 = vmul.f32 %v3753, %v3751
      %v3755 = vxor.u32 %v3754, 2147483648
      %v3756 = vsel %vm3673, %v3755, %v3754
      %v3757 = vsub.s32 4, %v3733
      %v3758 = vsel %vm3673, %v3757, %v3733
      %v3759 = vsel %vm3672, %v2521, %v3756
      %v3760 = vsel %vm3672, 0, %v3758
      %v3761 = vcosq.f32.pop %v3759
      %v3762 = vsinq.f32.pop %v3759
      %vm3763 = vweird.f32 %v2521
      %v3764 = vadd.s32 %v3760, 3
      %v3765 = vand.u32 %v3764, 3
      %vm3766 = vcmp.lt.s32.totalorder %v3765, 2
      %vm3767 = vcmp.eq.s32.totalorder %v3765, 0
      %v3768 = vxor.u32 %v3762, 2147483648
      %v3769 = vsel %vm3767, %v3761, %v3768
      %vm3770 = vcmp.eq.s32.totalorder %v3765, 2
      %v3771 = vxor.u32 %v3761, 2147483648
      %v3772 = vsel %vm3770, %v3771, %v3762
      %v3773 = vsel %vm3766, %v3769, %v3772
      %v3774 = vsel %vm3763, nan, %v3773
      %v3775 = vand.u32 2147483647, %v2470
      %vm3776 = vcmp.le.f32.partialorder %v3775, 0.7853982
      %vm3777 = vcmp.lt.s32.totalorder %v2470, 0
      %v3778 = vand.u32 %v2470, 2139095040
      %v3779 = vshrl.u32 %v3778, 23
      %v3780 = vsub.s32 %v3779, 127
      %v3781 = vand.u32 2147483647, %v2470
      %v3782 = vand.u32 %v3781, 8388607
      %v3783 = vor.u32 %v3782, 8388608
      %v3784 = vsub.s32 0, %v3783
      %v3785 = vadd.s32 %v3780, 1
      %vm3786 = vcmp.gt.s32.totalorder %v3785, 0
      %v3787 = vsel %vm3786, %v3785, 0
      %v3788 = vshrl.u32 %v3787, 5
      %v3789 = vand.u32 %v3787, 31
      %v3790 = vsub.s32 32, %v3789
      %v3791 = vshrl.u32 683565275, %v3790
      %v3792 = vshll.u32 683565275, %v3789
      %v3793 = vshrl.u32 2475754826, %v3790
      %v3794 = vor.u32 %v3792, %v3793
      %v3795 = vshll.u32 2475754826, %v3789
      %v3796 = vshrl.u32 2131351028, %v3790
      %v3797 = vor.u32 %v3795, %v3796
      %v3798 = vshll.u32 2131351028, %v3789
      %v3799 = vshrl.u32 2102212464, %v3790
      %v3800 = vor.u32 %v3798, %v3799
      %v3801 = vshll.u32 2102212464, %v3789
      %v3802 = vshrl.u32 920167782, %v3790
      %v3803 = vor.u32 %v3801, %v3802
      %v3804 = vshll.u32 920167782, %v3789
      %v3805 = vshrl.u32 1326507024, %v3790
      %v3806 = vor.u32 %v3804, %v3805
      %vm3807 = vcmp.lt.s32.totalorder %v3788, 1
      %vm3808 = vcmp.lt.s32.totalorder %v3788, 2
      %vm3809 = vcmp.lt.s32.totalorder %v3788, 3
      %vm3810 = vcmp.lt.s32.totalorder %v3788, 4
      %v3811 = vsel %vm3807, %v3791, %v3794
      %v3812 = vsel %vm3810, %v3800, 2102212464
      %v3813 = vsel %vm3809, %v3797, %v3812
      %v3814 = vsel %vm3808, %v3811, %v3813
      %v3815 = vsel %vm3807, %v3794, %v3797
      %v3816 = vsel %vm3810, %v3803, 920167782
      %v3817 = vsel %vm3809, %v3800, %v3816
      %v3818 = vsel %vm3808, %v3815, %v3817
      %v3819 = vsel %vm3807, %v3797, %v3800
      %v3820 = vsel %vm3810, %v3806, 1326507024
      %v3821 = vsel %vm3809, %v3803, %v3820
      %v3822 = vsel %vm3808, %v3819, %v3821
      %v3823 = vshll.u32 %v3783, 8
      %v3824 = vmul.u32.u64.compose %v3823, %v3822
      %v3825 = vextract.low.u32 %v3824
      %v3826 = vextract.high.u32 %v3824
      %v3827 = vmul.u32.u64.compose %v3823, %v3818
      %v3828 = vextract.low.u32 %v3827
      %v3829 = vextract.high.u32 %v3827
      %v3830 = vmul.u32 %v3823, %v3814
      %v3831 = vadd.s32 %v3826, %v3828
      %vm3832 = vc.u32 %v3826, %v3828
      %v3833 = vadd.s32 %v3829, 1
      %v3834 = vsel %vm3832, %v3833, %v3829
      %v3835 = vadd.s32 %v3830, %v3834
      %v3836 = vadd.s32 %v3835, 536870912
      %v3837 = vshrl.u32 %v3836, 30
      %v3838 = vshll.u32 %v3837, 30
      %v3839 = vsub.s32 %v3835, %v3838
      %vm3840 = vcmp.lt.s32.totalorder %v3839, 0
      %v3841 = vsub.s32 0, %v3839
      %v3842 = vsel %vm3840, %v3841, %v3839
      %v3843 = vclz %v3842
      %v3844 = vsub.s32 %v3843, 2
      %vm3845 = vcmp.gt.s32.totalorder 0, %v3844
      %v3846 = vsel %vm3845, 0, %v3844
      %v3847 = vsub.s32 32, %v3846
      %v3848 = vshll.u32 %v3839, %v3846
      %v3849 = vshrl.u32 %v3831, %v3847
      %v3850 = vor.u32 %v3848, %v3849
      %v3851 = vsub.s32 4294967266, %v3846
      %v3852 = vadd.s32 %v3851, 127
      %v3853 = vshll.u32 %v3852, 23
      %v3854 = vor.u32 4788187, %v3853
      %v3855 = vand.u32 2147483647, %v3854
      %v3857 = vcvt.s32.f32 %v3850
      %v3858 = vmul.f32 %v3857, %v3855
      %v3859 = vxor.u32 %v3858, 2147483648
      %v3860 = vsel %vm3777, %v3859, %v3858
      %v3861 = vsub.s32 4, %v3837
      %v3862 = vsel %vm3777, %v3861, %v3837
      %v3863 = vsel %vm3776, %v2470, %v3860
      %v3864 = vsel %vm3776, 0, %v3862
      %v3865 = vcosq.f32.pop %v3863
      %v3866 = vsinq.f32.pop %v3863
      %vm3867 = vweird.f32 %v2470
      %v3868 = vadd.s32 %v3864, 3
      %v3869 = vand.u32 %v3868, 3
      %vm3870 = vcmp.lt.s32.totalorder %v3869, 2
      %vm3871 = vcmp.eq.s32.totalorder %v3869, 0
      %v3872 = vxor.u32 %v3866, 2147483648
      %v3873 = vsel %vm3871, %v3865, %v3872
      %vm3874 = vcmp.eq.s32.totalorder %v3869, 2
      %v3875 = vxor.u32 %v3865, 2147483648
      %v3876 = vsel %vm3874, %v3875, %v3866
      %v3877 = vsel %vm3870, %v3873, %v3876
      %v3878 = vsel %vm3867, nan, %v3877
      %v3879 = vand.u32 2147483647, %v2472
      %vm3880 = vcmp.le.f32.partialorder %v3879, 0.7853982
      %vm3881 = vcmp.lt.s32.totalorder %v2472, 0
      %v3882 = vand.u32 %v2472, 2139095040
      %v3883 = vshrl.u32 %v3882, 23
      %v3884 = vsub.s32 %v3883, 127
      %v3885 = vand.u32 2147483647, %v2472
      %v3886 = vand.u32 %v3885, 8388607
      %v3887 = vor.u32 %v3886, 8388608
      %v3888 = vsub.s32 0, %v3887
      %v3889 = vadd.s32 %v3884, 1
      %vm3890 = vcmp.gt.s32.totalorder %v3889, 0
      %v3891 = vsel %vm3890, %v3889, 0
      %v3892 = vshrl.u32 %v3891, 5
      %v3893 = vand.u32 %v3891, 31
      %v3894 = vsub.s32 32, %v3893
      %v3895 = vshrl.u32 683565275, %v3894
      %v3896 = vshll.u32 683565275, %v3893
      %v3897 = vshrl.u32 2475754826, %v3894
      %v3898 = vor.u32 %v3896, %v3897
      %v3899 = vshll.u32 2475754826, %v3893
      %v3900 = vshrl.u32 2131351028, %v3894
      %v3901 = vor.u32 %v3899, %v3900
      %v3902 = vshll.u32 2131351028, %v3893
      %v3903 = vshrl.u32 2102212464, %v3894
      %v3904 = vor.u32 %v3902, %v3903
      %v3905 = vshll.u32 2102212464, %v3893
      %v3906 = vshrl.u32 920167782, %v3894
      %v3907 = vor.u32 %v3905, %v3906
      %v3908 = vshll.u32 920167782, %v3893
      %v3909 = vshrl.u32 1326507024, %v3894
      %v3910 = vor.u32 %v3908, %v3909
      %vm3911 = vcmp.lt.s32.totalorder %v3892, 1
      %vm3912 = vcmp.lt.s32.totalorder %v3892, 2
      %vm3913 = vcmp.lt.s32.totalorder %v3892, 3
      %vm3914 = vcmp.lt.s32.totalorder %v3892, 4
      %v3915 = vsel %vm3911, %v3895, %v3898
      %v3916 = vsel %vm3914, %v3904, 2102212464
      %v3917 = vsel %vm3913, %v3901, %v3916
      %v3918 = vsel %vm3912, %v3915, %v3917
      %v3919 = vsel %vm3911, %v3898, %v3901
      %v3920 = vsel %vm3914, %v3907, 920167782
      %v3921 = vsel %vm3913, %v3904, %v3920
      %v3922 = vsel %vm3912, %v3919, %v3921
      %v3923 = vsel %vm3911, %v3901, %v3904
      %v3924 = vsel %vm3914, %v3910, 1326507024
      %v3925 = vsel %vm3913, %v3907, %v3924
      %v3926 = vsel %vm3912, %v3923, %v3925
      %v3927 = vshll.u32 %v3887, 8
      %v3928 = vmul.u32.u64.compose %v3927, %v3926
      %v3929 = vextract.low.u32 %v3928
      %v3930 = vextract.high.u32 %v3928
      %v3931 = vmul.u32.u64.compose %v3927, %v3922
      %v3932 = vextract.low.u32 %v3931
      %v3933 = vextract.high.u32 %v3931
      %v3934 = vmul.u32 %v3927, %v3918
      %v3935 = vadd.s32 %v3930, %v3932
      %vm3936 = vc.u32 %v3930, %v3932
      %v3937 = vadd.s32 %v3933, 1
      %v3938 = vsel %vm3936, %v3937, %v3933
      %v3939 = vadd.s32 %v3934, %v3938
      %v3940 = vadd.s32 %v3939, 536870912
      %v3941 = vshrl.u32 %v3940, 30
      %v3942 = vshll.u32 %v3941, 30
      %v3943 = vsub.s32 %v3939, %v3942
      %vm3944 = vcmp.lt.s32.totalorder %v3943, 0
      %v3945 = vsub.s32 0, %v3943
      %v3946 = vsel %vm3944, %v3945, %v3943
      %v3947 = vclz %v3946
      %v3948 = vsub.s32 %v3947, 2
      %vm3949 = vcmp.gt.s32.totalorder 0, %v3948
      %v3950 = vsel %vm3949, 0, %v3948
      %v3951 = vsub.s32 32, %v3950
      %v3952 = vshll.u32 %v3943, %v3950
      %v3953 = vshrl.u32 %v3935, %v3951
      %v3954 = vor.u32 %v3952, %v3953
      %v3955 = vsub.s32 4294967266, %v3950
      %v3956 = vadd.s32 %v3955, 127
      %v3957 = vshll.u32 %v3956, 23
      %v3958 = vor.u32 4788187, %v3957
      %v3959 = vand.u32 2147483647, %v3958
      %v3961 = vcvt.s32.f32 %v3954
      %v3962 = vmul.f32 %v3961, %v3959
      %v3963 = vxor.u32 %v3962, 2147483648
      %v3964 = vsel %vm3881, %v3963, %v3962
      %v3965 = vsub.s32 4, %v3941
      %v3966 = vsel %vm3881, %v3965, %v3941
      %v3967 = vsel %vm3880, %v2472, %v3964
      %v3968 = vsel %vm3880, 0, %v3966
      %v3969 = vcosq.f32.pop %v3967
      %v3970 = vsinq.f32.pop %v3967
      %vm3971 = vweird.f32 %v2472
      %v3972 = vadd.s32 %v3968, 3
      %v3973 = vand.u32 %v3972, 3
      %vm3974 = vcmp.lt.s32.totalorder %v3973, 2
      %vm3975 = vcmp.eq.s32.totalorder %v3973, 0
      %v3976 = vxor.u32 %v3970, 2147483648
      %v3977 = vsel %vm3975, %v3969, %v3976
      %vm3978 = vcmp.eq.s32.totalorder %v3973, 2
      %v3979 = vxor.u32 %v3969, 2147483648
      %v3980 = vsel %vm3978, %v3979, %v3970
      %v3981 = vsel %vm3974, %v3977, %v3980
      %v3982 = vsel %vm3971, nan, %v3981
      %v3983 = vand.u32 2147483647, %v2523
      %vm3984 = vcmp.le.f32.partialorder %v3983, 0.7853982
      %vm3985 = vcmp.lt.s32.totalorder %v2523, 0
      %v3986 = vand.u32 %v2523, 2139095040
      %v3987 = vshrl.u32 %v3986, 23
      %v3988 = vsub.s32 %v3987, 127
      %v3989 = vand.u32 2147483647, %v2523
      %v3990 = vand.u32 %v3989, 8388607
      %v3991 = vor.u32 %v3990, 8388608
      %v3992 = vsub.s32 0, %v3991
      %v3993 = vadd.s32 %v3988, 1
      %vm3994 = vcmp.gt.s32.totalorder %v3993, 0
      %v3995 = vsel %vm3994, %v3993, 0
      %v3996 = vshrl.u32 %v3995, 5
      %v3997 = vand.u32 %v3995, 31
      %v3998 = vsub.s32 32, %v3997
      %v3999 = vshrl.u32 683565275, %v3998
      %v4000 = vshll.u32 683565275, %v3997
      %v4001 = vshrl.u32 2475754826, %v3998
      %v4002 = vor.u32 %v4000, %v4001
      %v4003 = vshll.u32 2475754826, %v3997
      %v4004 = vshrl.u32 2131351028, %v3998
      %v4005 = vor.u32 %v4003, %v4004
      %v4006 = vshll.u32 2131351028, %v3997
      %v4007 = vshrl.u32 2102212464, %v3998
      %v4008 = vor.u32 %v4006, %v4007
      %v4009 = vshll.u32 2102212464, %v3997
      %v4010 = vshrl.u32 920167782, %v3998
      %v4011 = vor.u32 %v4009, %v4010
      %v4012 = vshll.u32 920167782, %v3997
      %v4013 = vshrl.u32 1326507024, %v3998
      %v4014 = vor.u32 %v4012, %v4013
      %vm4015 = vcmp.lt.s32.totalorder %v3996, 1
      %vm4016 = vcmp.lt.s32.totalorder %v3996, 2
      %vm4017 = vcmp.lt.s32.totalorder %v3996, 3
      %vm4018 = vcmp.lt.s32.totalorder %v3996, 4
      %v4019 = vsel %vm4015, %v3999, %v4002
      %v4020 = vsel %vm4018, %v4008, 2102212464
      %v4021 = vsel %vm4017, %v4005, %v4020
      %v4022 = vsel %vm4016, %v4019, %v4021
      %v4023 = vsel %vm4015, %v4002, %v4005
      %v4024 = vsel %vm4018, %v4011, 920167782
      %v4025 = vsel %vm4017, %v4008, %v4024
      %v4026 = vsel %vm4016, %v4023, %v4025
      %v4027 = vsel %vm4015, %v4005, %v4008
      %v4028 = vsel %vm4018, %v4014, 1326507024
      %v4029 = vsel %vm4017, %v4011, %v4028
      %v4030 = vsel %vm4016, %v4027, %v4029
      %v4031 = vshll.u32 %v3991, 8
      %v4032 = vmul.u32.u64.compose %v4031, %v4030
      %v4033 = vextract.low.u32 %v4032
      %v4034 = vextract.high.u32 %v4032
      %v4035 = vmul.u32.u64.compose %v4031, %v4026
      %v4036 = vextract.low.u32 %v4035
      %v4037 = vextract.high.u32 %v4035
      %v4038 = vmul.u32 %v4031, %v4022
      %v4039 = vadd.s32 %v4034, %v4036
      %vm4040 = vc.u32 %v4034, %v4036
      %v4041 = vadd.s32 %v4037, 1
      %v4042 = vsel %vm4040, %v4041, %v4037
      %v4043 = vadd.s32 %v4038, %v4042
      %v4044 = vadd.s32 %v4043, 536870912
      %v4045 = vshrl.u32 %v4044, 30
      %v4046 = vshll.u32 %v4045, 30
      %v4047 = vsub.s32 %v4043, %v4046
      %vm4048 = vcmp.lt.s32.totalorder %v4047, 0
      %v4049 = vsub.s32 0, %v4047
      %v4050 = vsel %vm4048, %v4049, %v4047
      %v4051 = vclz %v4050
      %v4052 = vsub.s32 %v4051, 2
      %vm4053 = vcmp.gt.s32.totalorder 0, %v4052
      %v4054 = vsel %vm4053, 0, %v4052
      %v4055 = vsub.s32 32, %v4054
      %v4056 = vshll.u32 %v4047, %v4054
      %v4057 = vshrl.u32 %v4039, %v4055
      %v4058 = vor.u32 %v4056, %v4057
      %v4059 = vsub.s32 4294967266, %v4054
      %v4060 = vadd.s32 %v4059, 127
      %v4061 = vshll.u32 %v4060, 23
      %v4062 = vor.u32 4788187, %v4061
      %v4063 = vand.u32 2147483647, %v4062
      %v4065 = vcvt.s32.f32 %v4058
      %v4066 = vmul.f32 %v4065, %v4063
      %v4067 = vxor.u32 %v4066, 2147483648
      %v4068 = vsel %vm3985, %v4067, %v4066
      %v4069 = vsub.s32 4, %v4045
      %v4070 = vsel %vm3985, %v4069, %v4045
      %v4071 = vsel %vm3984, %v2523, %v4068
      %v4072 = vsel %vm3984, 0, %v4070
      %v4073 = vcosq.f32.pop %v4071
      %v4074 = vsinq.f32.pop %v4071
      %vm4075 = vweird.f32 %v2523
      %v4076 = vadd.s32 %v4072, 3
      %v4077 = vand.u32 %v4076, 3
      %vm4078 = vcmp.lt.s32.totalorder %v4077, 2
      %vm4079 = vcmp.eq.s32.totalorder %v4077, 0
      %v4080 = vxor.u32 %v4074, 2147483648
      %v4081 = vsel %vm4079, %v4073, %v4080
      %vm4082 = vcmp.eq.s32.totalorder %v4077, 2
      %v4083 = vxor.u32 %v4073, 2147483648
      %v4084 = vsel %vm4082, %v4083, %v4074
      %v4085 = vsel %vm4078, %v4081, %v4084
      %v4086 = vsel %vm4075, nan, %v4085
      %v4087 = vand.u32 2147483647, %v2525
      %vm4088 = vcmp.le.f32.partialorder %v4087, 0.7853982
      %vm4089 = vcmp.lt.s32.totalorder %v2525, 0
      %v4090 = vand.u32 %v2525, 2139095040
      %v4091 = vshrl.u32 %v4090, 23
      %v4092 = vsub.s32 %v4091, 127
      %v4093 = vand.u32 2147483647, %v2525
      %v4094 = vand.u32 %v4093, 8388607
      %v4095 = vor.u32 %v4094, 8388608
      %v4096 = vsub.s32 0, %v4095
      %v4097 = vadd.s32 %v4092, 1
      %vm4098 = vcmp.gt.s32.totalorder %v4097, 0
      %v4099 = vsel %vm4098, %v4097, 0
      %v4100 = vshrl.u32 %v4099, 5
      %v4101 = vand.u32 %v4099, 31
      %v4102 = vsub.s32 32, %v4101
      %v4103 = vshrl.u32 683565275, %v4102
      %v4104 = vshll.u32 683565275, %v4101
      %v4105 = vshrl.u32 2475754826, %v4102
      %v4106 = vor.u32 %v4104, %v4105
      %v4107 = vshll.u32 2475754826, %v4101
      %v4108 = vshrl.u32 2131351028, %v4102
      %v4109 = vor.u32 %v4107, %v4108
      %v4110 = vshll.u32 2131351028, %v4101
      %v4111 = vshrl.u32 2102212464, %v4102
      %v4112 = vor.u32 %v4110, %v4111
      %v4113 = vshll.u32 2102212464, %v4101
      %v4114 = vshrl.u32 920167782, %v4102
      %v4115 = vor.u32 %v4113, %v4114
      %v4116 = vshll.u32 920167782, %v4101
      %v4117 = vshrl.u32 1326507024, %v4102
      %v4118 = vor.u32 %v4116, %v4117
      %vm4119 = vcmp.lt.s32.totalorder %v4100, 1
      %vm4120 = vcmp.lt.s32.totalorder %v4100, 2
      %vm4121 = vcmp.lt.s32.totalorder %v4100, 3
      %vm4122 = vcmp.lt.s32.totalorder %v4100, 4
      %v4123 = vsel %vm4119, %v4103, %v4106
      %v4124 = vsel %vm4122, %v4112, 2102212464
      %v4125 = vsel %vm4121, %v4109, %v4124
      %v4126 = vsel %vm4120, %v4123, %v4125
      %v4127 = vsel %vm4119, %v4106, %v4109
      %v4128 = vsel %vm4122, %v4115, 920167782
      %v4129 = vsel %vm4121, %v4112, %v4128
      %v4130 = vsel %vm4120, %v4127, %v4129
      %v4131 = vsel %vm4119, %v4109, %v4112
      %v4132 = vsel %vm4122, %v4118, 1326507024
      %v4133 = vsel %vm4121, %v4115, %v4132
      %v4134 = vsel %vm4120, %v4131, %v4133
      %v4135 = vshll.u32 %v4095, 8
      %v4136 = vmul.u32.u64.compose %v4135, %v4134
      %v4137 = vextract.low.u32 %v4136
      %v4138 = vextract.high.u32 %v4136
      %v4139 = vmul.u32.u64.compose %v4135, %v4130
      %v4140 = vextract.low.u32 %v4139
      %v4141 = vextract.high.u32 %v4139
      %v4142 = vmul.u32 %v4135, %v4126
      %v4143 = vadd.s32 %v4138, %v4140
      %vm4144 = vc.u32 %v4138, %v4140
      %v4145 = vadd.s32 %v4141, 1
      %v4146 = vsel %vm4144, %v4145, %v4141
      %v4147 = vadd.s32 %v4142, %v4146
      %v4148 = vadd.s32 %v4147, 536870912
      %v4149 = vshrl.u32 %v4148, 30
      %v4150 = vshll.u32 %v4149, 30
      %v4151 = vsub.s32 %v4147, %v4150
      %vm4152 = vcmp.lt.s32.totalorder %v4151, 0
      %v4153 = vsub.s32 0, %v4151
      %v4154 = vsel %vm4152, %v4153, %v4151
      %v4155 = vclz %v4154
      %v4156 = vsub.s32 %v4155, 2
      %vm4157 = vcmp.gt.s32.totalorder 0, %v4156
      %v4158 = vsel %vm4157, 0, %v4156
      %v4159 = vsub.s32 32, %v4158
      %v4160 = vshll.u32 %v4151, %v4158
      %v4161 = vshrl.u32 %v4143, %v4159
      %v4162 = vor.u32 %v4160, %v4161
      %v4163 = vsub.s32 4294967266, %v4158
      %v4164 = vadd.s32 %v4163, 127
      %v4165 = vshll.u32 %v4164, 23
      %v4166 = vor.u32 4788187, %v4165
      %v4167 = vand.u32 2147483647, %v4166
      %v4169 = vcvt.s32.f32 %v4162
      %v4170 = vmul.f32 %v4169, %v4167
      %v4171 = vxor.u32 %v4170, 2147483648
      %v4172 = vsel %vm4089, %v4171, %v4170
      %v4173 = vsub.s32 4, %v4149
      %v4174 = vsel %vm4089, %v4173, %v4149
      %v4175 = vsel %vm4088, %v2525, %v4172
      %v4176 = vsel %vm4088, 0, %v4174
      %v4177 = vcosq.f32.pop %v4175
      %v4178 = vsinq.f32.pop %v4175
      %vm4179 = vweird.f32 %v2525
      %v4180 = vadd.s32 %v4176, 3
      %v4181 = vand.u32 %v4180, 3
      %vm4182 = vcmp.lt.s32.totalorder %v4181, 2
      %vm4183 = vcmp.eq.s32.totalorder %v4181, 0
      %v4184 = vxor.u32 %v4178, 2147483648
      %v4185 = vsel %vm4183, %v4177, %v4184
      %vm4186 = vcmp.eq.s32.totalorder %v4181, 2
      %v4187 = vxor.u32 %v4177, 2147483648
      %v4188 = vsel %vm4186, %v4187, %v4178
      %v4189 = vsel %vm4182, %v4185, %v4188
      %v4190 = vsel %vm4179, nan, %v4189
      %s4191 = scalar_lea.vmem %s2, 16
      %v4192 = vld [vmem:[%s4191] sm:$0xf]
      %v4193 = vld [vmem:[%s4191 + $0x4] sm:$0xf]
      %v4194 = vld [vmem:[%s4191 + $0x8] sm:$0xf]
      %v4195 = vld [vmem:[%s4191 + $0xc] sm:$0xf]
      %s4196 = scalar_lea.vmem %s3, 32
      %v4197 = vld [vmem:[%s4196] sm:$0xff]
      %v4198 = vld [vmem:[%s4196 + $0x8] sm:$0xff]
      %v4199 = vld [vmem:[%s4196 + $0x10] sm:$0xff]
      %v4200 = vld [vmem:[%s4196 + $0x18] sm:$0xff]
      %v4201 = vpack.c.bf16 %v3046, %v2630
      %v4202 = vpack.c.bf16 %v3150, %v2734
      %v4203 = vpack.c.bf16 %v3254, %v2838
      %v4204 = vpack.c.bf16 %v3358, %v2942
      %v4205 = vpack.c.bf16 %v3878, %v3462
      %v4206 = vpack.c.bf16 %v3982, %v3566
      %v4207 = vpack.c.bf16 %v4086, %v3670
      %v4208 = vpack.c.bf16 %v4190, %v3774
      %4210 = vset.pattern.permute.xlu0 0
      %4211 = vperm.xlu0 %4210, %v4197
      %v4212 = vpop.permute.xlu0 %4211
      %4215 = vset.pattern.permute.xlu0 0
      %4216 = vperm.xlu0 %4215, %v4198
      %v4217 = vpop.permute.xlu0 %4216
      %4220 = vset.pattern.permute.xlu0 0
      %4221 = vperm.xlu0 %4220, %v4199
      %v4222 = vpop.permute.xlu0 %4221
      %4225 = vset.pattern.permute.xlu0 0
      %4226 = vperm.xlu0 %4225, %v4200
      %v4227 = vpop.permute.xlu0 %4226
      %v4233 = vunpack.c.l.b16 %v4192
      %v4234 = vunpack.c.l.b16 %v4193
      %v4235 = vunpack.c.l.b16 %v4194
      %v4236 = vunpack.c.l.b16 %v4195
      %v4237 = vpack.c.b16 %v4234, %v4233
      %v4238 = vpack.c.b16 %v4236, %v4235
      %v4240 = vsel %vm2414, %v4237, 0
      %v4243 = vsel %vm2414, %v4238, 0
      %4245 = vmatprep.subr.bf16.mxu0 0
      %4246 = vmatpush1.bf16.msra.mxu0 0
      %4247 = vmatprep.subr.bf16.mxu0 0
      %4248 = vmatpush1.bf16.msra.mxu0 0
      %4249 = vmatprep.subr.bf16.mxu0 0
      %4250 = vmatpush1.bf16.msra.mxu0 0
      %4251 = vmatprep.subr.bf16.mxu0 0
      %4252 = vmatpush1.bf16.msra.mxu0 0
      %4253 = vmatprep.subr.bf16.mxu0 0
      %4254 = vmatpush1.bf16.msra.mxu0 0
      %4255 = vmatprep.subr.bf16.mxu0 0
      %4256 = vmatpush1.bf16.msra.mxu0 0
      %4257 = vmatprep.subr.bf16.mxu0 %v4206
      %4258 = vmatpush1.bf16.msra.mxu0 %v4205
      %4259 = vmatprep.subr.bf16.mxu0 %v4202
      %4260 = vmatpush1.bf16.msra.mxu0 %v4201
      %4261 = vmatprep.subr.bf16.mxu0 0
      %4262 = vmatpush2.bf16.msra.mxu0 0
      %4263 = vmatprep.subr.bf16.mxu0 0
      %4264 = vmatpush2.bf16.msra.mxu0 0
      %4265 = vmatprep.subr.bf16.mxu0 0
      %4266 = vmatpush2.bf16.msra.mxu0 0
      %4267 = vmatprep.subr.bf16.mxu0 0
      %4268 = vmatpush2.bf16.msra.mxu0 0
      %4269 = vmatprep.subr.bf16.mxu0 0
      %4270 = vmatpush2.bf16.msra.mxu0 0
      %4271 = vmatprep.subr.bf16.mxu0 0
      %4272 = vmatpush2.bf16.msra.mxu0 0
      %4273 = vmatprep.subr.bf16.mxu0 0
      %4274 = vmatpush2.bf16.msra.mxu0 0
      %4275 = vmatprep.subr.bf16.mxu0 0
      %4276 = vmatpush2.bf16.msra.mxu0 0
      %4277 = vmatprep.mubr.bf16.mxu0 0
      %4278 = vmatmul.mubr.bf16.gmra.mxu0 %v4240
      %v4279 = vpop.f32.mrf.mxu0
      %v4280 = vadd.f32 %v4212, %v4279
      %v4281 = vpop.f32.mrf.mxu0
      %v4282 = vadd.f32 %v4212, %v4281
      %v4283 = vpop.f32.mrf.mxu0
      %v4284 = vadd.f32 %v4217, %v4283
      %v4285 = vpop.f32.mrf.mxu0
      %v4286 = vadd.f32 %v4217, %v4285
      %4287 = vmatprep.mubr.bf16.mxu0 0
      %4288 = vmatmul.mubr.bf16.gmra.mxu0 %v4243
      %v4289 = vpop.f32.mrf.mxu0
      %v4290 = vadd.f32 %v4222, %v4289
      %v4291 = vpop.f32.mrf.mxu0
      %v4292 = vadd.f32 %v4222, %v4291
      %v4293 = vpop.f32.mrf.mxu0
      %v4294 = vadd.f32 %v4227, %v4293
      %v4295 = vpop.f32.mrf.mxu0
      %v4296 = vadd.f32 %v4227, %v4295
      %4297 = vdwg.mxu0
      %4298 = vmatprep.subr.bf16.mxu0 0
      %4299 = vmatpush1.bf16.msra.mxu0 0
      %4300 = vmatprep.subr.bf16.mxu0 0
      %4301 = vmatpush1.bf16.msra.mxu0 0
      %4302 = vmatprep.subr.bf16.mxu0 0
      %4303 = vmatpush1.bf16.msra.mxu0 0
      %4304 = vmatprep.subr.bf16.mxu0 0
      %4305 = vmatpush1.bf16.msra.mxu0 0
      %4306 = vmatprep.subr.bf16.mxu0 0
      %4307 = vmatpush1.bf16.msra.mxu0 0
      %4308 = vmatprep.subr.bf16.mxu0 0
      %4309 = vmatpush1.bf16.msra.mxu0 0
      %4310 = vmatprep.subr.bf16.mxu0 %v4208
      %4311 = vmatpush1.bf16.msra.mxu0 %v4207
      %4312 = vmatprep.subr.bf16.mxu0 %v4204
      %4313 = vmatpush1.bf16.msra.mxu0 %v4203
      %4314 = vmatprep.subr.bf16.mxu0 0
      %4315 = vmatpush2.bf16.msra.mxu0 0
      %4316 = vmatprep.subr.bf16.mxu0 0
      %4317 = vmatpush2.bf16.msra.mxu0 0
      %4318 = vmatprep.subr.bf16.mxu0 0
      %4319 = vmatpush2.bf16.msra.mxu0 0
      %4320 = vmatprep.subr.bf16.mxu0 0
      %4321 = vmatpush2.bf16.msra.mxu0 0
      %4322 = vmatprep.subr.bf16.mxu0 0
      %4323 = vmatpush2.bf16.msra.mxu0 0
      %4324 = vmatprep.subr.bf16.mxu0 0
      %4325 = vmatpush2.bf16.msra.mxu0 0
      %4326 = vmatprep.subr.bf16.mxu0 0
      %4327 = vmatpush2.bf16.msra.mxu0 0
      %4328 = vmatprep.subr.bf16.mxu0 0
      %4329 = vmatpush2.bf16.msra.mxu0 0
      %4330 = vmatprep.mubr.bf16.mxu0 0
      %4331 = vmatmul.mubr.bf16.gmra.mxu0 %v4240
      %v4332 = vpop.f32.mrf.mxu0
      %v4333 = vadd.f32 %v4212, %v4332
      %v4334 = vpop.f32.mrf.mxu0
      %v4335 = vadd.f32 %v4212, %v4334
      %v4336 = vpop.f32.mrf.mxu0
      %v4337 = vadd.f32 %v4217, %v4336
      %v4338 = vpop.f32.mrf.mxu0
      %v4339 = vadd.f32 %v4217, %v4338
      %4340 = vmatprep.mubr.bf16.mxu0 0
      %4341 = vmatmul.mubr.bf16.gmra.mxu0 %v4243
      %v4342 = vpop.f32.mrf.mxu0
      %v4343 = vadd.f32 %v4222, %v4342
      %v4344 = vpop.f32.mrf.mxu0
      %v4345 = vadd.f32 %v4222, %v4344
      %v4346 = vpop.f32.mrf.mxu0
      %v4347 = vadd.f32 %v4227, %v4346
      %v4348 = vpop.f32.mrf.mxu0
      %v4349 = vadd.f32 %v4227, %v4348
      %4350 = vdwg.mxu0
      %v4351 = vand.u32 2147483647, %v4280
      %vm4352 = vcmp.le.f32.partialorder %v4351, 0.7853982
      %vm4353 = vcmp.lt.s32.totalorder %v4280, 0
      %v4354 = vand.u32 %v4280, 2139095040
      %v4355 = vshrl.u32 %v4354, 23
      %v4356 = vsub.s32 %v4355, 127
      %v4357 = vand.u32 2147483647, %v4280
      %v4358 = vand.u32 %v4357, 8388607
      %v4359 = vor.u32 %v4358, 8388608
      %v4360 = vsub.s32 0, %v4359
      %v4361 = vadd.s32 %v4356, 1
      %vm4362 = vcmp.gt.s32.totalorder %v4361, 0
      %v4363 = vsel %vm4362, %v4361, 0
      %v4364 = vshrl.u32 %v4363, 5
      %v4365 = vand.u32 %v4363, 31
      %v4366 = vsub.s32 32, %v4365
      %v4367 = vshrl.u32 683565275, %v4366
      %v4368 = vshll.u32 683565275, %v4365
      %v4369 = vshrl.u32 2475754826, %v4366
      %v4370 = vor.u32 %v4368, %v4369
      %v4371 = vshll.u32 2475754826, %v4365
      %v4372 = vshrl.u32 2131351028, %v4366
      %v4373 = vor.u32 %v4371, %v4372
      %v4374 = vshll.u32 2131351028, %v4365
      %v4375 = vshrl.u32 2102212464, %v4366
      %v4376 = vor.u32 %v4374, %v4375
      %v4377 = vshll.u32 2102212464, %v4365
      %v4378 = vshrl.u32 920167782, %v4366
      %v4379 = vor.u32 %v4377, %v4378
      %v4380 = vshll.u32 920167782, %v4365
      %v4381 = vshrl.u32 1326507024, %v4366
      %v4382 = vor.u32 %v4380, %v4381
      %vm4383 = vcmp.lt.s32.totalorder %v4364, 1
      %vm4384 = vcmp.lt.s32.totalorder %v4364, 2
      %vm4385 = vcmp.lt.s32.totalorder %v4364, 3
      %vm4386 = vcmp.lt.s32.totalorder %v4364, 4
      %v4387 = vsel %vm4383, %v4367, %v4370
      %v4388 = vsel %vm4386, %v4376, 2102212464
      %v4389 = vsel %vm4385, %v4373, %v4388
      %v4390 = vsel %vm4384, %v4387, %v4389
      %v4391 = vsel %vm4383, %v4370, %v4373
      %v4392 = vsel %vm4386, %v4379, 920167782
      %v4393 = vsel %vm4385, %v4376, %v4392
      %v4394 = vsel %vm4384, %v4391, %v4393
      %v4395 = vsel %vm4383, %v4373, %v4376
      %v4396 = vsel %vm4386, %v4382, 1326507024
      %v4397 = vsel %vm4385, %v4379, %v4396
      %v4398 = vsel %vm4384, %v4395, %v4397
      %v4399 = vshll.u32 %v4359, 8
      %v4400 = vmul.u32.u64.compose %v4399, %v4398
      %v4401 = vextract.low.u32 %v4400
      %v4402 = vextract.high.u32 %v4400
      %v4403 = vmul.u32.u64.compose %v4399, %v4394
      %v4404 = vextract.low.u32 %v4403
      %v4405 = vextract.high.u32 %v4403
      %v4406 = vmul.u32 %v4399, %v4390
      %v4407 = vadd.s32 %v4402, %v4404
      %vm4408 = vc.u32 %v4402, %v4404
      %v4409 = vadd.s32 %v4405, 1
      %v4410 = vsel %vm4408, %v4409, %v4405
      %v4411 = vadd.s32 %v4406, %v4410
      %v4412 = vadd.s32 %v4411, 536870912
      %v4413 = vshrl.u32 %v4412, 30
      %v4414 = vshll.u32 %v4413, 30
      %v4415 = vsub.s32 %v4411, %v4414
      %vm4416 = vcmp.lt.s32.totalorder %v4415, 0
      %v4417 = vsub.s32 0, %v4415
      %v4418 = vsel %vm4416, %v4417, %v4415
      %v4419 = vclz %v4418
      %v4420 = vsub.s32 %v4419, 2
      %vm4421 = vcmp.gt.s32.totalorder 0, %v4420
      %v4422 = vsel %vm4421, 0, %v4420
      %v4423 = vsub.s32 32, %v4422
      %v4424 = vshll.u32 %v4415, %v4422
      %v4425 = vshrl.u32 %v4407, %v4423
      %v4426 = vor.u32 %v4424, %v4425
      %v4427 = vsub.s32 4294967266, %v4422
      %v4428 = vadd.s32 %v4427, 127
      %v4429 = vshll.u32 %v4428, 23
      %v4430 = vor.u32 4788187, %v4429
      %v4431 = vand.u32 2147483647, %v4430
      %v4433 = vcvt.s32.f32 %v4426
      %v4434 = vmul.f32 %v4433, %v4431
      %v4435 = vxor.u32 %v4434, 2147483648
      %v4436 = vsel %vm4353, %v4435, %v4434
      %v4437 = vsub.s32 4, %v4413
      %v4438 = vsel %vm4353, %v4437, %v4413
      %v4439 = vsel %vm4352, %v4280, %v4436
      %v4440 = vsel %vm4352, 0, %v4438
      %v4441 = vcosq.f32.pop %v4439
      %v4442 = vsinq.f32.pop %v4439
      %vm4443 = vweird.f32 %v4280
      %v4444 = vadd.s32 %v4440, 3
      %v4445 = vand.u32 %v4444, 3
      %vm4446 = vcmp.lt.s32.totalorder %v4445, 2
      %vm4447 = vcmp.eq.s32.totalorder %v4445, 0
      %v4448 = vxor.u32 %v4442, 2147483648
      %v4449 = vsel %vm4447, %v4441, %v4448
      %vm4450 = vcmp.eq.s32.totalorder %v4445, 2
      %v4451 = vxor.u32 %v4441, 2147483648
      %v4452 = vsel %vm4450, %v4451, %v4442
      %v4453 = vsel %vm4446, %v4449, %v4452
      %v4454 = vsel %vm4443, nan, %v4453
      %v4455 = vand.u32 2147483647, %v4282
      %vm4456 = vcmp.le.f32.partialorder %v4455, 0.7853982
      %vm4457 = vcmp.lt.s32.totalorder %v4282, 0
      %v4458 = vand.u32 %v4282, 2139095040
      %v4459 = vshrl.u32 %v4458, 23
      %v4460 = vsub.s32 %v4459, 127
      %v4461 = vand.u32 2147483647, %v4282
      %v4462 = vand.u32 %v4461, 8388607
      %v4463 = vor.u32 %v4462, 8388608
      %v4464 = vsub.s32 0, %v4463
      %v4465 = vadd.s32 %v4460, 1
      %vm4466 = vcmp.gt.s32.totalorder %v4465, 0
      %v4467 = vsel %vm4466, %v4465, 0
      %v4468 = vshrl.u32 %v4467, 5
      %v4469 = vand.u32 %v4467, 31
      %v4470 = vsub.s32 32, %v4469
      %v4471 = vshrl.u32 683565275, %v4470
      %v4472 = vshll.u32 683565275, %v4469
      %v4473 = vshrl.u32 2475754826, %v4470
      %v4474 = vor.u32 %v4472, %v4473
      %v4475 = vshll.u32 2475754826, %v4469
      %v4476 = vshrl.u32 2131351028, %v4470
      %v4477 = vor.u32 %v4475, %v4476
      %v4478 = vshll.u32 2131351028, %v4469
      %v4479 = vshrl.u32 2102212464, %v4470
      %v4480 = vor.u32 %v4478, %v4479
      %v4481 = vshll.u32 2102212464, %v4469
      %v4482 = vshrl.u32 920167782, %v4470
      %v4483 = vor.u32 %v4481, %v4482
      %v4484 = vshll.u32 920167782, %v4469
      %v4485 = vshrl.u32 1326507024, %v4470
      %v4486 = vor.u32 %v4484, %v4485
      %vm4487 = vcmp.lt.s32.totalorder %v4468, 1
      %vm4488 = vcmp.lt.s32.totalorder %v4468, 2
      %vm4489 = vcmp.lt.s32.totalorder %v4468, 3
      %vm4490 = vcmp.lt.s32.totalorder %v4468, 4
      %v4491 = vsel %vm4487, %v4471, %v4474
      %v4492 = vsel %vm4490, %v4480, 2102212464
      %v4493 = vsel %vm4489, %v4477, %v4492
      %v4494 = vsel %vm4488, %v4491, %v4493
      %v4495 = vsel %vm4487, %v4474, %v4477
      %v4496 = vsel %vm4490, %v4483, 920167782
      %v4497 = vsel %vm4489, %v4480, %v4496
      %v4498 = vsel %vm4488, %v4495, %v4497
      %v4499 = vsel %vm4487, %v4477, %v4480
      %v4500 = vsel %vm4490, %v4486, 1326507024
      %v4501 = vsel %vm4489, %v4483, %v4500
      %v4502 = vsel %vm4488, %v4499, %v4501
      %v4503 = vshll.u32 %v4463, 8
      %v4504 = vmul.u32.u64.compose %v4503, %v4502
      %v4505 = vextract.low.u32 %v4504
      %v4506 = vextract.high.u32 %v4504
      %v4507 = vmul.u32.u64.compose %v4503, %v4498
      %v4508 = vextract.low.u32 %v4507
      %v4509 = vextract.high.u32 %v4507
      %v4510 = vmul.u32 %v4503, %v4494
      %v4511 = vadd.s32 %v4506, %v4508
      %vm4512 = vc.u32 %v4506, %v4508
      %v4513 = vadd.s32 %v4509, 1
      %v4514 = vsel %vm4512, %v4513, %v4509
      %v4515 = vadd.s32 %v4510, %v4514
      %v4516 = vadd.s32 %v4515, 536870912
      %v4517 = vshrl.u32 %v4516, 30
      %v4518 = vshll.u32 %v4517, 30
      %v4519 = vsub.s32 %v4515, %v4518
      %vm4520 = vcmp.lt.s32.totalorder %v4519, 0
      %v4521 = vsub.s32 0, %v4519
      %v4522 = vsel %vm4520, %v4521, %v4519
      %v4523 = vclz %v4522
      %v4524 = vsub.s32 %v4523, 2
      %vm4525 = vcmp.gt.s32.totalorder 0, %v4524
      %v4526 = vsel %vm4525, 0, %v4524
      %v4527 = vsub.s32 32, %v4526
      %v4528 = vshll.u32 %v4519, %v4526
      %v4529 = vshrl.u32 %v4511, %v4527
      %v4530 = vor.u32 %v4528, %v4529
      %v4531 = vsub.s32 4294967266, %v4526
      %v4532 = vadd.s32 %v4531, 127
      %v4533 = vshll.u32 %v4532, 23
      %v4534 = vor.u32 4788187, %v4533
      %v4535 = vand.u32 2147483647, %v4534
      %v4537 = vcvt.s32.f32 %v4530
      %v4538 = vmul.f32 %v4537, %v4535
      %v4539 = vxor.u32 %v4538, 2147483648
      %v4540 = vsel %vm4457, %v4539, %v4538
      %v4541 = vsub.s32 4, %v4517
      %v4542 = vsel %vm4457, %v4541, %v4517
      %v4543 = vsel %vm4456, %v4282, %v4540
      %v4544 = vsel %vm4456, 0, %v4542
      %v4545 = vcosq.f32.pop %v4543
      %v4546 = vsinq.f32.pop %v4543
      %vm4547 = vweird.f32 %v4282
      %v4548 = vadd.s32 %v4544, 3
      %v4549 = vand.u32 %v4548, 3
      %vm4550 = vcmp.lt.s32.totalorder %v4549, 2
      %vm4551 = vcmp.eq.s32.totalorder %v4549, 0
      %v4552 = vxor.u32 %v4546, 2147483648
      %v4553 = vsel %vm4551, %v4545, %v4552
      %vm4554 = vcmp.eq.s32.totalorder %v4549, 2
      %v4555 = vxor.u32 %v4545, 2147483648
      %v4556 = vsel %vm4554, %v4555, %v4546
      %v4557 = vsel %vm4550, %v4553, %v4556
      %v4558 = vsel %vm4547, nan, %v4557
      %v4559 = vand.u32 2147483647, %v4333
      %vm4560 = vcmp.le.f32.partialorder %v4559, 0.7853982
      %vm4561 = vcmp.lt.s32.totalorder %v4333, 0
      %v4562 = vand.u32 %v4333, 2139095040
      %v4563 = vshrl.u32 %v4562, 23
      %v4564 = vsub.s32 %v4563, 127
      %v4565 = vand.u32 2147483647, %v4333
      %v4566 = vand.u32 %v4565, 8388607
      %v4567 = vor.u32 %v4566, 8388608
      %v4568 = vsub.s32 0, %v4567
      %v4569 = vadd.s32 %v4564, 1
      %vm4570 = vcmp.gt.s32.totalorder %v4569, 0
      %v4571 = vsel %vm4570, %v4569, 0
      %v4572 = vshrl.u32 %v4571, 5
      %v4573 = vand.u32 %v4571, 31
      %v4574 = vsub.s32 32, %v4573
      %v4575 = vshrl.u32 683565275, %v4574
      %v4576 = vshll.u32 683565275, %v4573
      %v4577 = vshrl.u32 2475754826, %v4574
      %v4578 = vor.u32 %v4576, %v4577
      %v4579 = vshll.u32 2475754826, %v4573
      %v4580 = vshrl.u32 2131351028, %v4574
      %v4581 = vor.u32 %v4579, %v4580
      %v4582 = vshll.u32 2131351028, %v4573
      %v4583 = vshrl.u32 2102212464, %v4574
      %v4584 = vor.u32 %v4582, %v4583
      %v4585 = vshll.u32 2102212464, %v4573
      %v4586 = vshrl.u32 920167782, %v4574
      %v4587 = vor.u32 %v4585, %v4586
      %v4588 = vshll.u32 920167782, %v4573
      %v4589 = vshrl.u32 1326507024, %v4574
      %v4590 = vor.u32 %v4588, %v4589
      %vm4591 = vcmp.lt.s32.totalorder %v4572, 1
      %vm4592 = vcmp.lt.s32.totalorder %v4572, 2
      %vm4593 = vcmp.lt.s32.totalorder %v4572, 3
      %vm4594 = vcmp.lt.s32.totalorder %v4572, 4
      %v4595 = vsel %vm4591, %v4575, %v4578
      %v4596 = vsel %vm4594, %v4584, 2102212464
      %v4597 = vsel %vm4593, %v4581, %v4596
      %v4598 = vsel %vm4592, %v4595, %v4597
      %v4599 = vsel %vm4591, %v4578, %v4581
      %v4600 = vsel %vm4594, %v4587, 920167782
      %v4601 = vsel %vm4593, %v4584, %v4600
      %v4602 = vsel %vm4592, %v4599, %v4601
      %v4603 = vsel %vm4591, %v4581, %v4584
      %v4604 = vsel %vm4594, %v4590, 1326507024
      %v4605 = vsel %vm4593, %v4587, %v4604
      %v4606 = vsel %vm4592, %v4603, %v4605
      %v4607 = vshll.u32 %v4567, 8
      %v4608 = vmul.u32.u64.compose %v4607, %v4606
      %v4609 = vextract.low.u32 %v4608
      %v4610 = vextract.high.u32 %v4608
      %v4611 = vmul.u32.u64.compose %v4607, %v4602
      %v4612 = vextract.low.u32 %v4611
      %v4613 = vextract.high.u32 %v4611
      %v4614 = vmul.u32 %v4607, %v4598
      %v4615 = vadd.s32 %v4610, %v4612
      %vm4616 = vc.u32 %v4610, %v4612
      %v4617 = vadd.s32 %v4613, 1
      %v4618 = vsel %vm4616, %v4617, %v4613
      %v4619 = vadd.s32 %v4614, %v4618
      %v4620 = vadd.s32 %v4619, 536870912
      %v4621 = vshrl.u32 %v4620, 30
      %v4622 = vshll.u32 %v4621, 30
      %v4623 = vsub.s32 %v4619, %v4622
      %vm4624 = vcmp.lt.s32.totalorder %v4623, 0
      %v4625 = vsub.s32 0, %v4623
      %v4626 = vsel %vm4624, %v4625, %v4623
      %v4627 = vclz %v4626
      %v4628 = vsub.s32 %v4627, 2
      %vm4629 = vcmp.gt.s32.totalorder 0, %v4628
      %v4630 = vsel %vm4629, 0, %v4628
      %v4631 = vsub.s32 32, %v4630
      %v4632 = vshll.u32 %v4623, %v4630
      %v4633 = vshrl.u32 %v4615, %v4631
      %v4634 = vor.u32 %v4632, %v4633
      %v4635 = vsub.s32 4294967266, %v4630
      %v4636 = vadd.s32 %v4635, 127
      %v4637 = vshll.u32 %v4636, 23
      %v4638 = vor.u32 4788187, %v4637
      %v4639 = vand.u32 2147483647, %v4638
      %v4641 = vcvt.s32.f32 %v4634
      %v4642 = vmul.f32 %v4641, %v4639
      %v4643 = vxor.u32 %v4642, 2147483648
      %v4644 = vsel %vm4561, %v4643, %v4642
      %v4645 = vsub.s32 4, %v4621
      %v4646 = vsel %vm4561, %v4645, %v4621
      %v4647 = vsel %vm4560, %v4333, %v4644
      %v4648 = vsel %vm4560, 0, %v4646
      %v4649 = vcosq.f32.pop %v4647
      %v4650 = vsinq.f32.pop %v4647
      %vm4651 = vweird.f32 %v4333
      %v4652 = vadd.s32 %v4648, 3
      %v4653 = vand.u32 %v4652, 3
      %vm4654 = vcmp.lt.s32.totalorder %v4653, 2
      %vm4655 = vcmp.eq.s32.totalorder %v4653, 0
      %v4656 = vxor.u32 %v4650, 2147483648
      %v4657 = vsel %vm4655, %v4649, %v4656
      %vm4658 = vcmp.eq.s32.totalorder %v4653, 2
      %v4659 = vxor.u32 %v4649, 2147483648
      %v4660 = vsel %vm4658, %v4659, %v4650
      %v4661 = vsel %vm4654, %v4657, %v4660
      %v4662 = vsel %vm4651, nan, %v4661
      %v4663 = vand.u32 2147483647, %v4335
      %vm4664 = vcmp.le.f32.partialorder %v4663, 0.7853982
      %vm4665 = vcmp.lt.s32.totalorder %v4335, 0
      %v4666 = vand.u32 %v4335, 2139095040
      %v4667 = vshrl.u32 %v4666, 23
      %v4668 = vsub.s32 %v4667, 127
      %v4669 = vand.u32 2147483647, %v4335
      %v4670 = vand.u32 %v4669, 8388607
      %v4671 = vor.u32 %v4670, 8388608
      %v4672 = vsub.s32 0, %v4671
      %v4673 = vadd.s32 %v4668, 1
      %vm4674 = vcmp.gt.s32.totalorder %v4673, 0
      %v4675 = vsel %vm4674, %v4673, 0
      %v4676 = vshrl.u32 %v4675, 5
      %v4677 = vand.u32 %v4675, 31
      %v4678 = vsub.s32 32, %v4677
      %v4679 = vshrl.u32 683565275, %v4678
      %v4680 = vshll.u32 683565275, %v4677
      %v4681 = vshrl.u32 2475754826, %v4678
      %v4682 = vor.u32 %v4680, %v4681
      %v4683 = vshll.u32 2475754826, %v4677
      %v4684 = vshrl.u32 2131351028, %v4678
      %v4685 = vor.u32 %v4683, %v4684
      %v4686 = vshll.u32 2131351028, %v4677
      %v4687 = vshrl.u32 2102212464, %v4678
      %v4688 = vor.u32 %v4686, %v4687
      %v4689 = vshll.u32 2102212464, %v4677
      %v4690 = vshrl.u32 920167782, %v4678
      %v4691 = vor.u32 %v4689, %v4690
      %v4692 = vshll.u32 920167782, %v4677
      %v4693 = vshrl.u32 1326507024, %v4678
      %v4694 = vor.u32 %v4692, %v4693
      %vm4695 = vcmp.lt.s32.totalorder %v4676, 1
      %vm4696 = vcmp.lt.s32.totalorder %v4676, 2
      %vm4697 = vcmp.lt.s32.totalorder %v4676, 3
      %vm4698 = vcmp.lt.s32.totalorder %v4676, 4
      %v4699 = vsel %vm4695, %v4679, %v4682
      %v4700 = vsel %vm4698, %v4688, 2102212464
      %v4701 = vsel %vm4697, %v4685, %v4700
      %v4702 = vsel %vm4696, %v4699, %v4701
      %v4703 = vsel %vm4695, %v4682, %v4685
      %v4704 = vsel %vm4698, %v4691, 920167782
      %v4705 = vsel %vm4697, %v4688, %v4704
      %v4706 = vsel %vm4696, %v4703, %v4705
      %v4707 = vsel %vm4695, %v4685, %v4688
      %v4708 = vsel %vm4698, %v4694, 1326507024
      %v4709 = vsel %vm4697, %v4691, %v4708
      %v4710 = vsel %vm4696, %v4707, %v4709
      %v4711 = vshll.u32 %v4671, 8
      %v4712 = vmul.u32.u64.compose %v4711, %v4710
      %v4713 = vextract.low.u32 %v4712
      %v4714 = vextract.high.u32 %v4712
      %v4715 = vmul.u32.u64.compose %v4711, %v4706
      %v4716 = vextract.low.u32 %v4715
      %v4717 = vextract.high.u32 %v4715
      %v4718 = vmul.u32 %v4711, %v4702
      %v4719 = vadd.s32 %v4714, %v4716
      %vm4720 = vc.u32 %v4714, %v4716
      %v4721 = vadd.s32 %v4717, 1
      %v4722 = vsel %vm4720, %v4721, %v4717
      %v4723 = vadd.s32 %v4718, %v4722
      %v4724 = vadd.s32 %v4723, 536870912
      %v4725 = vshrl.u32 %v4724, 30
      %v4726 = vshll.u32 %v4725, 30
      %v4727 = vsub.s32 %v4723, %v4726
      %vm4728 = vcmp.lt.s32.totalorder %v4727, 0
      %v4729 = vsub.s32 0, %v4727
      %v4730 = vsel %vm4728, %v4729, %v4727
      %v4731 = vclz %v4730
      %v4732 = vsub.s32 %v4731, 2
      %vm4733 = vcmp.gt.s32.totalorder 0, %v4732
      %v4734 = vsel %vm4733, 0, %v4732
      %v4735 = vsub.s32 32, %v4734
      %v4736 = vshll.u32 %v4727, %v4734
      %v4737 = vshrl.u32 %v4719, %v4735
      %v4738 = vor.u32 %v4736, %v4737
      %v4739 = vsub.s32 4294967266, %v4734
      %v4740 = vadd.s32 %v4739, 127
      %v4741 = vshll.u32 %v4740, 23
      %v4742 = vor.u32 4788187, %v4741
      %v4743 = vand.u32 2147483647, %v4742
      %v4745 = vcvt.s32.f32 %v4738
      %v4746 = vmul.f32 %v4745, %v4743
      %v4747 = vxor.u32 %v4746, 2147483648
      %v4748 = vsel %vm4665, %v4747, %v4746
      %v4749 = vsub.s32 4, %v4725
      %v4750 = vsel %vm4665, %v4749, %v4725
      %v4751 = vsel %vm4664, %v4335, %v4748
      %v4752 = vsel %vm4664, 0, %v4750
      %v4753 = vcosq.f32.pop %v4751
      %v4754 = vsinq.f32.pop %v4751
      %vm4755 = vweird.f32 %v4335
      %v4756 = vadd.s32 %v4752, 3
      %v4757 = vand.u32 %v4756, 3
      %vm4758 = vcmp.lt.s32.totalorder %v4757, 2
      %vm4759 = vcmp.eq.s32.totalorder %v4757, 0
      %v4760 = vxor.u32 %v4754, 2147483648
      %v4761 = vsel %vm4759, %v4753, %v4760
      %vm4762 = vcmp.eq.s32.totalorder %v4757, 2
      %v4763 = vxor.u32 %v4753, 2147483648
      %v4764 = vsel %vm4762, %v4763, %v4754
      %v4765 = vsel %vm4758, %v4761, %v4764
      %v4766 = vsel %vm4755, nan, %v4765
      %v4767 = vand.u32 2147483647, %v4284
      %vm4768 = vcmp.le.f32.partialorder %v4767, 0.7853982
      %vm4769 = vcmp.lt.s32.totalorder %v4284, 0
      %v4770 = vand.u32 %v4284, 2139095040
      %v4771 = vshrl.u32 %v4770, 23
      %v4772 = vsub.s32 %v4771, 127
      %v4773 = vand.u32 2147483647, %v4284
      %v4774 = vand.u32 %v4773, 8388607
      %v4775 = vor.u32 %v4774, 8388608
      %v4776 = vsub.s32 0, %v4775
      %v4777 = vadd.s32 %v4772, 1
      %vm4778 = vcmp.gt.s32.totalorder %v4777, 0
      %v4779 = vsel %vm4778, %v4777, 0
      %v4780 = vshrl.u32 %v4779, 5
      %v4781 = vand.u32 %v4779, 31
      %v4782 = vsub.s32 32, %v4781
      %v4783 = vshrl.u32 683565275, %v4782
      %v4784 = vshll.u32 683565275, %v4781
      %v4785 = vshrl.u32 2475754826, %v4782
      %v4786 = vor.u32 %v4784, %v4785
      %v4787 = vshll.u32 2475754826, %v4781
      %v4788 = vshrl.u32 2131351028, %v4782
      %v4789 = vor.u32 %v4787, %v4788
      %v4790 = vshll.u32 2131351028, %v4781
      %v4791 = vshrl.u32 2102212464, %v4782
      %v4792 = vor.u32 %v4790, %v4791
      %v4793 = vshll.u32 2102212464, %v4781
      %v4794 = vshrl.u32 920167782, %v4782
      %v4795 = vor.u32 %v4793, %v4794
      %v4796 = vshll.u32 920167782, %v4781
      %v4797 = vshrl.u32 1326507024, %v4782
      %v4798 = vor.u32 %v4796, %v4797
      %vm4799 = vcmp.lt.s32.totalorder %v4780, 1
      %vm4800 = vcmp.lt.s32.totalorder %v4780, 2
      %vm4801 = vcmp.lt.s32.totalorder %v4780, 3
      %vm4802 = vcmp.lt.s32.totalorder %v4780, 4
      %v4803 = vsel %vm4799, %v4783, %v4786
      %v4804 = vsel %vm4802, %v4792, 2102212464
      %v4805 = vsel %vm4801, %v4789, %v4804
      %v4806 = vsel %vm4800, %v4803, %v4805
      %v4807 = vsel %vm4799, %v4786, %v4789
      %v4808 = vsel %vm4802, %v4795, 920167782
      %v4809 = vsel %vm4801, %v4792, %v4808
      %v4810 = vsel %vm4800, %v4807, %v4809
      %v4811 = vsel %vm4799, %v4789, %v4792
      %v4812 = vsel %vm4802, %v4798, 1326507024
      %v4813 = vsel %vm4801, %v4795, %v4812
      %v4814 = vsel %vm4800, %v4811, %v4813
      %v4815 = vshll.u32 %v4775, 8
      %v4816 = vmul.u32.u64.compose %v4815, %v4814
      %v4817 = vextract.low.u32 %v4816
      %v4818 = vextract.high.u32 %v4816
      %v4819 = vmul.u32.u64.compose %v4815, %v4810
      %v4820 = vextract.low.u32 %v4819
      %v4821 = vextract.high.u32 %v4819
      %v4822 = vmul.u32 %v4815, %v4806
      %v4823 = vadd.s32 %v4818, %v4820
      %vm4824 = vc.u32 %v4818, %v4820
      %v4825 = vadd.s32 %v4821, 1
      %v4826 = vsel %vm4824, %v4825, %v4821
      %v4827 = vadd.s32 %v4822, %v4826
      %v4828 = vadd.s32 %v4827, 536870912
      %v4829 = vshrl.u32 %v4828, 30
      %v4830 = vshll.u32 %v4829, 30
      %v4831 = vsub.s32 %v4827, %v4830
      %vm4832 = vcmp.lt.s32.totalorder %v4831, 0
      %v4833 = vsub.s32 0, %v4831
      %v4834 = vsel %vm4832, %v4833, %v4831
      %v4835 = vclz %v4834
      %v4836 = vsub.s32 %v4835, 2
      %vm4837 = vcmp.gt.s32.totalorder 0, %v4836
      %v4838 = vsel %vm4837, 0, %v4836
      %v4839 = vsub.s32 32, %v4838
      %v4840 = vshll.u32 %v4831, %v4838
      %v4841 = vshrl.u32 %v4823, %v4839
      %v4842 = vor.u32 %v4840, %v4841
      %v4843 = vsub.s32 4294967266, %v4838
      %v4844 = vadd.s32 %v4843, 127
      %v4845 = vshll.u32 %v4844, 23
      %v4846 = vor.u32 4788187, %v4845
      %v4847 = vand.u32 2147483647, %v4846
      %v4849 = vcvt.s32.f32 %v4842
      %v4850 = vmul.f32 %v4849, %v4847
      %v4851 = vxor.u32 %v4850, 2147483648
      %v4852 = vsel %vm4769, %v4851, %v4850
      %v4853 = vsub.s32 4, %v4829
      %v4854 = vsel %vm4769, %v4853, %v4829
      %v4855 = vsel %vm4768, %v4284, %v4852
      %v4856 = vsel %vm4768, 0, %v4854
      %v4857 = vcosq.f32.pop %v4855
      %v4858 = vsinq.f32.pop %v4855
      %vm4859 = vweird.f32 %v4284
      %v4860 = vadd.s32 %v4856, 3
      %v4861 = vand.u32 %v4860, 3
      %vm4862 = vcmp.lt.s32.totalorder %v4861, 2
      %vm4863 = vcmp.eq.s32.totalorder %v4861, 0
      %v4864 = vxor.u32 %v4858, 2147483648
      %v4865 = vsel %vm4863, %v4857, %v4864
      %vm4866 = vcmp.eq.s32.totalorder %v4861, 2
      %v4867 = vxor.u32 %v4857, 2147483648
      %v4868 = vsel %vm4866, %v4867, %v4858
      %v4869 = vsel %vm4862, %v4865, %v4868
      %v4870 = vsel %vm4859, nan, %v4869
      %v4871 = vand.u32 2147483647, %v4286
      %vm4872 = vcmp.le.f32.partialorder %v4871, 0.7853982
      %vm4873 = vcmp.lt.s32.totalorder %v4286, 0
      %v4874 = vand.u32 %v4286, 2139095040
      %v4875 = vshrl.u32 %v4874, 23
      %v4876 = vsub.s32 %v4875, 127
      %v4877 = vand.u32 2147483647, %v4286
      %v4878 = vand.u32 %v4877, 8388607
      %v4879 = vor.u32 %v4878, 8388608
      %v4880 = vsub.s32 0, %v4879
      %v4881 = vadd.s32 %v4876, 1
      %vm4882 = vcmp.gt.s32.totalorder %v4881, 0
      %v4883 = vsel %vm4882, %v4881, 0
      %v4884 = vshrl.u32 %v4883, 5
      %v4885 = vand.u32 %v4883, 31
      %v4886 = vsub.s32 32, %v4885
      %v4887 = vshrl.u32 683565275, %v4886
      %v4888 = vshll.u32 683565275, %v4885
      %v4889 = vshrl.u32 2475754826, %v4886
      %v4890 = vor.u32 %v4888, %v4889
      %v4891 = vshll.u32 2475754826, %v4885
      %v4892 = vshrl.u32 2131351028, %v4886
      %v4893 = vor.u32 %v4891, %v4892
      %v4894 = vshll.u32 2131351028, %v4885
      %v4895 = vshrl.u32 2102212464, %v4886
      %v4896 = vor.u32 %v4894, %v4895
      %v4897 = vshll.u32 2102212464, %v4885
      %v4898 = vshrl.u32 920167782, %v4886
      %v4899 = vor.u32 %v4897, %v4898
      %v4900 = vshll.u32 920167782, %v4885
      %v4901 = vshrl.u32 1326507024, %v4886
      %v4902 = vor.u32 %v4900, %v4901
      %vm4903 = vcmp.lt.s32.totalorder %v4884, 1
      %vm4904 = vcmp.lt.s32.totalorder %v4884, 2
      %vm4905 = vcmp.lt.s32.totalorder %v4884, 3
      %vm4906 = vcmp.lt.s32.totalorder %v4884, 4
      %v4907 = vsel %vm4903, %v4887, %v4890
      %v4908 = vsel %vm4906, %v4896, 2102212464
      %v4909 = vsel %vm4905, %v4893, %v4908
      %v4910 = vsel %vm4904, %v4907, %v4909
      %v4911 = vsel %vm4903, %v4890, %v4893
      %v4912 = vsel %vm4906, %v4899, 920167782
      %v4913 = vsel %vm4905, %v4896, %v4912
      %v4914 = vsel %vm4904, %v4911, %v4913
      %v4915 = vsel %vm4903, %v4893, %v4896
      %v4916 = vsel %vm4906, %v4902, 1326507024
      %v4917 = vsel %vm4905, %v4899, %v4916
      %v4918 = vsel %vm4904, %v4915, %v4917
      %v4919 = vshll.u32 %v4879, 8
      %v4920 = vmul.u32.u64.compose %v4919, %v4918
      %v4921 = vextract.low.u32 %v4920
      %v4922 = vextract.high.u32 %v4920
      %v4923 = vmul.u32.u64.compose %v4919, %v4914
      %v4924 = vextract.low.u32 %v4923
      %v4925 = vextract.high.u32 %v4923
      %v4926 = vmul.u32 %v4919, %v4910
      %v4927 = vadd.s32 %v4922, %v4924
      %vm4928 = vc.u32 %v4922, %v4924
      %v4929 = vadd.s32 %v4925, 1
      %v4930 = vsel %vm4928, %v4929, %v4925
      %v4931 = vadd.s32 %v4926, %v4930
      %v4932 = vadd.s32 %v4931, 536870912
      %v4933 = vshrl.u32 %v4932, 30
      %v4934 = vshll.u32 %v4933, 30
      %v4935 = vsub.s32 %v4931, %v4934
      %vm4936 = vcmp.lt.s32.totalorder %v4935, 0
      %v4937 = vsub.s32 0, %v4935
      %v4938 = vsel %vm4936, %v4937, %v4935
      %v4939 = vclz %v4938
      %v4940 = vsub.s32 %v4939, 2
      %vm4941 = vcmp.gt.s32.totalorder 0, %v4940
      %v4942 = vsel %vm4941, 0, %v4940
      %v4943 = vsub.s32 32, %v4942
      %v4944 = vshll.u32 %v4935, %v4942
      %v4945 = vshrl.u32 %v4927, %v4943
      %v4946 = vor.u32 %v4944, %v4945
      %v4947 = vsub.s32 4294967266, %v4942
      %v4948 = vadd.s32 %v4947, 127
      %v4949 = vshll.u32 %v4948, 23
      %v4950 = vor.u32 4788187, %v4949
      %v4951 = vand.u32 2147483647, %v4950
      %v4953 = vcvt.s32.f32 %v4946
      %v4954 = vmul.f32 %v4953, %v4951
      %v4955 = vxor.u32 %v4954, 2147483648
      %v4956 = vsel %vm4873, %v4955, %v4954
      %v4957 = vsub.s32 4, %v4933
      %v4958 = vsel %vm4873, %v4957, %v4933
      %v4959 = vsel %vm4872, %v4286, %v4956
      %v4960 = vsel %vm4872, 0, %v4958
      %v4961 = vcosq.f32.pop %v4959
      %v4962 = vsinq.f32.pop %v4959
      %vm4963 = vweird.f32 %v4286
      %v4964 = vadd.s32 %v4960, 3
      %v4965 = vand.u32 %v4964, 3
      %vm4966 = vcmp.lt.s32.totalorder %v4965, 2
      %vm4967 = vcmp.eq.s32.totalorder %v4965, 0
      %v4968 = vxor.u32 %v4962, 2147483648
      %v4969 = vsel %vm4967, %v4961, %v4968
      %vm4970 = vcmp.eq.s32.totalorder %v4965, 2
      %v4971 = vxor.u32 %v4961, 2147483648
      %v4972 = vsel %vm4970, %v4971, %v4962
      %v4973 = vsel %vm4966, %v4969, %v4972
      %v4974 = vsel %vm4963, nan, %v4973
      %v4975 = vand.u32 2147483647, %v4337
      %vm4976 = vcmp.le.f32.partialorder %v4975, 0.7853982
      %vm4977 = vcmp.lt.s32.totalorder %v4337, 0
      %v4978 = vand.u32 %v4337, 2139095040
      %v4979 = vshrl.u32 %v4978, 23
      %v4980 = vsub.s32 %v4979, 127
      %v4981 = vand.u32 2147483647, %v4337
      %v4982 = vand.u32 %v4981, 8388607
      %v4983 = vor.u32 %v4982, 8388608
      %v4984 = vsub.s32 0, %v4983
      %v4985 = vadd.s32 %v4980, 1
      %vm4986 = vcmp.gt.s32.totalorder %v4985, 0
      %v4987 = vsel %vm4986, %v4985, 0
      %v4988 = vshrl.u32 %v4987, 5
      %v4989 = vand.u32 %v4987, 31
      %v4990 = vsub.s32 32, %v4989
      %v4991 = vshrl.u32 683565275, %v4990
      %v4992 = vshll.u32 683565275, %v4989
      %v4993 = vshrl.u32 2475754826, %v4990
      %v4994 = vor.u32 %v4992, %v4993
      %v4995 = vshll.u32 2475754826, %v4989
      %v4996 = vshrl.u32 2131351028, %v4990
      %v4997 = vor.u32 %v4995, %v4996
      %v4998 = vshll.u32 2131351028, %v4989
      %v4999 = vshrl.u32 2102212464, %v4990
      %v5000 = vor.u32 %v4998, %v4999
      %v5001 = vshll.u32 2102212464, %v4989
      %v5002 = vshrl.u32 920167782, %v4990
      %v5003 = vor.u32 %v5001, %v5002
      %v5004 = vshll.u32 920167782, %v4989
      %v5005 = vshrl.u32 1326507024, %v4990
      %v5006 = vor.u32 %v5004, %v5005
      %vm5007 = vcmp.lt.s32.totalorder %v4988, 1
      %vm5008 = vcmp.lt.s32.totalorder %v4988, 2
      %vm5009 = vcmp.lt.s32.totalorder %v4988, 3
      %vm5010 = vcmp.lt.s32.totalorder %v4988, 4
      %v5011 = vsel %vm5007, %v4991, %v4994
      %v5012 = vsel %vm5010, %v5000, 2102212464
      %v5013 = vsel %vm5009, %v4997, %v5012
      %v5014 = vsel %vm5008, %v5011, %v5013
      %v5015 = vsel %vm5007, %v4994, %v4997
      %v5016 = vsel %vm5010, %v5003, 920167782
      %v5017 = vsel %vm5009, %v5000, %v5016
      %v5018 = vsel %vm5008, %v5015, %v5017
      %v5019 = vsel %vm5007, %v4997, %v5000
      %v5020 = vsel %vm5010, %v5006, 1326507024
      %v5021 = vsel %vm5009, %v5003, %v5020
      %v5022 = vsel %vm5008, %v5019, %v5021
      %v5023 = vshll.u32 %v4983, 8
      %v5024 = vmul.u32.u64.compose %v5023, %v5022
      %v5025 = vextract.low.u32 %v5024
      %v5026 = vextract.high.u32 %v5024
      %v5027 = vmul.u32.u64.compose %v5023, %v5018
      %v5028 = vextract.low.u32 %v5027
      %v5029 = vextract.high.u32 %v5027
      %v5030 = vmul.u32 %v5023, %v5014
      %v5031 = vadd.s32 %v5026, %v5028
      %vm5032 = vc.u32 %v5026, %v5028
      %v5033 = vadd.s32 %v5029, 1
      %v5034 = vsel %vm5032, %v5033, %v5029
      %v5035 = vadd.s32 %v5030, %v5034
      %v5036 = vadd.s32 %v5035, 536870912
      %v5037 = vshrl.u32 %v5036, 30
      %v5038 = vshll.u32 %v5037, 30
      %v5039 = vsub.s32 %v5035, %v5038
      %vm5040 = vcmp.lt.s32.totalorder %v5039, 0
      %v5041 = vsub.s32 0, %v5039
      %v5042 = vsel %vm5040, %v5041, %v5039
      %v5043 = vclz %v5042
      %v5044 = vsub.s32 %v5043, 2
      %vm5045 = vcmp.gt.s32.totalorder 0, %v5044
      %v5046 = vsel %vm5045, 0, %v5044
      %v5047 = vsub.s32 32, %v5046
      %v5048 = vshll.u32 %v5039, %v5046
      %v5049 = vshrl.u32 %v5031, %v5047
      %v5050 = vor.u32 %v5048, %v5049
      %v5051 = vsub.s32 4294967266, %v5046
      %v5052 = vadd.s32 %v5051, 127
      %v5053 = vshll.u32 %v5052, 23
      %v5054 = vor.u32 4788187, %v5053
      %v5055 = vand.u32 2147483647, %v5054
      %v5057 = vcvt.s32.f32 %v5050
      %v5058 = vmul.f32 %v5057, %v5055
      %v5059 = vxor.u32 %v5058, 2147483648
      %v5060 = vsel %vm4977, %v5059, %v5058
      %v5061 = vsub.s32 4, %v5037
      %v5062 = vsel %vm4977, %v5061, %v5037
      %v5063 = vsel %vm4976, %v4337, %v5060
      %v5064 = vsel %vm4976, 0, %v5062
      %v5065 = vcosq.f32.pop %v5063
      %v5066 = vsinq.f32.pop %v5063
      %vm5067 = vweird.f32 %v4337
      %v5068 = vadd.s32 %v5064, 3
      %v5069 = vand.u32 %v5068, 3
      %vm5070 = vcmp.lt.s32.totalorder %v5069, 2
      %vm5071 = vcmp.eq.s32.totalorder %v5069, 0
      %v5072 = vxor.u32 %v5066, 2147483648
      %v5073 = vsel %vm5071, %v5065, %v5072
      %vm5074 = vcmp.eq.s32.totalorder %v5069, 2
      %v5075 = vxor.u32 %v5065, 2147483648
      %v5076 = vsel %vm5074, %v5075, %v5066
      %v5077 = vsel %vm5070, %v5073, %v5076
      %v5078 = vsel %vm5067, nan, %v5077
      %v5079 = vand.u32 2147483647, %v4339
      %vm5080 = vcmp.le.f32.partialorder %v5079, 0.7853982
      %vm5081 = vcmp.lt.s32.totalorder %v4339, 0
      %v5082 = vand.u32 %v4339, 2139095040
      %v5083 = vshrl.u32 %v5082, 23
      %v5084 = vsub.s32 %v5083, 127
      %v5085 = vand.u32 2147483647, %v4339
      %v5086 = vand.u32 %v5085, 8388607
      %v5087 = vor.u32 %v5086, 8388608
      %v5088 = vsub.s32 0, %v5087
      %v5089 = vadd.s32 %v5084, 1
      %vm5090 = vcmp.gt.s32.totalorder %v5089, 0
      %v5091 = vsel %vm5090, %v5089, 0
      %v5092 = vshrl.u32 %v5091, 5
      %v5093 = vand.u32 %v5091, 31
      %v5094 = vsub.s32 32, %v5093
      %v5095 = vshrl.u32 683565275, %v5094
      %v5096 = vshll.u32 683565275, %v5093
      %v5097 = vshrl.u32 2475754826, %v5094
      %v5098 = vor.u32 %v5096, %v5097
      %v5099 = vshll.u32 2475754826, %v5093
      %v5100 = vshrl.u32 2131351028, %v5094
      %v5101 = vor.u32 %v5099, %v5100
      %v5102 = vshll.u32 2131351028, %v5093
      %v5103 = vshrl.u32 2102212464, %v5094
      %v5104 = vor.u32 %v5102, %v5103
      %v5105 = vshll.u32 2102212464, %v5093
      %v5106 = vshrl.u32 920167782, %v5094
      %v5107 = vor.u32 %v5105, %v5106
      %v5108 = vshll.u32 920167782, %v5093
      %v5109 = vshrl.u32 1326507024, %v5094
      %v5110 = vor.u32 %v5108, %v5109
      %vm5111 = vcmp.lt.s32.totalorder %v5092, 1
      %vm5112 = vcmp.lt.s32.totalorder %v5092, 2
      %vm5113 = vcmp.lt.s32.totalorder %v5092, 3
      %vm5114 = vcmp.lt.s32.totalorder %v5092, 4
      %v5115 = vsel %vm5111, %v5095, %v5098
      %v5116 = vsel %vm5114, %v5104, 2102212464
      %v5117 = vsel %vm5113, %v5101, %v5116
      %v5118 = vsel %vm5112, %v5115, %v5117
      %v5119 = vsel %vm5111, %v5098, %v5101
      %v5120 = vsel %vm5114, %v5107, 920167782
      %v5121 = vsel %vm5113, %v5104, %v5120
      %v5122 = vsel %vm5112, %v5119, %v5121
      %v5123 = vsel %vm5111, %v5101, %v5104
      %v5124 = vsel %vm5114, %v5110, 1326507024
      %v5125 = vsel %vm5113, %v5107, %v5124
      %v5126 = vsel %vm5112, %v5123, %v5125
      %v5127 = vshll.u32 %v5087, 8
      %v5128 = vmul.u32.u64.compose %v5127, %v5126
      %v5129 = vextract.low.u32 %v5128
      %v5130 = vextract.high.u32 %v5128
      %v5131 = vmul.u32.u64.compose %v5127, %v5122
      %v5132 = vextract.low.u32 %v5131
      %v5133 = vextract.high.u32 %v5131
      %v5134 = vmul.u32 %v5127, %v5118
      %v5135 = vadd.s32 %v5130, %v5132
      %vm5136 = vc.u32 %v5130, %v5132
      %v5137 = vadd.s32 %v5133, 1
      %v5138 = vsel %vm5136, %v5137, %v5133
      %v5139 = vadd.s32 %v5134, %v5138
      %v5140 = vadd.s32 %v5139, 536870912
      %v5141 = vshrl.u32 %v5140, 30
      %v5142 = vshll.u32 %v5141, 30
      %v5143 = vsub.s32 %v5139, %v5142
      %vm5144 = vcmp.lt.s32.totalorder %v5143, 0
      %v5145 = vsub.s32 0, %v5143
      %v5146 = vsel %vm5144, %v5145, %v5143
      %v5147 = vclz %v5146
      %v5148 = vsub.s32 %v5147, 2
      %vm5149 = vcmp.gt.s32.totalorder 0, %v5148
      %v5150 = vsel %vm5149, 0, %v5148
      %v5151 = vsub.s32 32, %v5150
      %v5152 = vshll.u32 %v5143, %v5150
      %v5153 = vshrl.u32 %v5135, %v5151
      %v5154 = vor.u32 %v5152, %v5153
      %v5155 = vsub.s32 4294967266, %v5150
      %v5156 = vadd.s32 %v5155, 127
      %v5157 = vshll.u32 %v5156, 23
      %v5158 = vor.u32 4788187, %v5157
      %v5159 = vand.u32 2147483647, %v5158
      %v5161 = vcvt.s32.f32 %v5154
      %v5162 = vmul.f32 %v5161, %v5159
      %v5163 = vxor.u32 %v5162, 2147483648
      %v5164 = vsel %vm5081, %v5163, %v5162
      %v5165 = vsub.s32 4, %v5141
      %v5166 = vsel %vm5081, %v5165, %v5141
      %v5167 = vsel %vm5080, %v4339, %v5164
      %v5168 = vsel %vm5080, 0, %v5166
      %v5169 = vcosq.f32.pop %v5167
      %v5170 = vsinq.f32.pop %v5167
      %vm5171 = vweird.f32 %v4339
      %v5172 = vadd.s32 %v5168, 3
      %v5173 = vand.u32 %v5172, 3
      %vm5174 = vcmp.lt.s32.totalorder %v5173, 2
      %vm5175 = vcmp.eq.s32.totalorder %v5173, 0
      %v5176 = vxor.u32 %v5170, 2147483648
      %v5177 = vsel %vm5175, %v5169, %v5176
      %vm5178 = vcmp.eq.s32.totalorder %v5173, 2
      %v5179 = vxor.u32 %v5169, 2147483648
      %v5180 = vsel %vm5178, %v5179, %v5170
      %v5181 = vsel %vm5174, %v5177, %v5180
      %v5182 = vsel %vm5171, nan, %v5181
      %v5183 = vand.u32 2147483647, %v4290
      %vm5184 = vcmp.le.f32.partialorder %v5183, 0.7853982
      %vm5185 = vcmp.lt.s32.totalorder %v4290, 0
      %v5186 = vand.u32 %v4290, 2139095040
      %v5187 = vshrl.u32 %v5186, 23
      %v5188 = vsub.s32 %v5187, 127
      %v5189 = vand.u32 2147483647, %v4290
      %v5190 = vand.u32 %v5189, 8388607
      %v5191 = vor.u32 %v5190, 8388608
      %v5192 = vsub.s32 0, %v5191
      %v5193 = vadd.s32 %v5188, 1
      %vm5194 = vcmp.gt.s32.totalorder %v5193, 0
      %v5195 = vsel %vm5194, %v5193, 0
      %v5196 = vshrl.u32 %v5195, 5
      %v5197 = vand.u32 %v5195, 31
      %v5198 = vsub.s32 32, %v5197
      %v5199 = vshrl.u32 683565275, %v5198
      %v5200 = vshll.u32 683565275, %v5197
      %v5201 = vshrl.u32 2475754826, %v5198
      %v5202 = vor.u32 %v5200, %v5201
      %v5203 = vshll.u32 2475754826, %v5197
      %v5204 = vshrl.u32 2131351028, %v5198
      %v5205 = vor.u32 %v5203, %v5204
      %v5206 = vshll.u32 2131351028, %v5197
      %v5207 = vshrl.u32 2102212464, %v5198
      %v5208 = vor.u32 %v5206, %v5207
      %v5209 = vshll.u32 2102212464, %v5197
      %v5210 = vshrl.u32 920167782, %v5198
      %v5211 = vor.u32 %v5209, %v5210
      %v5212 = vshll.u32 920167782, %v5197
      %v5213 = vshrl.u32 1326507024, %v5198
      %v5214 = vor.u32 %v5212, %v5213
      %vm5215 = vcmp.lt.s32.totalorder %v5196, 1
      %vm5216 = vcmp.lt.s32.totalorder %v5196, 2
      %vm5217 = vcmp.lt.s32.totalorder %v5196, 3
      %vm5218 = vcmp.lt.s32.totalorder %v5196, 4
      %v5219 = vsel %vm5215, %v5199, %v5202
      %v5220 = vsel %vm5218, %v5208, 2102212464
      %v5221 = vsel %vm5217, %v5205, %v5220
      %v5222 = vsel %vm5216, %v5219, %v5221
      %v5223 = vsel %vm5215, %v5202, %v5205
      %v5224 = vsel %vm5218, %v5211, 920167782
      %v5225 = vsel %vm5217, %v5208, %v5224
      %v5226 = vsel %vm5216, %v5223, %v5225
      %v5227 = vsel %vm5215, %v5205, %v5208
      %v5228 = vsel %vm5218, %v5214, 1326507024
      %v5229 = vsel %vm5217, %v5211, %v5228
      %v5230 = vsel %vm5216, %v5227, %v5229
      %v5231 = vshll.u32 %v5191, 8
      %v5232 = vmul.u32.u64.compose %v5231, %v5230
      %v5233 = vextract.low.u32 %v5232
      %v5234 = vextract.high.u32 %v5232
      %v5235 = vmul.u32.u64.compose %v5231, %v5226
      %v5236 = vextract.low.u32 %v5235
      %v5237 = vextract.high.u32 %v5235
      %v5238 = vmul.u32 %v5231, %v5222
      %v5239 = vadd.s32 %v5234, %v5236
      %vm5240 = vc.u32 %v5234, %v5236
      %v5241 = vadd.s32 %v5237, 1
      %v5242 = vsel %vm5240, %v5241, %v5237
      %v5243 = vadd.s32 %v5238, %v5242
      %v5244 = vadd.s32 %v5243, 536870912
      %v5245 = vshrl.u32 %v5244, 30
      %v5246 = vshll.u32 %v5245, 30
      %v5247 = vsub.s32 %v5243, %v5246
      %vm5248 = vcmp.lt.s32.totalorder %v5247, 0
      %v5249 = vsub.s32 0, %v5247
      %v5250 = vsel %vm5248, %v5249, %v5247
      %v5251 = vclz %v5250
      %v5252 = vsub.s32 %v5251, 2
      %vm5253 = vcmp.gt.s32.totalorder 0, %v5252
      %v5254 = vsel %vm5253, 0, %v5252
      %v5255 = vsub.s32 32, %v5254
      %v5256 = vshll.u32 %v5247, %v5254
      %v5257 = vshrl.u32 %v5239, %v5255
      %v5258 = vor.u32 %v5256, %v5257
      %v5259 = vsub.s32 4294967266, %v5254
      %v5260 = vadd.s32 %v5259, 127
      %v5261 = vshll.u32 %v5260, 23
      %v5262 = vor.u32 4788187, %v5261
      %v5263 = vand.u32 2147483647, %v5262
      %v5265 = vcvt.s32.f32 %v5258
      %v5266 = vmul.f32 %v5265, %v5263
      %v5267 = vxor.u32 %v5266, 2147483648
      %v5268 = vsel %vm5185, %v5267, %v5266
      %v5269 = vsub.s32 4, %v5245
      %v5270 = vsel %vm5185, %v5269, %v5245
      %v5271 = vsel %vm5184, %v4290, %v5268
      %v5272 = vsel %vm5184, 0, %v5270
      %v5273 = vcosq.f32.pop %v5271
      %v5274 = vsinq.f32.pop %v5271
      %vm5275 = vweird.f32 %v4290
      %v5276 = vadd.s32 %v5272, 3
      %v5277 = vand.u32 %v5276, 3
      %vm5278 = vcmp.lt.s32.totalorder %v5277, 2
      %vm5279 = vcmp.eq.s32.totalorder %v5277, 0
      %v5280 = vxor.u32 %v5274, 2147483648
      %v5281 = vsel %vm5279, %v5273, %v5280
      %vm5282 = vcmp.eq.s32.totalorder %v5277, 2
      %v5283 = vxor.u32 %v5273, 2147483648
      %v5284 = vsel %vm5282, %v5283, %v5274
      %v5285 = vsel %vm5278, %v5281, %v5284
      %v5286 = vsel %vm5275, nan, %v5285
      %v5287 = vand.u32 2147483647, %v4292
      %vm5288 = vcmp.le.f32.partialorder %v5287, 0.7853982
      %vm5289 = vcmp.lt.s32.totalorder %v4292, 0
      %v5290 = vand.u32 %v4292, 2139095040
      %v5291 = vshrl.u32 %v5290, 23
      %v5292 = vsub.s32 %v5291, 127
      %v5293 = vand.u32 2147483647, %v4292
      %v5294 = vand.u32 %v5293, 8388607
      %v5295 = vor.u32 %v5294, 8388608
      %v5296 = vsub.s32 0, %v5295
      %v5297 = vadd.s32 %v5292, 1
      %vm5298 = vcmp.gt.s32.totalorder %v5297, 0
      %v5299 = vsel %vm5298, %v5297, 0
      %v5300 = vshrl.u32 %v5299, 5
      %v5301 = vand.u32 %v5299, 31
      %v5302 = vsub.s32 32, %v5301
      %v5303 = vshrl.u32 683565275, %v5302
      %v5304 = vshll.u32 683565275, %v5301
      %v5305 = vshrl.u32 2475754826, %v5302
      %v5306 = vor.u32 %v5304, %v5305
      %v5307 = vshll.u32 2475754826, %v5301
      %v5308 = vshrl.u32 2131351028, %v5302
      %v5309 = vor.u32 %v5307, %v5308
      %v5310 = vshll.u32 2131351028, %v5301
      %v5311 = vshrl.u32 2102212464, %v5302
      %v5312 = vor.u32 %v5310, %v5311
      %v5313 = vshll.u32 2102212464, %v5301
      %v5314 = vshrl.u32 920167782, %v5302
      %v5315 = vor.u32 %v5313, %v5314
      %v5316 = vshll.u32 920167782, %v5301
      %v5317 = vshrl.u32 1326507024, %v5302
      %v5318 = vor.u32 %v5316, %v5317
      %vm5319 = vcmp.lt.s32.totalorder %v5300, 1
      %vm5320 = vcmp.lt.s32.totalorder %v5300, 2
      %vm5321 = vcmp.lt.s32.totalorder %v5300, 3
      %vm5322 = vcmp.lt.s32.totalorder %v5300, 4
      %v5323 = vsel %vm5319, %v5303, %v5306
      %v5324 = vsel %vm5322, %v5312, 2102212464
      %v5325 = vsel %vm5321, %v5309, %v5324
      %v5326 = vsel %vm5320, %v5323, %v5325
      %v5327 = vsel %vm5319, %v5306, %v5309
      %v5328 = vsel %vm5322, %v5315, 920167782
      %v5329 = vsel %vm5321, %v5312, %v5328
      %v5330 = vsel %vm5320, %v5327, %v5329
      %v5331 = vsel %vm5319, %v5309, %v5312
      %v5332 = vsel %vm5322, %v5318, 1326507024
      %v5333 = vsel %vm5321, %v5315, %v5332
      %v5334 = vsel %vm5320, %v5331, %v5333
      %v5335 = vshll.u32 %v5295, 8
      %v5336 = vmul.u32.u64.compose %v5335, %v5334
      %v5337 = vextract.low.u32 %v5336
      %v5338 = vextract.high.u32 %v5336
      %v5339 = vmul.u32.u64.compose %v5335, %v5330
      %v5340 = vextract.low.u32 %v5339
      %v5341 = vextract.high.u32 %v5339
      %v5342 = vmul.u32 %v5335, %v5326
      %v5343 = vadd.s32 %v5338, %v5340
      %vm5344 = vc.u32 %v5338, %v5340
      %v5345 = vadd.s32 %v5341, 1
      %v5346 = vsel %vm5344, %v5345, %v5341
      %v5347 = vadd.s32 %v5342, %v5346
      %v5348 = vadd.s32 %v5347, 536870912
      %v5349 = vshrl.u32 %v5348, 30
      %v5350 = vshll.u32 %v5349, 30
      %v5351 = vsub.s32 %v5347, %v5350
      %vm5352 = vcmp.lt.s32.totalorder %v5351, 0
      %v5353 = vsub.s32 0, %v5351
      %v5354 = vsel %vm5352, %v5353, %v5351
      %v5355 = vclz %v5354
      %v5356 = vsub.s32 %v5355, 2
      %vm5357 = vcmp.gt.s32.totalorder 0, %v5356
      %v5358 = vsel %vm5357, 0, %v5356
      %v5359 = vsub.s32 32, %v5358
      %v5360 = vshll.u32 %v5351, %v5358
      %v5361 = vshrl.u32 %v5343, %v5359
      %v5362 = vor.u32 %v5360, %v5361
      %v5363 = vsub.s32 4294967266, %v5358
      %v5364 = vadd.s32 %v5363, 127
      %v5365 = vshll.u32 %v5364, 23
      %v5366 = vor.u32 4788187, %v5365
      %v5367 = vand.u32 2147483647, %v5366
      %v5369 = vcvt.s32.f32 %v5362
      %v5370 = vmul.f32 %v5369, %v5367
      %v5371 = vxor.u32 %v5370, 2147483648
      %v5372 = vsel %vm5289, %v5371, %v5370
      %v5373 = vsub.s32 4, %v5349
      %v5374 = vsel %vm5289, %v5373, %v5349
      %v5375 = vsel %vm5288, %v4292, %v5372
      %v5376 = vsel %vm5288, 0, %v5374
      %v5377 = vcosq.f32.pop %v5375
      %v5378 = vsinq.f32.pop %v5375
      %vm5379 = vweird.f32 %v4292
      %v5380 = vadd.s32 %v5376, 3
      %v5381 = vand.u32 %v5380, 3
      %vm5382 = vcmp.lt.s32.totalorder %v5381, 2
      %vm5383 = vcmp.eq.s32.totalorder %v5381, 0
      %v5384 = vxor.u32 %v5378, 2147483648
      %v5385 = vsel %vm5383, %v5377, %v5384
      %vm5386 = vcmp.eq.s32.totalorder %v5381, 2
      %v5387 = vxor.u32 %v5377, 2147483648
      %v5388 = vsel %vm5386, %v5387, %v5378
      %v5389 = vsel %vm5382, %v5385, %v5388
      %v5390 = vsel %vm5379, nan, %v5389
      %v5391 = vand.u32 2147483647, %v4343
      %vm5392 = vcmp.le.f32.partialorder %v5391, 0.7853982
      %vm5393 = vcmp.lt.s32.totalorder %v4343, 0
      %v5394 = vand.u32 %v4343, 2139095040
      %v5395 = vshrl.u32 %v5394, 23
      %v5396 = vsub.s32 %v5395, 127
      %v5397 = vand.u32 2147483647, %v4343
      %v5398 = vand.u32 %v5397, 8388607
      %v5399 = vor.u32 %v5398, 8388608
      %v5400 = vsub.s32 0, %v5399
      %v5401 = vadd.s32 %v5396, 1
      %vm5402 = vcmp.gt.s32.totalorder %v5401, 0
      %v5403 = vsel %vm5402, %v5401, 0
      %v5404 = vshrl.u32 %v5403, 5
      %v5405 = vand.u32 %v5403, 31
      %v5406 = vsub.s32 32, %v5405
      %v5407 = vshrl.u32 683565275, %v5406
      %v5408 = vshll.u32 683565275, %v5405
      %v5409 = vshrl.u32 2475754826, %v5406
      %v5410 = vor.u32 %v5408, %v5409
      %v5411 = vshll.u32 2475754826, %v5405
      %v5412 = vshrl.u32 2131351028, %v5406
      %v5413 = vor.u32 %v5411, %v5412
      %v5414 = vshll.u32 2131351028, %v5405
      %v5415 = vshrl.u32 2102212464, %v5406
      %v5416 = vor.u32 %v5414, %v5415
      %v5417 = vshll.u32 2102212464, %v5405
      %v5418 = vshrl.u32 920167782, %v5406
      %v5419 = vor.u32 %v5417, %v5418
      %v5420 = vshll.u32 920167782, %v5405
      %v5421 = vshrl.u32 1326507024, %v5406
      %v5422 = vor.u32 %v5420, %v5421
      %vm5423 = vcmp.lt.s32.totalorder %v5404, 1
      %vm5424 = vcmp.lt.s32.totalorder %v5404, 2
      %vm5425 = vcmp.lt.s32.totalorder %v5404, 3
      %vm5426 = vcmp.lt.s32.totalorder %v5404, 4
      %v5427 = vsel %vm5423, %v5407, %v5410
      %v5428 = vsel %vm5426, %v5416, 2102212464
      %v5429 = vsel %vm5425, %v5413, %v5428
      %v5430 = vsel %vm5424, %v5427, %v5429
      %v5431 = vsel %vm5423, %v5410, %v5413
      %v5432 = vsel %vm5426, %v5419, 920167782
      %v5433 = vsel %vm5425, %v5416, %v5432
      %v5434 = vsel %vm5424, %v5431, %v5433
      %v5435 = vsel %vm5423, %v5413, %v5416
      %v5436 = vsel %vm5426, %v5422, 1326507024
      %v5437 = vsel %vm5425, %v5419, %v5436
      %v5438 = vsel %vm5424, %v5435, %v5437
      %v5439 = vshll.u32 %v5399, 8
      %v5440 = vmul.u32.u64.compose %v5439, %v5438
      %v5441 = vextract.low.u32 %v5440
      %v5442 = vextract.high.u32 %v5440
      %v5443 = vmul.u32.u64.compose %v5439, %v5434
      %v5444 = vextract.low.u32 %v5443
      %v5445 = vextract.high.u32 %v5443
      %v5446 = vmul.u32 %v5439, %v5430
      %v5447 = vadd.s32 %v5442, %v5444
      %vm5448 = vc.u32 %v5442, %v5444
      %v5449 = vadd.s32 %v5445, 1
      %v5450 = vsel %vm5448, %v5449, %v5445
      %v5451 = vadd.s32 %v5446, %v5450
      %v5452 = vadd.s32 %v5451, 536870912
      %v5453 = vshrl.u32 %v5452, 30
      %v5454 = vshll.u32 %v5453, 30
      %v5455 = vsub.s32 %v5451, %v5454
      %vm5456 = vcmp.lt.s32.totalorder %v5455, 0
      %v5457 = vsub.s32 0, %v5455
      %v5458 = vsel %vm5456, %v5457, %v5455
      %v5459 = vclz %v5458
      %v5460 = vsub.s32 %v5459, 2
      %vm5461 = vcmp.gt.s32.totalorder 0, %v5460
      %v5462 = vsel %vm5461, 0, %v5460
      %v5463 = vsub.s32 32, %v5462
      %v5464 = vshll.u32 %v5455, %v5462
      %v5465 = vshrl.u32 %v5447, %v5463
      %v5466 = vor.u32 %v5464, %v5465
      %v5467 = vsub.s32 4294967266, %v5462
      %v5468 = vadd.s32 %v5467, 127
      %v5469 = vshll.u32 %v5468, 23
      %v5470 = vor.u32 4788187, %v5469
      %v5471 = vand.u32 2147483647, %v5470
      %v5473 = vcvt.s32.f32 %v5466
      %v5474 = vmul.f32 %v5473, %v5471
      %v5475 = vxor.u32 %v5474, 2147483648
      %v5476 = vsel %vm5393, %v5475, %v5474
      %v5477 = vsub.s32 4, %v5453
      %v5478 = vsel %vm5393, %v5477, %v5453
      %v5479 = vsel %vm5392, %v4343, %v5476
      %v5480 = vsel %vm5392, 0, %v5478
      %v5481 = vcosq.f32.pop %v5479
      %v5482 = vsinq.f32.pop %v5479
      %vm5483 = vweird.f32 %v4343
      %v5484 = vadd.s32 %v5480, 3
      %v5485 = vand.u32 %v5484, 3
      %vm5486 = vcmp.lt.s32.totalorder %v5485, 2
      %vm5487 = vcmp.eq.s32.totalorder %v5485, 0
      %v5488 = vxor.u32 %v5482, 2147483648
      %v5489 = vsel %vm5487, %v5481, %v5488
      %vm5490 = vcmp.eq.s32.totalorder %v5485, 2
      %v5491 = vxor.u32 %v5481, 2147483648
      %v5492 = vsel %vm5490, %v5491, %v5482
      %v5493 = vsel %vm5486, %v5489, %v5492
      %v5494 = vsel %vm5483, nan, %v5493
      %v5495 = vand.u32 2147483647, %v4345
      %vm5496 = vcmp.le.f32.partialorder %v5495, 0.7853982
      %vm5497 = vcmp.lt.s32.totalorder %v4345, 0
      %v5498 = vand.u32 %v4345, 2139095040
      %v5499 = vshrl.u32 %v5498, 23
      %v5500 = vsub.s32 %v5499, 127
      %v5501 = vand.u32 2147483647, %v4345
      %v5502 = vand.u32 %v5501, 8388607
      %v5503 = vor.u32 %v5502, 8388608
      %v5504 = vsub.s32 0, %v5503
      %v5505 = vadd.s32 %v5500, 1
      %vm5506 = vcmp.gt.s32.totalorder %v5505, 0
      %v5507 = vsel %vm5506, %v5505, 0
      %v5508 = vshrl.u32 %v5507, 5
      %v5509 = vand.u32 %v5507, 31
      %v5510 = vsub.s32 32, %v5509
      %v5511 = vshrl.u32 683565275, %v5510
      %v5512 = vshll.u32 683565275, %v5509
      %v5513 = vshrl.u32 2475754826, %v5510
      %v5514 = vor.u32 %v5512, %v5513
      %v5515 = vshll.u32 2475754826, %v5509
      %v5516 = vshrl.u32 2131351028, %v5510
      %v5517 = vor.u32 %v5515, %v5516
      %v5518 = vshll.u32 2131351028, %v5509
      %v5519 = vshrl.u32 2102212464, %v5510
      %v5520 = vor.u32 %v5518, %v5519
      %v5521 = vshll.u32 2102212464, %v5509
      %v5522 = vshrl.u32 920167782, %v5510
      %v5523 = vor.u32 %v5521, %v5522
      %v5524 = vshll.u32 920167782, %v5509
      %v5525 = vshrl.u32 1326507024, %v5510
      %v5526 = vor.u32 %v5524, %v5525
      %vm5527 = vcmp.lt.s32.totalorder %v5508, 1
      %vm5528 = vcmp.lt.s32.totalorder %v5508, 2
      %vm5529 = vcmp.lt.s32.totalorder %v5508, 3
      %vm5530 = vcmp.lt.s32.totalorder %v5508, 4
      %v5531 = vsel %vm5527, %v5511, %v5514
      %v5532 = vsel %vm5530, %v5520, 2102212464
      %v5533 = vsel %vm5529, %v5517, %v5532
      %v5534 = vsel %vm5528, %v5531, %v5533
      %v5535 = vsel %vm5527, %v5514, %v5517
      %v5536 = vsel %vm5530, %v5523, 920167782
      %v5537 = vsel %vm5529, %v5520, %v5536
      %v5538 = vsel %vm5528, %v5535, %v5537
      %v5539 = vsel %vm5527, %v5517, %v5520
      %v5540 = vsel %vm5530, %v5526, 1326507024
      %v5541 = vsel %vm5529, %v5523, %v5540
      %v5542 = vsel %vm5528, %v5539, %v5541
      %v5543 = vshll.u32 %v5503, 8
      %v5544 = vmul.u32.u64.compose %v5543, %v5542
      %v5545 = vextract.low.u32 %v5544
      %v5546 = vextract.high.u32 %v5544
      %v5547 = vmul.u32.u64.compose %v5543, %v5538
      %v5548 = vextract.low.u32 %v5547
      %v5549 = vextract.high.u32 %v5547
      %v5550 = vmul.u32 %v5543, %v5534
      %v5551 = vadd.s32 %v5546, %v5548
      %vm5552 = vc.u32 %v5546, %v5548
      %v5553 = vadd.s32 %v5549, 1
      %v5554 = vsel %vm5552, %v5553, %v5549
      %v5555 = vadd.s32 %v5550, %v5554
      %v5556 = vadd.s32 %v5555, 536870912
      %v5557 = vshrl.u32 %v5556, 30
      %v5558 = vshll.u32 %v5557, 30
      %v5559 = vsub.s32 %v5555, %v5558
      %vm5560 = vcmp.lt.s32.totalorder %v5559, 0
      %v5561 = vsub.s32 0, %v5559
      %v5562 = vsel %vm5560, %v5561, %v5559
      %v5563 = vclz %v5562
      %v5564 = vsub.s32 %v5563, 2
      %vm5565 = vcmp.gt.s32.totalorder 0, %v5564
      %v5566 = vsel %vm5565, 0, %v5564
      %v5567 = vsub.s32 32, %v5566
      %v5568 = vshll.u32 %v5559, %v5566
      %v5569 = vshrl.u32 %v5551, %v5567
      %v5570 = vor.u32 %v5568, %v5569
      %v5571 = vsub.s32 4294967266, %v5566
      %v5572 = vadd.s32 %v5571, 127
      %v5573 = vshll.u32 %v5572, 23
      %v5574 = vor.u32 4788187, %v5573
      %v5575 = vand.u32 2147483647, %v5574
      %v5577 = vcvt.s32.f32 %v5570
      %v5578 = vmul.f32 %v5577, %v5575
      %v5579 = vxor.u32 %v5578, 2147483648
      %v5580 = vsel %vm5497, %v5579, %v5578
      %v5581 = vsub.s32 4, %v5557
      %v5582 = vsel %vm5497, %v5581, %v5557
      %v5583 = vsel %vm5496, %v4345, %v5580
      %v5584 = vsel %vm5496, 0, %v5582
      %v5585 = vcosq.f32.pop %v5583
      %v5586 = vsinq.f32.pop %v5583
      %vm5587 = vweird.f32 %v4345
      %v5588 = vadd.s32 %v5584, 3
      %v5589 = vand.u32 %v5588, 3
      %vm5590 = vcmp.lt.s32.totalorder %v5589, 2
      %vm5591 = vcmp.eq.s32.totalorder %v5589, 0
      %v5592 = vxor.u32 %v5586, 2147483648
      %v5593 = vsel %vm5591, %v5585, %v5592
      %vm5594 = vcmp.eq.s32.totalorder %v5589, 2
      %v5595 = vxor.u32 %v5585, 2147483648
      %v5596 = vsel %vm5594, %v5595, %v5586
      %v5597 = vsel %vm5590, %v5593, %v5596
      %v5598 = vsel %vm5587, nan, %v5597
      %v5599 = vand.u32 2147483647, %v4294
      %vm5600 = vcmp.le.f32.partialorder %v5599, 0.7853982
      %vm5601 = vcmp.lt.s32.totalorder %v4294, 0
      %v5602 = vand.u32 %v4294, 2139095040
      %v5603 = vshrl.u32 %v5602, 23
      %v5604 = vsub.s32 %v5603, 127
      %v5605 = vand.u32 2147483647, %v4294
      %v5606 = vand.u32 %v5605, 8388607
      %v5607 = vor.u32 %v5606, 8388608
      %v5608 = vsub.s32 0, %v5607
      %v5609 = vadd.s32 %v5604, 1
      %vm5610 = vcmp.gt.s32.totalorder %v5609, 0
      %v5611 = vsel %vm5610, %v5609, 0
      %v5612 = vshrl.u32 %v5611, 5
      %v5613 = vand.u32 %v5611, 31
      %v5614 = vsub.s32 32, %v5613
      %v5615 = vshrl.u32 683565275, %v5614
      %v5616 = vshll.u32 683565275, %v5613
      %v5617 = vshrl.u32 2475754826, %v5614
      %v5618 = vor.u32 %v5616, %v5617
      %v5619 = vshll.u32 2475754826, %v5613
      %v5620 = vshrl.u32 2131351028, %v5614
      %v5621 = vor.u32 %v5619, %v5620
      %v5622 = vshll.u32 2131351028, %v5613
      %v5623 = vshrl.u32 2102212464, %v5614
      %v5624 = vor.u32 %v5622, %v5623
      %v5625 = vshll.u32 2102212464, %v5613
      %v5626 = vshrl.u32 920167782, %v5614
      %v5627 = vor.u32 %v5625, %v5626
      %v5628 = vshll.u32 920167782, %v5613
      %v5629 = vshrl.u32 1326507024, %v5614
      %v5630 = vor.u32 %v5628, %v5629
      %vm5631 = vcmp.lt.s32.totalorder %v5612, 1
      %vm5632 = vcmp.lt.s32.totalorder %v5612, 2
      %vm5633 = vcmp.lt.s32.totalorder %v5612, 3
      %vm5634 = vcmp.lt.s32.totalorder %v5612, 4
      %v5635 = vsel %vm5631, %v5615, %v5618
      %v5636 = vsel %vm5634, %v5624, 2102212464
      %v5637 = vsel %vm5633, %v5621, %v5636
      %v5638 = vsel %vm5632, %v5635, %v5637
      %v5639 = vsel %vm5631, %v5618, %v5621
      %v5640 = vsel %vm5634, %v5627, 920167782
      %v5641 = vsel %vm5633, %v5624, %v5640
      %v5642 = vsel %vm5632, %v5639, %v5641
      %v5643 = vsel %vm5631, %v5621, %v5624
      %v5644 = vsel %vm5634, %v5630, 1326507024
      %v5645 = vsel %vm5633, %v5627, %v5644
      %v5646 = vsel %vm5632, %v5643, %v5645
      %v5647 = vshll.u32 %v5607, 8
      %v5648 = vmul.u32.u64.compose %v5647, %v5646
      %v5649 = vextract.low.u32 %v5648
      %v5650 = vextract.high.u32 %v5648
      %v5651 = vmul.u32.u64.compose %v5647, %v5642
      %v5652 = vextract.low.u32 %v5651
      %v5653 = vextract.high.u32 %v5651
      %v5654 = vmul.u32 %v5647, %v5638
      %v5655 = vadd.s32 %v5650, %v5652
      %vm5656 = vc.u32 %v5650, %v5652
      %v5657 = vadd.s32 %v5653, 1
      %v5658 = vsel %vm5656, %v5657, %v5653
      %v5659 = vadd.s32 %v5654, %v5658
      %v5660 = vadd.s32 %v5659, 536870912
      %v5661 = vshrl.u32 %v5660, 30
      %v5662 = vshll.u32 %v5661, 30
      %v5663 = vsub.s32 %v5659, %v5662
      %vm5664 = vcmp.lt.s32.totalorder %v5663, 0
      %v5665 = vsub.s32 0, %v5663
      %v5666 = vsel %vm5664, %v5665, %v5663
      %v5667 = vclz %v5666
      %v5668 = vsub.s32 %v5667, 2
      %vm5669 = vcmp.gt.s32.totalorder 0, %v5668
      %v5670 = vsel %vm5669, 0, %v5668
      %v5671 = vsub.s32 32, %v5670
      %v5672 = vshll.u32 %v5663, %v5670
      %v5673 = vshrl.u32 %v5655, %v5671
      %v5674 = vor.u32 %v5672, %v5673
      %v5675 = vsub.s32 4294967266, %v5670
      %v5676 = vadd.s32 %v5675, 127
      %v5677 = vshll.u32 %v5676, 23
      %v5678 = vor.u32 4788187, %v5677
      %v5679 = vand.u32 2147483647, %v5678
      %v5681 = vcvt.s32.f32 %v5674
      %v5682 = vmul.f32 %v5681, %v5679
      %v5683 = vxor.u32 %v5682, 2147483648
      %v5684 = vsel %vm5601, %v5683, %v5682
      %v5685 = vsub.s32 4, %v5661
      %v5686 = vsel %vm5601, %v5685, %v5661
      %v5687 = vsel %vm5600, %v4294, %v5684
      %v5688 = vsel %vm5600, 0, %v5686
      %v5689 = vcosq.f32.pop %v5687
      %v5690 = vsinq.f32.pop %v5687
      %vm5691 = vweird.f32 %v4294
      %v5692 = vadd.s32 %v5688, 3
      %v5693 = vand.u32 %v5692, 3
      %vm5694 = vcmp.lt.s32.totalorder %v5693, 2
      %vm5695 = vcmp.eq.s32.totalorder %v5693, 0
      %v5696 = vxor.u32 %v5690, 2147483648
      %v5697 = vsel %vm5695, %v5689, %v5696
      %vm5698 = vcmp.eq.s32.totalorder %v5693, 2
      %v5699 = vxor.u32 %v5689, 2147483648
      %v5700 = vsel %vm5698, %v5699, %v5690
      %v5701 = vsel %vm5694, %v5697, %v5700
      %v5702 = vsel %vm5691, nan, %v5701
      %v5703 = vand.u32 2147483647, %v4296
      %vm5704 = vcmp.le.f32.partialorder %v5703, 0.7853982
      %vm5705 = vcmp.lt.s32.totalorder %v4296, 0
      %v5706 = vand.u32 %v4296, 2139095040
      %v5707 = vshrl.u32 %v5706, 23
      %v5708 = vsub.s32 %v5707, 127
      %v5709 = vand.u32 2147483647, %v4296
      %v5710 = vand.u32 %v5709, 8388607
      %v5711 = vor.u32 %v5710, 8388608
      %v5712 = vsub.s32 0, %v5711
      %v5713 = vadd.s32 %v5708, 1
      %vm5714 = vcmp.gt.s32.totalorder %v5713, 0
      %v5715 = vsel %vm5714, %v5713, 0
      %v5716 = vshrl.u32 %v5715, 5
      %v5717 = vand.u32 %v5715, 31
      %v5718 = vsub.s32 32, %v5717
      %v5719 = vshrl.u32 683565275, %v5718
      %v5720 = vshll.u32 683565275, %v5717
      %v5721 = vshrl.u32 2475754826, %v5718
      %v5722 = vor.u32 %v5720, %v5721
      %v5723 = vshll.u32 2475754826, %v5717
      %v5724 = vshrl.u32 2131351028, %v5718
      %v5725 = vor.u32 %v5723, %v5724
      %v5726 = vshll.u32 2131351028, %v5717
      %v5727 = vshrl.u32 2102212464, %v5718
      %v5728 = vor.u32 %v5726, %v5727
      %v5729 = vshll.u32 2102212464, %v5717
      %v5730 = vshrl.u32 920167782, %v5718
      %v5731 = vor.u32 %v5729, %v5730
      %v5732 = vshll.u32 920167782, %v5717
      %v5733 = vshrl.u32 1326507024, %v5718
      %v5734 = vor.u32 %v5732, %v5733
      %vm5735 = vcmp.lt.s32.totalorder %v5716, 1
      %vm5736 = vcmp.lt.s32.totalorder %v5716, 2
      %vm5737 = vcmp.lt.s32.totalorder %v5716, 3
      %vm5738 = vcmp.lt.s32.totalorder %v5716, 4
      %v5739 = vsel %vm5735, %v5719, %v5722
      %v5740 = vsel %vm5738, %v5728, 2102212464
      %v5741 = vsel %vm5737, %v5725, %v5740
      %v5742 = vsel %vm5736, %v5739, %v5741
      %v5743 = vsel %vm5735, %v5722, %v5725
      %v5744 = vsel %vm5738, %v5731, 920167782
      %v5745 = vsel %vm5737, %v5728, %v5744
      %v5746 = vsel %vm5736, %v5743, %v5745
      %v5747 = vsel %vm5735, %v5725, %v5728
      %v5748 = vsel %vm5738, %v5734, 1326507024
      %v5749 = vsel %vm5737, %v5731, %v5748
      %v5750 = vsel %vm5736, %v5747, %v5749
      %v5751 = vshll.u32 %v5711, 8
      %v5752 = vmul.u32.u64.compose %v5751, %v5750
      %v5753 = vextract.low.u32 %v5752
      %v5754 = vextract.high.u32 %v5752
      %v5755 = vmul.u32.u64.compose %v5751, %v5746
      %v5756 = vextract.low.u32 %v5755
      %v5757 = vextract.high.u32 %v5755
      %v5758 = vmul.u32 %v5751, %v5742
      %v5759 = vadd.s32 %v5754, %v5756
      %vm5760 = vc.u32 %v5754, %v5756
      %v5761 = vadd.s32 %v5757, 1
      %v5762 = vsel %vm5760, %v5761, %v5757
      %v5763 = vadd.s32 %v5758, %v5762
      %v5764 = vadd.s32 %v5763, 536870912
      %v5765 = vshrl.u32 %v5764, 30
      %v5766 = vshll.u32 %v5765, 30
      %v5767 = vsub.s32 %v5763, %v5766
      %vm5768 = vcmp.lt.s32.totalorder %v5767, 0
      %v5769 = vsub.s32 0, %v5767
      %v5770 = vsel %vm5768, %v5769, %v5767
      %v5771 = vclz %v5770
      %v5772 = vsub.s32 %v5771, 2
      %vm5773 = vcmp.gt.s32.totalorder 0, %v5772
      %v5774 = vsel %vm5773, 0, %v5772
      %v5775 = vsub.s32 32, %v5774
      %v5776 = vshll.u32 %v5767, %v5774
      %v5777 = vshrl.u32 %v5759, %v5775
      %v5778 = vor.u32 %v5776, %v5777
      %v5779 = vsub.s32 4294967266, %v5774
      %v5780 = vadd.s32 %v5779, 127
      %v5781 = vshll.u32 %v5780, 23
      %v5782 = vor.u32 4788187, %v5781
      %v5783 = vand.u32 2147483647, %v5782
      %v5785 = vcvt.s32.f32 %v5778
      %v5786 = vmul.f32 %v5785, %v5783
      %v5787 = vxor.u32 %v5786, 2147483648
      %v5788 = vsel %vm5705, %v5787, %v5786
      %v5789 = vsub.s32 4, %v5765
      %v5790 = vsel %vm5705, %v5789, %v5765
      %v5791 = vsel %vm5704, %v4296, %v5788
      %v5792 = vsel %vm5704, 0, %v5790
      %v5793 = vcosq.f32.pop %v5791
      %v5794 = vsinq.f32.pop %v5791
      %vm5795 = vweird.f32 %v4296
      %v5796 = vadd.s32 %v5792, 3
      %v5797 = vand.u32 %v5796, 3
      %vm5798 = vcmp.lt.s32.totalorder %v5797, 2
      %vm5799 = vcmp.eq.s32.totalorder %v5797, 0
      %v5800 = vxor.u32 %v5794, 2147483648
      %v5801 = vsel %vm5799, %v5793, %v5800
      %vm5802 = vcmp.eq.s32.totalorder %v5797, 2
      %v5803 = vxor.u32 %v5793, 2147483648
      %v5804 = vsel %vm5802, %v5803, %v5794
      %v5805 = vsel %vm5798, %v5801, %v5804
      %v5806 = vsel %vm5795, nan, %v5805
      %v5807 = vand.u32 2147483647, %v4347
      %vm5808 = vcmp.le.f32.partialorder %v5807, 0.7853982
      %vm5809 = vcmp.lt.s32.totalorder %v4347, 0
      %v5810 = vand.u32 %v4347, 2139095040
      %v5811 = vshrl.u32 %v5810, 23
      %v5812 = vsub.s32 %v5811, 127
      %v5813 = vand.u32 2147483647, %v4347
      %v5814 = vand.u32 %v5813, 8388607
      %v5815 = vor.u32 %v5814, 8388608
      %v5816 = vsub.s32 0, %v5815
      %v5817 = vadd.s32 %v5812, 1
      %vm5818 = vcmp.gt.s32.totalorder %v5817, 0
      %v5819 = vsel %vm5818, %v5817, 0
      %v5820 = vshrl.u32 %v5819, 5
      %v5821 = vand.u32 %v5819, 31
      %v5822 = vsub.s32 32, %v5821
      %v5823 = vshrl.u32 683565275, %v5822
      %v5824 = vshll.u32 683565275, %v5821
      %v5825 = vshrl.u32 2475754826, %v5822
      %v5826 = vor.u32 %v5824, %v5825
      %v5827 = vshll.u32 2475754826, %v5821
      %v5828 = vshrl.u32 2131351028, %v5822
      %v5829 = vor.u32 %v5827, %v5828
      %v5830 = vshll.u32 2131351028, %v5821
      %v5831 = vshrl.u32 2102212464, %v5822
      %v5832 = vor.u32 %v5830, %v5831
      %v5833 = vshll.u32 2102212464, %v5821
      %v5834 = vshrl.u32 920167782, %v5822
      %v5835 = vor.u32 %v5833, %v5834
      %v5836 = vshll.u32 920167782, %v5821
      %v5837 = vshrl.u32 1326507024, %v5822
      %v5838 = vor.u32 %v5836, %v5837
      %vm5839 = vcmp.lt.s32.totalorder %v5820, 1
      %vm5840 = vcmp.lt.s32.totalorder %v5820, 2
      %vm5841 = vcmp.lt.s32.totalorder %v5820, 3
      %vm5842 = vcmp.lt.s32.totalorder %v5820, 4
      %v5843 = vsel %vm5839, %v5823, %v5826
      %v5844 = vsel %vm5842, %v5832, 2102212464
      %v5845 = vsel %vm5841, %v5829, %v5844
      %v5846 = vsel %vm5840, %v5843, %v5845
      %v5847 = vsel %vm5839, %v5826, %v5829
      %v5848 = vsel %vm5842, %v5835, 920167782
      %v5849 = vsel %vm5841, %v5832, %v5848
      %v5850 = vsel %vm5840, %v5847, %v5849
      %v5851 = vsel %vm5839, %v5829, %v5832
      %v5852 = vsel %vm5842, %v5838, 1326507024
      %v5853 = vsel %vm5841, %v5835, %v5852
      %v5854 = vsel %vm5840, %v5851, %v5853
      %v5855 = vshll.u32 %v5815, 8
      %v5856 = vmul.u32.u64.compose %v5855, %v5854
      %v5857 = vextract.low.u32 %v5856
      %v5858 = vextract.high.u32 %v5856
      %v5859 = vmul.u32.u64.compose %v5855, %v5850
      %v5860 = vextract.low.u32 %v5859
      %v5861 = vextract.high.u32 %v5859
      %v5862 = vmul.u32 %v5855, %v5846
      %v5863 = vadd.s32 %v5858, %v5860
      %vm5864 = vc.u32 %v5858, %v5860
      %v5865 = vadd.s32 %v5861, 1
      %v5866 = vsel %vm5864, %v5865, %v5861
      %v5867 = vadd.s32 %v5862, %v5866
      %v5868 = vadd.s32 %v5867, 536870912
      %v5869 = vshrl.u32 %v5868, 30
      %v5870 = vshll.u32 %v5869, 30
      %v5871 = vsub.s32 %v5867, %v5870
      %vm5872 = vcmp.lt.s32.totalorder %v5871, 0
      %v5873 = vsub.s32 0, %v5871
      %v5874 = vsel %vm5872, %v5873, %v5871
      %v5875 = vclz %v5874
      %v5876 = vsub.s32 %v5875, 2
      %vm5877 = vcmp.gt.s32.totalorder 0, %v5876
      %v5878 = vsel %vm5877, 0, %v5876
      %v5879 = vsub.s32 32, %v5878
      %v5880 = vshll.u32 %v5871, %v5878
      %v5881 = vshrl.u32 %v5863, %v5879
      %v5882 = vor.u32 %v5880, %v5881
      %v5883 = vsub.s32 4294967266, %v5878
      %v5884 = vadd.s32 %v5883, 127
      %v5885 = vshll.u32 %v5884, 23
      %v5886 = vor.u32 4788187, %v5885
      %v5887 = vand.u32 2147483647, %v5886
      %v5889 = vcvt.s32.f32 %v5882
      %v5890 = vmul.f32 %v5889, %v5887
      %v5891 = vxor.u32 %v5890, 2147483648
      %v5892 = vsel %vm5809, %v5891, %v5890
      %v5893 = vsub.s32 4, %v5869
      %v5894 = vsel %vm5809, %v5893, %v5869
      %v5895 = vsel %vm5808, %v4347, %v5892
      %v5896 = vsel %vm5808, 0, %v5894
      %v5897 = vcosq.f32.pop %v5895
      %v5898 = vsinq.f32.pop %v5895
      %vm5899 = vweird.f32 %v4347
      %v5900 = vadd.s32 %v5896, 3
      %v5901 = vand.u32 %v5900, 3
      %vm5902 = vcmp.lt.s32.totalorder %v5901, 2
      %vm5903 = vcmp.eq.s32.totalorder %v5901, 0
      %v5904 = vxor.u32 %v5898, 2147483648
      %v5905 = vsel %vm5903, %v5897, %v5904
      %vm5906 = vcmp.eq.s32.totalorder %v5901, 2
      %v5907 = vxor.u32 %v5897, 2147483648
      %v5908 = vsel %vm5906, %v5907, %v5898
      %v5909 = vsel %vm5902, %v5905, %v5908
      %v5910 = vsel %vm5899, nan, %v5909
      %v5911 = vand.u32 2147483647, %v4349
      %vm5912 = vcmp.le.f32.partialorder %v5911, 0.7853982
      %vm5913 = vcmp.lt.s32.totalorder %v4349, 0
      %v5914 = vand.u32 %v4349, 2139095040
      %v5915 = vshrl.u32 %v5914, 23
      %v5916 = vsub.s32 %v5915, 127
      %v5917 = vand.u32 2147483647, %v4349
      %v5918 = vand.u32 %v5917, 8388607
      %v5919 = vor.u32 %v5918, 8388608
      %v5920 = vsub.s32 0, %v5919
      %v5921 = vadd.s32 %v5916, 1
      %vm5922 = vcmp.gt.s32.totalorder %v5921, 0
      %v5923 = vsel %vm5922, %v5921, 0
      %v5924 = vshrl.u32 %v5923, 5
      %v5925 = vand.u32 %v5923, 31
      %v5926 = vsub.s32 32, %v5925
      %v5927 = vshrl.u32 683565275, %v5926
      %v5928 = vshll.u32 683565275, %v5925
      %v5929 = vshrl.u32 2475754826, %v5926
      %v5930 = vor.u32 %v5928, %v5929
      %v5931 = vshll.u32 2475754826, %v5925
      %v5932 = vshrl.u32 2131351028, %v5926
      %v5933 = vor.u32 %v5931, %v5932
      %v5934 = vshll.u32 2131351028, %v5925
      %v5935 = vshrl.u32 2102212464, %v5926
      %v5936 = vor.u32 %v5934, %v5935
      %v5937 = vshll.u32 2102212464, %v5925
      %v5938 = vshrl.u32 920167782, %v5926
      %v5939 = vor.u32 %v5937, %v5938
      %v5940 = vshll.u32 920167782, %v5925
      %v5941 = vshrl.u32 1326507024, %v5926
      %v5942 = vor.u32 %v5940, %v5941
      %vm5943 = vcmp.lt.s32.totalorder %v5924, 1
      %vm5944 = vcmp.lt.s32.totalorder %v5924, 2
      %vm5945 = vcmp.lt.s32.totalorder %v5924, 3
      %vm5946 = vcmp.lt.s32.totalorder %v5924, 4
      %v5947 = vsel %vm5943, %v5927, %v5930
      %v5948 = vsel %vm5946, %v5936, 2102212464
      %v5949 = vsel %vm5945, %v5933, %v5948
      %v5950 = vsel %vm5944, %v5947, %v5949
      %v5951 = vsel %vm5943, %v5930, %v5933
      %v5952 = vsel %vm5946, %v5939, 920167782
      %v5953 = vsel %vm5945, %v5936, %v5952
      %v5954 = vsel %vm5944, %v5951, %v5953
      %v5955 = vsel %vm5943, %v5933, %v5936
      %v5956 = vsel %vm5946, %v5942, 1326507024
      %v5957 = vsel %vm5945, %v5939, %v5956
      %v5958 = vsel %vm5944, %v5955, %v5957
      %v5959 = vshll.u32 %v5919, 8
      %v5960 = vmul.u32.u64.compose %v5959, %v5958
      %v5961 = vextract.low.u32 %v5960
      %v5962 = vextract.high.u32 %v5960
      %v5963 = vmul.u32.u64.compose %v5959, %v5954
      %v5964 = vextract.low.u32 %v5963
      %v5965 = vextract.high.u32 %v5963
      %v5966 = vmul.u32 %v5959, %v5950
      %v5967 = vadd.s32 %v5962, %v5964
      %vm5968 = vc.u32 %v5962, %v5964
      %v5969 = vadd.s32 %v5965, 1
      %v5970 = vsel %vm5968, %v5969, %v5965
      %v5971 = vadd.s32 %v5966, %v5970
      %v5972 = vadd.s32 %v5971, 536870912
      %v5973 = vshrl.u32 %v5972, 30
      %v5974 = vshll.u32 %v5973, 30
      %v5975 = vsub.s32 %v5971, %v5974
      %vm5976 = vcmp.lt.s32.totalorder %v5975, 0
      %v5977 = vsub.s32 0, %v5975
      %v5978 = vsel %vm5976, %v5977, %v5975
      %v5979 = vclz %v5978
      %v5980 = vsub.s32 %v5979, 2
      %vm5981 = vcmp.gt.s32.totalorder 0, %v5980
      %v5982 = vsel %vm5981, 0, %v5980
      %v5983 = vsub.s32 32, %v5982
      %v5984 = vshll.u32 %v5975, %v5982
      %v5985 = vshrl.u32 %v5967, %v5983
      %v5986 = vor.u32 %v5984, %v5985
      %v5987 = vsub.s32 4294967266, %v5982
      %v5988 = vadd.s32 %v5987, 127
      %v5989 = vshll.u32 %v5988, 23
      %v5990 = vor.u32 4788187, %v5989
      %v5991 = vand.u32 2147483647, %v5990
      %v5993 = vcvt.s32.f32 %v5986
      %v5994 = vmul.f32 %v5993, %v5991
      %v5995 = vxor.u32 %v5994, 2147483648
      %v5996 = vsel %vm5913, %v5995, %v5994
      %v5997 = vsub.s32 4, %v5973
      %v5998 = vsel %vm5913, %v5997, %v5973
      %v5999 = vsel %vm5912, %v4349, %v5996
      %v6000 = vsel %vm5912, 0, %v5998
      %v6001 = vcosq.f32.pop %v5999
      %v6002 = vsinq.f32.pop %v5999
      %vm6003 = vweird.f32 %v4349
      %v6004 = vadd.s32 %v6000, 3
      %v6005 = vand.u32 %v6004, 3
      %vm6006 = vcmp.lt.s32.totalorder %v6005, 2
      %vm6007 = vcmp.eq.s32.totalorder %v6005, 0
      %v6008 = vxor.u32 %v6002, 2147483648
      %v6009 = vsel %vm6007, %v6001, %v6008
      %vm6010 = vcmp.eq.s32.totalorder %v6005, 2
      %v6011 = vxor.u32 %v6001, 2147483648
      %v6012 = vsel %vm6010, %v6011, %v6002
      %v6013 = vsel %vm6006, %v6009, %v6012
      %v6014 = vsel %vm6003, nan, %v6013
      %v6015 = vld [vmem:[%s4] sm:$0x3]
      %v6016 = vpack.c.bf16 %v4870, %v4454
      %v6017 = vpack.c.bf16 %v4974, %v4558
      %v6018 = vpack.c.bf16 %v5078, %v4662
      %v6019 = vpack.c.bf16 %v5182, %v4766
      %v6020 = vpack.c.bf16 %v5702, %v5286
      %v6021 = vpack.c.bf16 %v5806, %v5390
      %v6022 = vpack.c.bf16 %v5910, %v5494
      %v6023 = vpack.c.bf16 %v6014, %v5598
      %v6024 = vld [vmem:[%s5] sm:$0x7]
      %6026 = vset.pattern.permute.xlu0 0
      %6027 = vperm.xlu0 %6026, %v6024
      %v6028 = vpop.permute.xlu0 %6027
      %v6031 = vsel %vm2414, %v6015, 0
      %6033 = vmatprep.subr.bf16.mxu0 0
      %6034 = vmatpush1.bf16.msra.mxu0 0
      %6035 = vmatprep.subr.bf16.mxu0 0
      %6036 = vmatpush1.bf16.msra.mxu0 0
      %6037 = vmatprep.subr.bf16.mxu0 0
      %6038 = vmatpush1.bf16.msra.mxu0 0
      %6039 = vmatprep.subr.bf16.mxu0 0
      %6040 = vmatpush1.bf16.msra.mxu0 0
      %6041 = vmatprep.subr.bf16.mxu0 0
      %6042 = vmatpush1.bf16.msra.mxu0 0
      %6043 = vmatprep.subr.bf16.mxu0 0
      %6044 = vmatpush1.bf16.msra.mxu0 0
      %6045 = vmatprep.subr.bf16.mxu0 %v6021
      %6046 = vmatpush1.bf16.msra.mxu0 %v6020
      %6047 = vmatprep.subr.bf16.mxu0 %v6017
      %6048 = vmatpush1.bf16.msra.mxu0 %v6016
      %6049 = vmatprep.subr.bf16.mxu0 0
      %6050 = vmatpush2.bf16.msra.mxu0 0
      %6051 = vmatprep.subr.bf16.mxu0 0
      %6052 = vmatpush2.bf16.msra.mxu0 0
      %6053 = vmatprep.subr.bf16.mxu0 0
      %6054 = vmatpush2.bf16.msra.mxu0 0
      %6055 = vmatprep.subr.bf16.mxu0 0
      %6056 = vmatpush2.bf16.msra.mxu0 0
      %6057 = vmatprep.subr.bf16.mxu0 0
      %6058 = vmatpush2.bf16.msra.mxu0 0
      %6059 = vmatprep.subr.bf16.mxu0 0
      %6060 = vmatpush2.bf16.msra.mxu0 0
      %6061 = vmatprep.subr.bf16.mxu0 0
      %6062 = vmatpush2.bf16.msra.mxu0 0
      %6063 = vmatprep.subr.bf16.mxu0 0
      %6064 = vmatpush2.bf16.msra.mxu0 0
      %6065 = vmatprep.mubr.bf16.mxu0 0
      %6066 = vmatmul.mubr.bf16.gmra.mxu0 %v6031
      %v6067 = vpop.f32.mrf.mxu0
      %v6068 = vadd.f32 %v6028, %v6067
      %v6069 = vpop.f32.mrf.mxu0
      %v6070 = vadd.f32 %v6028, %v6069
      %v6071 = vpop.f32.mrf.mxu0
      %v6072 = vpop.f32.mrf.mxu0
      %6073 = vdwg.mxu0
      %6074 = vmatprep.subr.bf16.mxu0 0
      %6075 = vmatpush1.bf16.msra.mxu0 0
      %6076 = vmatprep.subr.bf16.mxu0 0
      %6077 = vmatpush1.bf16.msra.mxu0 0
      %6078 = vmatprep.subr.bf16.mxu0 0
      %6079 = vmatpush1.bf16.msra.mxu0 0
      %6080 = vmatprep.subr.bf16.mxu0 0
      %6081 = vmatpush1.bf16.msra.mxu0 0
      %6082 = vmatprep.subr.bf16.mxu0 0
      %6083 = vmatpush1.bf16.msra.mxu0 0
      %6084 = vmatprep.subr.bf16.mxu0 0
      %6085 = vmatpush1.bf16.msra.mxu0 0
      %6086 = vmatprep.subr.bf16.mxu0 %v6023
      %6087 = vmatpush1.bf16.msra.mxu0 %v6022
      %6088 = vmatprep.subr.bf16.mxu0 %v6019
      %6089 = vmatpush1.bf16.msra.mxu0 %v6018
      %6090 = vmatprep.subr.bf16.mxu0 0
      %6091 = vmatpush2.bf16.msra.mxu0 0
      %6092 = vmatprep.subr.bf16.mxu0 0
      %6093 = vmatpush2.bf16.msra.mxu0 0
      %6094 = vmatprep.subr.bf16.mxu0 0
      %6095 = vmatpush2.bf16.msra.mxu0 0
      %6096 = vmatprep.subr.bf16.mxu0 0
      %6097 = vmatpush2.bf16.msra.mxu0 0
      %6098 = vmatprep.subr.bf16.mxu0 0
      %6099 = vmatpush2.bf16.msra.mxu0 0
      %6100 = vmatprep.subr.bf16.mxu0 0
      %6101 = vmatpush2.bf16.msra.mxu0 0
      %6102 = vmatprep.subr.bf16.mxu0 0
      %6103 = vmatpush2.bf16.msra.mxu0 0
      %6104 = vmatprep.subr.bf16.mxu0 0
      %6105 = vmatpush2.bf16.msra.mxu0 0
      %6106 = vmatprep.mubr.bf16.mxu0 0
      %6107 = vmatmul.mubr.bf16.gmra.mxu0 %v6031
      %v6108 = vpop.f32.mrf.mxu0
      %v6109 = vadd.f32 %v6028, %v6108
      %v6110 = vpop.f32.mrf.mxu0
      %v6111 = vadd.f32 %v6028, %v6110
      %v6112 = vpop.f32.mrf.mxu0
      %v6113 = vpop.f32.mrf.mxu0
      %6114 = vdwg.mxu0
      %v6115 = vmul.f32 %v6068, 1.442695
      %v6116 = vpow.pop %v6115
      %v6117 = vmul.f32 %v6070, 1.442695
      %v6118 = vpow.pop %v6117
      %v6119 = vmul.f32 %v6109, 1.442695
      %v6120 = vpow.pop %v6119
      %v6121 = vmul.f32 %v6111, 1.442695
      %v6122 = vpow.pop %v6121
      %v6127 = vcombine.low %v6116, %v6118
      %v6128 = vcombine.low %v6120, %v6122
      %6131 = vst [vmem:[%s309] sm:$0x77] %v6127
      %6132 = vst [vmem:[%s309 + $0x8] sm:$0x77] %v6128
      %s6133 = smul.u32 4, %s22
      %p6134 = scmp.lt.s32.totalorder %s21, 1
      %s6135 = scalar_select %p6134, %s21, 1
      %p6136 = scmp.lt.s32.totalorder %s6133, 7
      %s6137 = scalar_select %p6136, %s6133, 7
      %s6138 = smul.addr %s6135, 8
      %s6139 = sadd.s32 %s6137, %s6138
      %s6140 = smul.addr %s6139, 4
      %s6141 = scalar_lea.vmem %s6, %s6140
      // Predicated region
      $region45: #{tpu_custom_call.1} parent=43 // pred_check
        %p6142 = pneg %p187
      $region46: #{tpu_custom_call.1} parent=43 // pred_check_branch
        %6144 = sbr.rel (%p6142) target = $region48
      $region47: #{tpu_custom_call.1} parent=43 // pred_region
        %s6145 = smul.u32 4, %s22
      $region48: #{tpu_custom_call.1} parent=43 // pred_fallthru
        _
    $region44: #{tpu_custom_call.1} parent=5 // pred_fallthru
      _
    %p6146 = scmp.le.s32.totalorder 2, %s12
    // Predicated region
    $region49: #{tpu_custom_call.1} parent=5 // pred_check
      %p6147 = pneg %p6146
    $region50: #{tpu_custom_call.1} parent=5 // pred_check_branch
      %6149 = sbr.rel (%p6147) target = $region52
    $region51: #{tpu_custom_call.1} parent=5 // pred_region
      %s6150 = ssub.s32 %s12, 2
      // Predicated region
      $region53: #{tpu_custom_call.1} parent=51 // pred_check
        %p6151 = pneg %p193
      $region54: #{tpu_custom_call.1} parent=51 // pred_check_branch
        %6153 = sbr.rel (%p6151) target = $region56
      $region55: #{tpu_custom_call.1} parent=51 // pred_region
        %s6154 = smul.u32 4, %s24
        %p6155 = scmp.lt.s32.totalorder %s23, 1
        %s6156 = scalar_select %p6155, %s23, 1
        %p6157 = scmp.lt.s32.totalorder %s6154, 7
        %s6158 = scalar_select %p6157, %s6154, 7
        %s6159 = smul.addr %s6156, 8
        %s6160 = sadd.s32 %s6158, %s6159
        %s6161 = smul.addr %s6160, 4
        %s6162 = scalar_lea.vmem %s6, %s6161
      $region56: #{tpu_custom_call.1} parent=51 // pred_fallthru
        _
    $region52: #{tpu_custom_call.1} parent=5 // pred_fallthru
      _
  $region6: #{tpu_custom_call.1} parent=0 // loop_footer
    %s16 = sadd.s32 1, %s12
  $region7: #{tpu_custom_call.1} parent=0 // loop_footer_branch
    %11 = sbr.rel target = $region3
  $region8: #{tpu_custom_call.1} parent=0 // loop_exit
    _

</llo_original>
